<compile_context>
chip_gen: v5e
topology: v5e:2x2
jax: 0.10.0
libtpu: 0.0.40
codegen_flags: <defaults>
</compile_context>

<pallas_src>
import jax
import jax.numpy as jnp
from jax import lax
from jax.experimental import pallas as pl
from jax.experimental.pallas import tpu as pltpu  # noqa: F401 (TPU backend)

# ---------------- configuration (matches the module's __init__) --------------
D_MODEL   = 32            # config['d_model']
HEADS     = 4             # config['heads']
DK        = D_MODEL // HEADS
N_LAYERS  = 2             # config['N']
D_FF      = D_MODEL + 10  # PositionwiseFeedForward(d_model, d_model + 10)
D_FF_PAD  = 48            # FFN hidden padded to a multiple of 8 (zero-padded)
NHOPS     = 2             # config['ATTENTION_hops']
N_HIDDEN  = 16            # config['ATTENTION_nhidden']
SEQ       = 8
BATCH     = 2
PAD_INDEX = 0
LN_EPS    = 1e-6          # annotated-transformer LayerNorm eps
INV_SQRT_DK = 1.0 / float(DK) ** 0.5
SLAB_LANES  = 128


# ---------------- packed-parameter slab layout (static Python ints) ----------
def _build_layout():
    layout, off = {}, 0

    def alloc(name, nrows):
        nonlocal off
        layout[name] = off
        off += nrows

    for l in range(N_LAYERS):
        alloc(f"wqkv{l}", D_MODEL)    # (D, 3D)        cols [0:96)
        alloc(f"wo{l}",   D_MODEL)    # (D, D)         cols [0:32)
        alloc(f"w1{l}",   D_MODEL)    # (D, D_FF_PAD)  cols [0:48), 42:48 zero
        alloc(f"w2{l}",   D_FF_PAD)   # (D_FF_PAD, D)  rows 42:48 zero
        alloc(f"vec{l}",  8)          # 8 rows of small bias / LN vectors
    alloc("ws1",  D_MODEL)            # (D, N_HIDDEN)
    alloc("ws2t", 8)                  # rows [0:NHOPS) hold ws2^T (NHOPS, N_HIDDEN)
    alloc("fvec", 8)                  # row 0: fna, row 1: fnb
    total = ((off + 7) // 8) * 8
    return layout, total


_LAYOUT, SLAB_ROWS = _build_layout()


def pack_params(p):
    """Pack all 20 parameter arrays into one (SLAB_ROWS, 128) f32 slab."""
    slab = jnp.zeros((SLAB_ROWS, SLAB_LANES), jnp.float32)

    def put(s, name, mat):
        r = _LAYOUT[name]
        h, w = mat.shape
        return s.at[r:r + h, :w].set(mat.astype(jnp.float32))

    for l in range(N_LAYERS):
        wqkv = jnp.concatenate([p["wq"][l], p["wk"][l], p["wv"][l]], axis=1)
        slab = put(slab, f"wqkv{l}", wqkv)
        slab = put(slab, f"wo{l}", p["wo"][l])
        slab = put(slab, f"w1{l}", p["w1"][l])          # cols 42:48 stay zero
        slab = put(slab, f"w2{l}", p["w2"][l])          # rows 42:48 stay zero
        vec = _LAYOUT[f"vec{l}"]
        bqkv = jnp.concatenate([p["bq"][l], p["bk"][l], p["bv"][l]], axis=1)
        slab = slab.at[vec + 0, :3 * D_MODEL].set(bqkv[0])
        slab = slab.at[vec + 1, :D_MODEL].set(p["bo"][l][0])
        slab = slab.at[vec + 2, :D_FF].set(p["b1"][l][0])
        slab = slab.at[vec + 3, :D_MODEL].set(p["b2"][l][0])
        slab = slab.at[vec + 4, :D_MODEL].set(p["ln1a"][l][0])
        slab = slab.at[vec + 5, :D_MODEL].set(p["ln1b"][l][0])
        slab = slab.at[vec + 6, :D_MODEL].set(p["ln2a"][l][0])
        slab = slab.at[vec + 7, :D_MODEL].set(p["ln2b"][l][0])
    slab = put(slab, "ws1", p["ws1"])
    slab = put(slab, "ws2t", p["ws2"].T)                # store transposed
    fv = _LAYOUT["fvec"]
    slab = slab.at[fv + 0, :D_MODEL].set(p["fna"][0])
    slab = slab.at[fv + 1, :D_MODEL].set(p["fnb"][0])
    return slab


# ---------------- shared math ------------------------------------------------
def _layernorm(x, a, b):
    # annotated-transformer LayerNorm: a*(x-mean)/(std+eps)+b
    # (torch.std is unbiased -> n-1 divisor; eps added to std, not var)
    mean = jnp.mean(x, axis=-1, keepdims=True)
    c = x - mean
    var = jnp.sum(c * c, axis=-1, keepdims=True) / (x.shape[-1] - 1)
    return a * c / (jnp.sqrt(var) + LN_EPS) + b


def _softmax_last(x):
    x = x - jnp.max(x, axis=-1, keepdims=True)
    e = jnp.exp(x)
    return e / jnp.sum(e, axis=-1, keepdims=True)


def _bmm(a, b):
    # batched (B,m,k) @ (B,k,n) -> (B,m,n)
    return lax.dot_general(a, b, (((2,), (1,)), ((0,), (0,))),
                           preferred_element_type=jnp.float32)


def _bmm_nt(a, b):
    # batched (B,m,k) @ (B,n,k)^T -> (B,m,n)  (contract last dims)
    return lax.dot_general(a, b, (((2,), (2,)), ((0,), (0,))),
                           preferred_element_type=jnp.float32)


# ---------------- Pallas kernel (whole batch in one step) --------------------
def _kernel(emb_ref, pad_ref, w_ref, out_ref, alpha_ref):
    B, S, D = emb_ref.shape
    x = emb_ref[...].astype(jnp.float32).reshape(B * S, D)         # (BS,D) tokens

    # hoisted additive masks (built once, reused by every layer / head)
    pad = pad_ref[...]                                             # (B,1,S) 1.0 @ PAD
    attn_bias = jnp.broadcast_to(pad * jnp.float32(-1e9), (B, S, S))
    pool_bias = pad * jnp.float32(-10000.0)                        # (B,1,S)

    def wrow(r, n):              # one packed bias/LN row -> (1, n)
        return w_ref[r:r + 1, :n]

    def wmat(name, rows, cols):  # packed matrix -> (rows, cols)
        r = _LAYOUT[name]
        return w_ref[r:r + rows, :cols]

    def mm(a, b):                # plain 2-D MXU matmul, f32 accumulate
        return jnp.dot(a, b, preferred_element_type=jnp.float32)

    for l in range(N_LAYERS):
        vec = _LAYOUT[f"vec{l}"]
        bqkv = wrow(vec + 0, 3 * D)
        bo   = wrow(vec + 1, D)
        b1   = wrow(vec + 2, D_FF_PAD)
        b2   = wrow(vec + 3, D)
        ln1a, ln1b = wrow(vec + 4, D), wrow(vec + 5, D)
        ln2a, ln2b = wrow(vec + 6, D), wrow(vec + 7, D)

        # --- sublayer 0: pre-norm multi-head self-attention + residual -------
        xn = _layernorm(x, ln1a, ln1b)                             # (BS,D)
        qkv = mm(xn, wmat(f"wqkv{l}", D, 3 * D)) + bqkv            # fused QKV
        q = (qkv[:, 0:D] * INV_SQRT_DK).reshape(B, S, D)           # scale once
        k = qkv[:, D:2 * D].reshape(B, S, D)
        v = qkv[:, 2 * D:3 * D].reshape(B, S, D)
        wo = wmat(f"wo{l}", D, D)                                  # (D,D)
        ctx = None
        for h in range(HEADS):
            sl = slice(h * DK, (h + 1) * DK)
            s = _bmm_nt(q[..., sl], k[..., sl]) + attn_bias        # (B,S,S)
            a = _softmax_last(s)
            hh = _bmm(a, v[..., sl]).reshape(B * S, DK)            # (BS,DK)
            part = mm(hh, wo[sl, :])                               # per-head Wo slice
            ctx = part if ctx is None else ctx + part              # no lane concat
        x = x + ctx + bo                                           # dropout == id

        # --- sublayer 1: pre-norm position-wise feed forward + residual ------
        xn = _layernorm(x, ln2a, ln2b)
        hmid = jnp.maximum(mm(xn, wmat(f"w1{l}", D, D_FF_PAD)) + b1, 0.0)
        x = x + mm(hmid, wmat(f"w2{l}", D_FF_PAD, D)) + b2         # pad rows are zero

    fv = _LAYOUT["fvec"]
    outp = _layernorm(x, wrow(fv + 0, D), wrow(fv + 1, D))         # (BS,D)

    # --- self-attentive pooling head ------------------------------------------
    hbar = jnp.tanh(mm(outp, wmat("ws1", D, N_HIDDEN)))            # (BS,H)
    hbar = hbar.reshape(B, S, N_HIDDEN)
    ws2t = jnp.broadcast_to(wmat("ws2t", NHOPS, N_HIDDEN),
                            (B, NHOPS, N_HIDDEN))                  # tiny (2,2,16)
    al = _bmm_nt(ws2t, hbar) + pool_bias                           # (B,NHOPS,S)
    alphas = _softmax_last(al)
    pooled = _bmm(alphas, outp.reshape(B, S, D))                   # (B,NHOPS,D)

    out_ref[...] = pooled
    alpha_ref[...] = alphas


def self_attentive_encoder(inp, emb, params, pad_index=PAD_INDEX):
    B, S = inp.shape
    D = emb.shape[-1]
    pad = (inp == pad_index).astype(jnp.float32)[:, None, :]       # (B,1,S)
    slab = pack_params(params)    # one DMA for all 20 parameter tensors

    fn = pl.pallas_call(
        _kernel,
        out_shape=(jax.ShapeDtypeStruct((B, NHOPS, D), jnp.float32),
                   jax.ShapeDtypeStruct((B, NHOPS, S), jnp.float32)),
    )
    return fn(emb.astype(jnp.float32), pad, slab)


# ---------------- pure-JAX reference (mirrors the torch module) --------------
def _reference_forward(emb, inp, params, pad_index=PAD_INDEX):
    mask = (inp != pad_index).astype(jnp.float32)[:, None, :]
    pad_bias = -10000.0 * (inp == pad_index).astype(jnp.float32)[:, None, :]

    def one(x, m, pb):
        for l in range(N_LAYERS):
            xn = _layernorm(x, params["ln1a"][l], params["ln1b"][l])
            q = xn @ params["wq"][l] + params["bq"][l]
            k = xn @ params["wk"][l] + params["bk"][l]
            v = xn @ params["wv"][l] + params["bv"][l]
            heads = []
            for h in range(HEADS):
                sl = slice(h * DK, (h + 1) * DK)
                s = (q[:, sl] @ k[:, sl].T) / jnp.sqrt(jnp.float32(DK))
                s = jnp.where(m == 0.0, jnp.float32(-1e9), s)      # masked_fill
                heads.append(_softmax_last(s) @ v[:, sl])
            ctx = jnp.concatenate(heads, axis=-1) @ params["wo"][l] + params["bo"][l]
            x = x + ctx
            xn = _layernorm(x, params["ln2a"][l], params["ln2b"][l])
            h1 = jnp.maximum(xn @ params["w1"][l] + params["b1"][l], 0.0)
            x = x + h1 @ params["w2"][l] + params["b2"][l]
        outp = _layernorm(x, params["fna"], params["fnb"])
        hbar = jnp.tanh(outp @ params["ws1"])
        al = (hbar @ params["ws2"]).T + pb                          # (NHOPS,S)
        alphas = _softmax_last(al)
        return alphas @ outp, alphas

    return jax.vmap(one)(emb, mask, pad_bias)


# ---------------- deterministic synthetic parameters -------------------------
def init_params(key):
    keys = iter(jax.random.split(key, 32))

    def rnd(shape, scale=0.1):
        return scale * jax.random.normal(next(keys), shape, dtype=jnp.float32)

    p = {}
    for name in ("wq", "wk", "wv", "wo"):
        p[name] = rnd((N_LAYERS, D_MODEL, D_MODEL))
    for name in ("bq", "bk", "bv", "bo"):
        p[name] = rnd((N_LAYERS, 1, D_MODEL), 0.02)
    p["w1"] = rnd((N_LAYERS, D_MODEL, D_FF))
    p["b1"] = rnd((N_LAYERS, 1, D_FF), 0.02)
    p["w2"] = rnd((N_LAYERS, D_FF, D_MODEL))
    p["b2"] = rnd((N_LAYERS, 1, D_MODEL), 0.02)
    for name in ("ln1a", "ln2a"):
        p[name] = jnp.ones((N_LAYERS, 1, D_MODEL), jnp.float32)
    for name in ("ln1b", "ln2b"):
        p[name] = jnp.zeros((N_LAYERS, 1, D_MODEL), jnp.float32)
    p["fna"] = jnp.ones((1, D_MODEL), jnp.float32)
    p["fnb"] = jnp.zeros((1, D_MODEL), jnp.float32)
    p["ws1"] = rnd((D_MODEL, N_HIDDEN))        # Linear(d_model, nhidden, bias=False)
    p["ws2"] = rnd((N_HIDDEN, NHOPS))          # Linear(nhidden, nhops,  bias=False)
    return p


if __name__ == "__main__":
    key = jax.random.PRNGKey(0)
    kp, ki, ke = jax.random.split(key, 3)
    params = init_params(kp)

    inp = jax.random.randint(ki, (BATCH, SEQ), 1, 50, dtype=jnp.int32)
    inp = inp.at[1, SEQ - 2:].set(PAD_INDEX)              # introduce some padding
    emb = jax.random.normal(ke, (BATCH, SEQ, D_MODEL), dtype=jnp.float32)

    pooled, alphas = self_attentive_encoder(inp, emb, params)
    jax.block_until_ready((pooled, alphas))

    ref_pooled, ref_alphas = _reference_forward(emb, inp, params)

    assert pooled.shape == (BATCH, NHOPS, D_MODEL)
    assert alphas.shape == (BATCH, NHOPS, SEQ)
    assert bool(jnp.all(jnp.isfinite(pooled))) and bool(jnp.all(jnp.isfinite(alphas)))
    assert jnp.allclose(pooled, ref_pooled, atol=2e-2, rtol=2e-2)
    assert jnp.allclose(alphas, ref_alphas, atol=2e-2, rtol=2e-2)
    print("KERNEL_OK")
</pallas_src>

<mosaic_0001>
module attributes {stable_mosaic.version = 11 : i64} {
  func.func @_kernel(%arg0: memref<2x8x32xf32, #tpu.memory_space<vmem>>, %arg1: memref<2x1x8xf32, #tpu.memory_space<vmem>>, %arg2: memref<352x128xf32, #tpu.memory_space<vmem>>, %arg3: memref<2x2x32xf32, #tpu.memory_space<vmem>>, %arg4: memref<2x2x8xf32, #tpu.memory_space<vmem>>) attributes {dimension_semantics = [], scalar_prefetch = 0 : i64, scratch_operands = 0 : i64, tpu.core_type = #tpu.core_type<tc>} {
    %c0 = arith.constant 0 : index
    %c0_0 = arith.constant 0 : index
    %c0_1 = arith.constant 0 : index
    %0 = vector.load %arg0[%c0, %c0_0, %c0_1] : memref<2x8x32xf32, #tpu.memory_space<vmem>>, vector<2x8x32xf32>
    %1 = vector.shape_cast %0 : vector<2x8x32xf32> to vector<16x32xf32>
    %c0_2 = arith.constant 0 : index
    %c0_3 = arith.constant 0 : index
    %c0_4 = arith.constant 0 : index
    %2 = vector.load %arg1[%c0_2, %c0_3, %c0_4] : memref<2x1x8xf32, #tpu.memory_space<vmem>>, vector<2x1x8xf32>
    %cst = arith.constant -1.000000e+09 : f32
    %3 = vector.broadcast %cst : f32 to vector<2x1x8xf32>
    %4 = arith.mulf %2, %3 : vector<2x1x8xf32>
    %5 = vector.shape_cast %4 : vector<2x1x8xf32> to vector<2x1x8xf32>
    %6 = vector.broadcast %5 : vector<2x1x8xf32> to vector<2x8x8xf32>
    %cst_5 = arith.constant -1.000000e+04 : f32
    %7 = vector.broadcast %cst_5 : f32 to vector<2x1x8xf32>
    %8 = arith.mulf %2, %7 : vector<2x1x8xf32>
    %c144 = arith.constant 144 : index
    %c0_6 = arith.constant 0 : index
    %9 = vector.load %arg2[%c144, %c0_6] : memref<352x128xf32, #tpu.memory_space<vmem>>, vector<1x96xf32>
    %c145 = arith.constant 145 : index
    %c0_7 = arith.constant 0 : index
    %10 = vector.load %arg2[%c145, %c0_7] : memref<352x128xf32, #tpu.memory_space<vmem>>, vector<1x32xf32>
    %c146 = arith.constant 146 : index
    %c0_8 = arith.constant 0 : index
    %11 = vector.load %arg2[%c146, %c0_8] : memref<352x128xf32, #tpu.memory_space<vmem>>, vector<1x48xf32>
    %c147 = arith.constant 147 : index
    %c0_9 = arith.constant 0 : index
    %12 = vector.load %arg2[%c147, %c0_9] : memref<352x128xf32, #tpu.memory_space<vmem>>, vector<1x32xf32>
    %c148 = arith.constant 148 : index
    %c0_10 = arith.constant 0 : index
    %13 = vector.load %arg2[%c148, %c0_10] : memref<352x128xf32, #tpu.memory_space<vmem>>, vector<1x32xf32>
    %c149 = arith.constant 149 : index
    %c0_11 = arith.constant 0 : index
    %14 = vector.load %arg2[%c149, %c0_11] : memref<352x128xf32, #tpu.memory_space<vmem>>, vector<1x32xf32>
    %c150 = arith.constant 150 : index
    %c0_12 = arith.constant 0 : index
    %15 = vector.load %arg2[%c150, %c0_12] : memref<352x128xf32, #tpu.memory_space<vmem>>, vector<1x32xf32>
    %c151 = arith.constant 151 : index
    %c0_13 = arith.constant 0 : index
    %16 = vector.load %arg2[%c151, %c0_13] : memref<352x128xf32, #tpu.memory_space<vmem>>, vector<1x32xf32>
    %cst_14 = arith.constant dense<0.000000e+00> : vector<16xf32>
    %17 = vector.multi_reduction <add>, %1, %cst_14 [1] : vector<16x32xf32> to vector<16xf32>
    %18 = vector.shape_cast %17 : vector<16xf32> to vector<16x1xf32>
    %cst_15 = arith.constant 3.200000e+01 : f32
    %19 = vector.broadcast %cst_15 : f32 to vector<16x1xf32>
    %20 = arith.divf %18, %19 : vector<16x1xf32>
    %21 = vector.broadcast %20 : vector<16x1xf32> to vector<16x32xf32>
    %22 = arith.subf %1, %21 : vector<16x32xf32>
    %23 = arith.mulf %22, %22 : vector<16x32xf32>
    %cst_16 = arith.constant dense<0.000000e+00> : vector<16xf32>
    %24 = vector.multi_reduction <add>, %23, %cst_16 [1] : vector<16x32xf32> to vector<16xf32>
    %25 = vector.shape_cast %24 : vector<16xf32> to vector<16x1xf32>
    %cst_17 = arith.constant 3.100000e+01 : f32
    %26 = vector.broadcast %cst_17 : f32 to vector<16x1xf32>
    %27 = arith.divf %25, %26 : vector<16x1xf32>
    %28 = vector.broadcast %13 : vector<1x32xf32> to vector<16x32xf32>
    %29 = arith.mulf %28, %22 : vector<16x32xf32>
    %30 = math.sqrt %27 : vector<16x1xf32>
    %cst_18 = arith.constant 9.99999997E-7 : f32
    %31 = vector.broadcast %cst_18 : f32 to vector<16x1xf32>
    %32 = arith.addf %30, %31 : vector<16x1xf32>
    %33 = vector.broadcast %32 : vector<16x1xf32> to vector<16x32xf32>
    %34 = arith.divf %29, %33 : vector<16x32xf32>
    %35 = vector.broadcast %14 : vector<1x32xf32> to vector<16x32xf32>
    %36 = arith.addf %34, %35 : vector<16x32xf32>
    %c0_19 = arith.constant 0 : index
    %c0_20 = arith.constant 0 : index
    %37 = vector.load %arg2[%c0_19, %c0_20] : memref<352x128xf32, #tpu.memory_space<vmem>>, vector<32x96xf32>
    %cst_21 = arith.constant dense<0.000000e+00> : vector<16x96xf32>
    %38 = tpu.matmul %36, %37, %cst_21 {dimension_numbers = #tpu.dot_dimension_numbers<[1], [0], [0], [1], [0, 0, 1, 1], [], []>} : vector<16x32xf32>, vector<32x96xf32>, vector<16x96xf32> -> vector<16x96xf32>
    %39 = vector.broadcast %9 : vector<1x96xf32> to vector<16x96xf32>
    %40 = arith.addf %38, %39 : vector<16x96xf32>
    %41 = vector.extract_strided_slice %40 {offsets = [0, 0], sizes = [16, 32], strides = [1, 1]} : vector<16x96xf32> to vector<16x32xf32>
    %cst_22 = arith.constant 0.353553385 : f32
    %42 = vector.broadcast %cst_22 : f32 to vector<16x32xf32>
    %43 = arith.mulf %41, %42 : vector<16x32xf32>
    %44 = vector.shape_cast %43 : vector<16x32xf32> to vector<2x8x32xf32>
    %45 = vector.extract_strided_slice %40 {offsets = [0, 32], sizes = [16, 32], strides = [1, 1]} : vector<16x96xf32> to vector<16x32xf32>
    %46 = vector.shape_cast %45 : vector<16x32xf32> to vector<2x8x32xf32>
    %47 = vector.extract_strided_slice %40 {offsets = [0, 64], sizes = [16, 32], strides = [1, 1]} : vector<16x96xf32> to vector<16x32xf32>
    %48 = vector.shape_cast %47 : vector<16x32xf32> to vector<2x8x32xf32>
    %c32 = arith.constant 32 : index
    %c0_23 = arith.constant 0 : index
    %49 = vector.load %arg2[%c32, %c0_23] : memref<352x128xf32, #tpu.memory_space<vmem>>, vector<32x32xf32>
    %50 = vector.extract_strided_slice %44 {offsets = [0, 0, 0], sizes = [2, 8, 8], strides = [1, 1, 1]} : vector<2x8x32xf32> to vector<2x8x8xf32>
    %51 = vector.extract_strided_slice %46 {offsets = [0, 0, 0], sizes = [2, 8, 8], strides = [1, 1, 1]} : vector<2x8x32xf32> to vector<2x8x8xf32>
    %cst_24 = arith.constant dense<0.000000e+00> : vector<2x8x8xf32>
    %52 = tpu.matmul %50, %51, %cst_24 {dimension_numbers = #tpu.dot_dimension_numbers<[2], [2], [1], [1], [0, 0, 0, 1, 1, 1], [0], [0]>} : vector<2x8x8xf32>, vector<2x8x8xf32>, vector<2x8x8xf32> -> vector<2x8x8xf32>
    %53 = arith.addf %52, %6 : vector<2x8x8xf32>
    %cst_25 = arith.constant dense<0xFF800000> : vector<2x8xf32>
    %54 = vector.multi_reduction <maximumf>, %53, %cst_25 [2] : vector<2x8x8xf32> to vector<2x8xf32>
    %55 = vector.shape_cast %54 : vector<2x8xf32> to vector<2x8x1xf32>
    %56 = vector.broadcast %55 : vector<2x8x1xf32> to vector<2x8x8xf32>
    %57 = arith.subf %53, %56 : vector<2x8x8xf32>
    %58 = math.exp %57 : vector<2x8x8xf32>
    %cst_26 = arith.constant dense<0.000000e+00> : vector<2x8xf32>
    %59 = vector.multi_reduction <add>, %58, %cst_26 [2] : vector<2x8x8xf32> to vector<2x8xf32>
    %60 = vector.shape_cast %59 : vector<2x8xf32> to vector<2x8x1xf32>
    %61 = vector.broadcast %60 : vector<2x8x1xf32> to vector<2x8x8xf32>
    %62 = arith.divf %58, %61 : vector<2x8x8xf32>
    %63 = vector.extract_strided_slice %48 {offsets = [0, 0, 0], sizes = [2, 8, 8], strides = [1, 1, 1]} : vector<2x8x32xf32> to vector<2x8x8xf32>
    %cst_27 = arith.constant dense<0.000000e+00> : vector<2x8x8xf32>
    %64 = tpu.matmul %62, %63, %cst_27 {dimension_numbers = #tpu.dot_dimension_numbers<[2], [1], [1], [2], [0, 0, 0, 1, 1, 2], [0], [0]>} : vector<2x8x8xf32>, vector<2x8x8xf32>, vector<2x8x8xf32> -> vector<2x8x8xf32>
    %65 = vector.shape_cast %64 : vector<2x8x8xf32> to vector<16x8xf32>
    %66 = vector.extract_strided_slice %49 {offsets = [0, 0], sizes = [8, 32], strides = [1, 1]} : vector<32x32xf32> to vector<8x32xf32>
    %cst_28 = arith.constant dense<0.000000e+00> : vector<16x32xf32>
    %67 = tpu.matmul %65, %66, %cst_28 {dimension_numbers = #tpu.dot_dimension_numbers<[1], [0], [0], [1], [0, 0, 1, 1], [], []>} : vector<16x8xf32>, vector<8x32xf32>, vector<16x32xf32> -> vector<16x32xf32>
    %68 = vector.extract_strided_slice %44 {offsets = [0, 0, 8], sizes = [2, 8, 8], strides = [1, 1, 1]} : vector<2x8x32xf32> to vector<2x8x8xf32>
    %69 = vector.extract_strided_slice %46 {offsets = [0, 0, 8], sizes = [2, 8, 8], strides = [1, 1, 1]} : vector<2x8x32xf32> to vector<2x8x8xf32>
    %cst_29 = arith.constant dense<0.000000e+00> : vector<2x8x8xf32>
    %70 = tpu.matmul %68, %69, %cst_29 {dimension_numbers = #tpu.dot_dimension_numbers<[2], [2], [1], [1], [0, 0, 0, 1, 1, 1], [0], [0]>} : vector<2x8x8xf32>, vector<2x8x8xf32>, vector<2x8x8xf32> -> vector<2x8x8xf32>
    %71 = arith.addf %70, %6 : vector<2x8x8xf32>
    %cst_30 = arith.constant dense<0xFF800000> : vector<2x8xf32>
    %72 = vector.multi_reduction <maximumf>, %71, %cst_30 [2] : vector<2x8x8xf32> to vector<2x8xf32>
    %73 = vector.shape_cast %72 : vector<2x8xf32> to vector<2x8x1xf32>
    %74 = vector.broadcast %73 : vector<2x8x1xf32> to vector<2x8x8xf32>
    %75 = arith.subf %71, %74 : vector<2x8x8xf32>
    %76 = math.exp %75 : vector<2x8x8xf32>
    %cst_31 = arith.constant dense<0.000000e+00> : vector<2x8xf32>
    %77 = vector.multi_reduction <add>, %76, %cst_31 [2] : vector<2x8x8xf32> to vector<2x8xf32>
    %78 = vector.shape_cast %77 : vector<2x8xf32> to vector<2x8x1xf32>
    %79 = vector.broadcast %78 : vector<2x8x1xf32> to vector<2x8x8xf32>
    %80 = arith.divf %76, %79 : vector<2x8x8xf32>
    %81 = vector.extract_strided_slice %48 {offsets = [0, 0, 8], sizes = [2, 8, 8], strides = [1, 1, 1]} : vector<2x8x32xf32> to vector<2x8x8xf32>
    %cst_32 = arith.constant dense<0.000000e+00> : vector<2x8x8xf32>
    %82 = tpu.matmul %80, %81, %cst_32 {dimension_numbers = #tpu.dot_dimension_numbers<[2], [1], [1], [2], [0, 0, 0, 1, 1, 2], [0], [0]>} : vector<2x8x8xf32>, vector<2x8x8xf32>, vector<2x8x8xf32> -> vector<2x8x8xf32>
    %83 = vector.shape_cast %82 : vector<2x8x8xf32> to vector<16x8xf32>
    %84 = vector.extract_strided_slice %49 {offsets = [8, 0], sizes = [8, 32], strides = [1, 1]} : vector<32x32xf32> to vector<8x32xf32>
    %cst_33 = arith.constant dense<0.000000e+00> : vector<16x32xf32>
    %85 = tpu.matmul %83, %84, %cst_33 {dimension_numbers = #tpu.dot_dimension_numbers<[1], [0], [0], [1], [0, 0, 1, 1], [], []>} : vector<16x8xf32>, vector<8x32xf32>, vector<16x32xf32> -> vector<16x32xf32>
    %86 = arith.addf %67, %85 : vector<16x32xf32>
    %87 = vector.extract_strided_slice %44 {offsets = [0, 0, 16], sizes = [2, 8, 8], strides = [1, 1, 1]} : vector<2x8x32xf32> to vector<2x8x8xf32>
    %88 = vector.extract_strided_slice %46 {offsets = [0, 0, 16], sizes = [2, 8, 8], strides = [1, 1, 1]} : vector<2x8x32xf32> to vector<2x8x8xf32>
    %cst_34 = arith.constant dense<0.000000e+00> : vector<2x8x8xf32>
    %89 = tpu.matmul %87, %88, %cst_34 {dimension_numbers = #tpu.dot_dimension_numbers<[2], [2], [1], [1], [0, 0, 0, 1, 1, 1], [0], [0]>} : vector<2x8x8xf32>, vector<2x8x8xf32>, vector<2x8x8xf32> -> vector<2x8x8xf32>
    %90 = arith.addf %89, %6 : vector<2x8x8xf32>
    %cst_35 = arith.constant dense<0xFF800000> : vector<2x8xf32>
    %91 = vector.multi_reduction <maximumf>, %90, %cst_35 [2] : vector<2x8x8xf32> to vector<2x8xf32>
    %92 = vector.shape_cast %91 : vector<2x8xf32> to vector<2x8x1xf32>
    %93 = vector.broadcast %92 : vector<2x8x1xf32> to vector<2x8x8xf32>
    %94 = arith.subf %90, %93 : vector<2x8x8xf32>
    %95 = math.exp %94 : vector<2x8x8xf32>
    %cst_36 = arith.constant dense<0.000000e+00> : vector<2x8xf32>
    %96 = vector.multi_reduction <add>, %95, %cst_36 [2] : vector<2x8x8xf32> to vector<2x8xf32>
    %97 = vector.shape_cast %96 : vector<2x8xf32> to vector<2x8x1xf32>
    %98 = vector.broadcast %97 : vector<2x8x1xf32> to vector<2x8x8xf32>
    %99 = arith.divf %95, %98 : vector<2x8x8xf32>
    %100 = vector.extract_strided_slice %48 {offsets = [0, 0, 16], sizes = [2, 8, 8], strides = [1, 1, 1]} : vector<2x8x32xf32> to vector<2x8x8xf32>
    %cst_37 = arith.constant dense<0.000000e+00> : vector<2x8x8xf32>
    %101 = tpu.matmul %99, %100, %cst_37 {dimension_numbers = #tpu.dot_dimension_numbers<[2], [1], [1], [2], [0, 0, 0, 1, 1, 2], [0], [0]>} : vector<2x8x8xf32>, vector<2x8x8xf32>, vector<2x8x8xf32> -> vector<2x8x8xf32>
    %102 = vector.shape_cast %101 : vector<2x8x8xf32> to vector<16x8xf32>
    %103 = vector.extract_strided_slice %49 {offsets = [16, 0], sizes = [8, 32], strides = [1, 1]} : vector<32x32xf32> to vector<8x32xf32>
    %cst_38 = arith.constant dense<0.000000e+00> : vector<16x32xf32>
    %104 = tpu.matmul %102, %103, %cst_38 {dimension_numbers = #tpu.dot_dimension_numbers<[1], [0], [0], [1], [0, 0, 1, 1], [], []>} : vector<16x8xf32>, vector<8x32xf32>, vector<16x32xf32> -> vector<16x32xf32>
    %105 = arith.addf %86, %104 : vector<16x32xf32>
    %106 = vector.extract_strided_slice %44 {offsets = [0, 0, 24], sizes = [2, 8, 8], strides = [1, 1, 1]} : vector<2x8x32xf32> to vector<2x8x8xf32>
    %107 = vector.extract_strided_slice %46 {offsets = [0, 0, 24], sizes = [2, 8, 8], strides = [1, 1, 1]} : vector<2x8x32xf32> to vector<2x8x8xf32>
    %cst_39 = arith.constant dense<0.000000e+00> : vector<2x8x8xf32>
    %108 = tpu.matmul %106, %107, %cst_39 {dimension_numbers = #tpu.dot_dimension_numbers<[2], [2], [1], [1], [0, 0, 0, 1, 1, 1], [0], [0]>} : vector<2x8x8xf32>, vector<2x8x8xf32>, vector<2x8x8xf32> -> vector<2x8x8xf32>
    %109 = arith.addf %108, %6 : vector<2x8x8xf32>
    %cst_40 = arith.constant dense<0xFF800000> : vector<2x8xf32>
    %110 = vector.multi_reduction <maximumf>, %109, %cst_40 [2] : vector<2x8x8xf32> to vector<2x8xf32>
    %111 = vector.shape_cast %110 : vector<2x8xf32> to vector<2x8x1xf32>
    %112 = vector.broadcast %111 : vector<2x8x1xf32> to vector<2x8x8xf32>
    %113 = arith.subf %109, %112 : vector<2x8x8xf32>
    %114 = math.exp %113 : vector<2x8x8xf32>
    %cst_41 = arith.constant dense<0.000000e+00> : vector<2x8xf32>
    %115 = vector.multi_reduction <add>, %114, %cst_41 [2] : vector<2x8x8xf32> to vector<2x8xf32>
    %116 = vector.shape_cast %115 : vector<2x8xf32> to vector<2x8x1xf32>
    %117 = vector.broadcast %116 : vector<2x8x1xf32> to vector<2x8x8xf32>
    %118 = arith.divf %114, %117 : vector<2x8x8xf32>
    %119 = vector.extract_strided_slice %48 {offsets = [0, 0, 24], sizes = [2, 8, 8], strides = [1, 1, 1]} : vector<2x8x32xf32> to vector<2x8x8xf32>
    %cst_42 = arith.constant dense<0.000000e+00> : vector<2x8x8xf32>
    %120 = tpu.matmul %118, %119, %cst_42 {dimension_numbers = #tpu.dot_dimension_numbers<[2], [1], [1], [2], [0, 0, 0, 1, 1, 2], [0], [0]>} : vector<2x8x8xf32>, vector<2x8x8xf32>, vector<2x8x8xf32> -> vector<2x8x8xf32>
    %121 = vector.shape_cast %120 : vector<2x8x8xf32> to vector<16x8xf32>
    %122 = vector.extract_strided_slice %49 {offsets = [24, 0], sizes = [8, 32], strides = [1, 1]} : vector<32x32xf32> to vector<8x32xf32>
    %cst_43 = arith.constant dense<0.000000e+00> : vector<16x32xf32>
    %123 = tpu.matmul %121, %122, %cst_43 {dimension_numbers = #tpu.dot_dimension_numbers<[1], [0], [0], [1], [0, 0, 1, 1], [], []>} : vector<16x8xf32>, vector<8x32xf32>, vector<16x32xf32> -> vector<16x32xf32>
    %124 = arith.addf %105, %123 : vector<16x32xf32>
    %125 = arith.addf %1, %124 : vector<16x32xf32>
    %126 = vector.broadcast %10 : vector<1x32xf32> to vector<16x32xf32>
    %127 = arith.addf %125, %126 : vector<16x32xf32>
    %cst_44 = arith.constant dense<0.000000e+00> : vector<16xf32>
    %128 = vector.multi_reduction <add>, %127, %cst_44 [1] : vector<16x32xf32> to vector<16xf32>
    %129 = vector.shape_cast %128 : vector<16xf32> to vector<16x1xf32>
    %cst_45 = arith.constant 3.200000e+01 : f32
    %130 = vector.broadcast %cst_45 : f32 to vector<16x1xf32>
    %131 = arith.divf %129, %130 : vector<16x1xf32>
    %132 = vector.broadcast %131 : vector<16x1xf32> to vector<16x32xf32>
    %133 = arith.subf %127, %132 : vector<16x32xf32>
    %134 = arith.mulf %133, %133 : vector<16x32xf32>
    %cst_46 = arith.constant dense<0.000000e+00> : vector<16xf32>
    %135 = vector.multi_reduction <add>, %134, %cst_46 [1] : vector<16x32xf32> to vector<16xf32>
    %136 = vector.shape_cast %135 : vector<16xf32> to vector<16x1xf32>
    %cst_47 = arith.constant 3.100000e+01 : f32
    %137 = vector.broadcast %cst_47 : f32 to vector<16x1xf32>
    %138 = arith.divf %136, %137 : vector<16x1xf32>
    %139 = vector.broadcast %15 : vector<1x32xf32> to vector<16x32xf32>
    %140 = arith.mulf %139, %133 : vector<16x32xf32>
    %141 = math.sqrt %138 : vector<16x1xf32>
    %cst_48 = arith.constant 9.99999997E-7 : f32
    %142 = vector.broadcast %cst_48 : f32 to vector<16x1xf32>
    %143 = arith.addf %141, %142 : vector<16x1xf32>
    %144 = vector.broadcast %143 : vector<16x1xf32> to vector<16x32xf32>
    %145 = arith.divf %140, %144 : vector<16x32xf32>
    %146 = vector.broadcast %16 : vector<1x32xf32> to vector<16x32xf32>
    %147 = arith.addf %145, %146 : vector<16x32xf32>
    %c64 = arith.constant 64 : index
    %c0_49 = arith.constant 0 : index
    %148 = vector.load %arg2[%c64, %c0_49] : memref<352x128xf32, #tpu.memory_space<vmem>>, vector<32x48xf32>
    %cst_50 = arith.constant dense<0.000000e+00> : vector<16x48xf32>
    %149 = tpu.matmul %147, %148, %cst_50 {dimension_numbers = #tpu.dot_dimension_numbers<[1], [0], [0], [1], [0, 0, 1, 1], [], []>} : vector<16x32xf32>, vector<32x48xf32>, vector<16x48xf32> -> vector<16x48xf32>
    %150 = vector.broadcast %11 : vector<1x48xf32> to vector<16x48xf32>
    %151 = arith.addf %149, %150 : vector<16x48xf32>
    %cst_51 = arith.constant 0.000000e+00 : f32
    %152 = vector.broadcast %cst_51 : f32 to vector<16x48xf32>
    %153 = arith.maximumf %151, %152 : vector<16x48xf32>
    %c96 = arith.constant 96 : index
    %c0_52 = arith.constant 0 : index
    %154 = vector.load %arg2[%c96, %c0_52] : memref<352x128xf32, #tpu.memory_space<vmem>>, vector<48x32xf32>
    %cst_53 = arith.constant dense<0.000000e+00> : vector<16x32xf32>
    %155 = tpu.matmul %153, %154, %cst_53 {dimension_numbers = #tpu.dot_dimension_numbers<[1], [0], [0], [1], [0, 0, 1, 1], [], []>} : vector<16x48xf32>, vector<48x32xf32>, vector<16x32xf32> -> vector<16x32xf32>
    %156 = arith.addf %127, %155 : vector<16x32xf32>
    %157 = vector.broadcast %12 : vector<1x32xf32> to vector<16x32xf32>
    %158 = arith.addf %156, %157 : vector<16x32xf32>
    %c296 = arith.constant 296 : index
    %c0_54 = arith.constant 0 : index
    %159 = vector.load %arg2[%c296, %c0_54] : memref<352x128xf32, #tpu.memory_space<vmem>>, vector<1x96xf32>
    %c297 = arith.constant 297 : index
    %c0_55 = arith.constant 0 : index
    %160 = vector.load %arg2[%c297, %c0_55] : memref<352x128xf32, #tpu.memory_space<vmem>>, vector<1x32xf32>
    %c298 = arith.constant 298 : index
    %c0_56 = arith.constant 0 : index
    %161 = vector.load %arg2[%c298, %c0_56] : memref<352x128xf32, #tpu.memory_space<vmem>>, vector<1x48xf32>
    %c299 = arith.constant 299 : index
    %c0_57 = arith.constant 0 : index
    %162 = vector.load %arg2[%c299, %c0_57] : memref<352x128xf32, #tpu.memory_space<vmem>>, vector<1x32xf32>
    %c300 = arith.constant 300 : index
    %c0_58 = arith.constant 0 : index
    %163 = vector.load %arg2[%c300, %c0_58] : memref<352x128xf32, #tpu.memory_space<vmem>>, vector<1x32xf32>
    %c301 = arith.constant 301 : index
    %c0_59 = arith.constant 0 : index
    %164 = vector.load %arg2[%c301, %c0_59] : memref<352x128xf32, #tpu.memory_space<vmem>>, vector<1x32xf32>
    %c302 = arith.constant 302 : index
    %c0_60 = arith.constant 0 : index
    %165 = vector.load %arg2[%c302, %c0_60] : memref<352x128xf32, #tpu.memory_space<vmem>>, vector<1x32xf32>
    %c303 = arith.constant 303 : index
    %c0_61 = arith.constant 0 : index
    %166 = vector.load %arg2[%c303, %c0_61] : memref<352x128xf32, #tpu.memory_space<vmem>>, vector<1x32xf32>
    %cst_62 = arith.constant dense<0.000000e+00> : vector<16xf32>
    %167 = vector.multi_reduction <add>, %158, %cst_62 [1] : vector<16x32xf32> to vector<16xf32>
    %168 = vector.shape_cast %167 : vector<16xf32> to vector<16x1xf32>
    %cst_63 = arith.constant 3.200000e+01 : f32
    %169 = vector.broadcast %cst_63 : f32 to vector<16x1xf32>
    %170 = arith.divf %168, %169 : vector<16x1xf32>
    %171 = vector.broadcast %170 : vector<16x1xf32> to vector<16x32xf32>
    %172 = arith.subf %158, %171 : vector<16x32xf32>
    %173 = arith.mulf %172, %172 : vector<16x32xf32>
    %cst_64 = arith.constant dense<0.000000e+00> : vector<16xf32>
    %174 = vector.multi_reduction <add>, %173, %cst_64 [1] : vector<16x32xf32> to vector<16xf32>
    %175 = vector.shape_cast %174 : vector<16xf32> to vector<16x1xf32>
    %cst_65 = arith.constant 3.100000e+01 : f32
    %176 = vector.broadcast %cst_65 : f32 to vector<16x1xf32>
    %177 = arith.divf %175, %176 : vector<16x1xf32>
    %178 = vector.broadcast %163 : vector<1x32xf32> to vector<16x32xf32>
    %179 = arith.mulf %178, %172 : vector<16x32xf32>
    %180 = math.sqrt %177 : vector<16x1xf32>
    %cst_66 = arith.constant 9.99999997E-7 : f32
    %181 = vector.broadcast %cst_66 : f32 to vector<16x1xf32>
    %182 = arith.addf %180, %181 : vector<16x1xf32>
    %183 = vector.broadcast %182 : vector<16x1xf32> to vector<16x32xf32>
    %184 = arith.divf %179, %183 : vector<16x32xf32>
    %185 = vector.broadcast %164 : vector<1x32xf32> to vector<16x32xf32>
    %186 = arith.addf %184, %185 : vector<16x32xf32>
    %c152 = arith.constant 152 : index
    %c0_67 = arith.constant 0 : index
    %187 = vector.load %arg2[%c152, %c0_67] : memref<352x128xf32, #tpu.memory_space<vmem>>, vector<32x96xf32>
    %cst_68 = arith.constant dense<0.000000e+00> : vector<16x96xf32>
    %188 = tpu.matmul %186, %187, %cst_68 {dimension_numbers = #tpu.dot_dimension_numbers<[1], [0], [0], [1], [0, 0, 1, 1], [], []>} : vector<16x32xf32>, vector<32x96xf32>, vector<16x96xf32> -> vector<16x96xf32>
    %189 = vector.broadcast %159 : vector<1x96xf32> to vector<16x96xf32>
    %190 = arith.addf %188, %189 : vector<16x96xf32>
    %191 = vector.extract_strided_slice %190 {offsets = [0, 0], sizes = [16, 32], strides = [1, 1]} : vector<16x96xf32> to vector<16x32xf32>
    %cst_69 = arith.constant 0.353553385 : f32
    %192 = vector.broadcast %cst_69 : f32 to vector<16x32xf32>
    %193 = arith.mulf %191, %192 : vector<16x32xf32>
    %194 = vector.shape_cast %193 : vector<16x32xf32> to vector<2x8x32xf32>
    %195 = vector.extract_strided_slice %190 {offsets = [0, 32], sizes = [16, 32], strides = [1, 1]} : vector<16x96xf32> to vector<16x32xf32>
    %196 = vector.shape_cast %195 : vector<16x32xf32> to vector<2x8x32xf32>
    %197 = vector.extract_strided_slice %190 {offsets = [0, 64], sizes = [16, 32], strides = [1, 1]} : vector<16x96xf32> to vector<16x32xf32>
    %198 = vector.shape_cast %197 : vector<16x32xf32> to vector<2x8x32xf32>
    %c184 = arith.constant 184 : index
    %c0_70 = arith.constant 0 : index
    %199 = vector.load %arg2[%c184, %c0_70] : memref<352x128xf32, #tpu.memory_space<vmem>>, vector<32x32xf32>
    %200 = vector.extract_strided_slice %194 {offsets = [0, 0, 0], sizes = [2, 8, 8], strides = [1, 1, 1]} : vector<2x8x32xf32> to vector<2x8x8xf32>
    %201 = vector.extract_strided_slice %196 {offsets = [0, 0, 0], sizes = [2, 8, 8], strides = [1, 1, 1]} : vector<2x8x32xf32> to vector<2x8x8xf32>
    %cst_71 = arith.constant dense<0.000000e+00> : vector<2x8x8xf32>
    %202 = tpu.matmul %200, %201, %cst_71 {dimension_numbers = #tpu.dot_dimension_numbers<[2], [2], [1], [1], [0, 0, 0, 1, 1, 1], [0], [0]>} : vector<2x8x8xf32>, vector<2x8x8xf32>, vector<2x8x8xf32> -> vector<2x8x8xf32>
    %203 = arith.addf %202, %6 : vector<2x8x8xf32>
    %cst_72 = arith.constant dense<0xFF800000> : vector<2x8xf32>
    %204 = vector.multi_reduction <maximumf>, %203, %cst_72 [2] : vector<2x8x8xf32> to vector<2x8xf32>
    %205 = vector.shape_cast %204 : vector<2x8xf32> to vector<2x8x1xf32>
    %206 = vector.broadcast %205 : vector<2x8x1xf32> to vector<2x8x8xf32>
    %207 = arith.subf %203, %206 : vector<2x8x8xf32>
    %208 = math.exp %207 : vector<2x8x8xf32>
    %cst_73 = arith.constant dense<0.000000e+00> : vector<2x8xf32>
    %209 = vector.multi_reduction <add>, %208, %cst_73 [2] : vector<2x8x8xf32> to vector<2x8xf32>
    %210 = vector.shape_cast %209 : vector<2x8xf32> to vector<2x8x1xf32>
    %211 = vector.broadcast %210 : vector<2x8x1xf32> to vector<2x8x8xf32>
    %212 = arith.divf %208, %211 : vector<2x8x8xf32>
    %213 = vector.extract_strided_slice %198 {offsets = [0, 0, 0], sizes = [2, 8, 8], strides = [1, 1, 1]} : vector<2x8x32xf32> to vector<2x8x8xf32>
    %cst_74 = arith.constant dense<0.000000e+00> : vector<2x8x8xf32>
    %214 = tpu.matmul %212, %213, %cst_74 {dimension_numbers = #tpu.dot_dimension_numbers<[2], [1], [1], [2], [0, 0, 0, 1, 1, 2], [0], [0]>} : vector<2x8x8xf32>, vector<2x8x8xf32>, vector<2x8x8xf32> -> vector<2x8x8xf32>
    %215 = vector.shape_cast %214 : vector<2x8x8xf32> to vector<16x8xf32>
    %216 = vector.extract_strided_slice %199 {offsets = [0, 0], sizes = [8, 32], strides = [1, 1]} : vector<32x32xf32> to vector<8x32xf32>
    %cst_75 = arith.constant dense<0.000000e+00> : vector<16x32xf32>
    %217 = tpu.matmul %215, %216, %cst_75 {dimension_numbers = #tpu.dot_dimension_numbers<[1], [0], [0], [1], [0, 0, 1, 1], [], []>} : vector<16x8xf32>, vector<8x32xf32>, vector<16x32xf32> -> vector<16x32xf32>
    %218 = vector.extract_strided_slice %194 {offsets = [0, 0, 8], sizes = [2, 8, 8], strides = [1, 1, 1]} : vector<2x8x32xf32> to vector<2x8x8xf32>
    %219 = vector.extract_strided_slice %196 {offsets = [0, 0, 8], sizes = [2, 8, 8], strides = [1, 1, 1]} : vector<2x8x32xf32> to vector<2x8x8xf32>
    %cst_76 = arith.constant dense<0.000000e+00> : vector<2x8x8xf32>
    %220 = tpu.matmul %218, %219, %cst_76 {dimension_numbers = #tpu.dot_dimension_numbers<[2], [2], [1], [1], [0, 0, 0, 1, 1, 1], [0], [0]>} : vector<2x8x8xf32>, vector<2x8x8xf32>, vector<2x8x8xf32> -> vector<2x8x8xf32>
    %221 = arith.addf %220, %6 : vector<2x8x8xf32>
    %cst_77 = arith.constant dense<0xFF800000> : vector<2x8xf32>
    %222 = vector.multi_reduction <maximumf>, %221, %cst_77 [2] : vector<2x8x8xf32> to vector<2x8xf32>
    %223 = vector.shape_cast %222 : vector<2x8xf32> to vector<2x8x1xf32>
    %224 = vector.broadcast %223 : vector<2x8x1xf32> to vector<2x8x8xf32>
    %225 = arith.subf %221, %224 : vector<2x8x8xf32>
    %226 = math.exp %225 : vector<2x8x8xf32>
    %cst_78 = arith.constant dense<0.000000e+00> : vector<2x8xf32>
    %227 = vector.multi_reduction <add>, %226, %cst_78 [2] : vector<2x8x8xf32> to vector<2x8xf32>
    %228 = vector.shape_cast %227 : vector<2x8xf32> to vector<2x8x1xf32>
    %229 = vector.broadcast %228 : vector<2x8x1xf32> to vector<2x8x8xf32>
    %230 = arith.divf %226, %229 : vector<2x8x8xf32>
    %231 = vector.extract_strided_slice %198 {offsets = [0, 0, 8], sizes = [2, 8, 8], strides = [1, 1, 1]} : vector<2x8x32xf32> to vector<2x8x8xf32>
    %cst_79 = arith.constant dense<0.000000e+00> : vector<2x8x8xf32>
    %232 = tpu.matmul %230, %231, %cst_79 {dimension_numbers = #tpu.dot_dimension_numbers<[2], [1], [1], [2], [0, 0, 0, 1, 1, 2], [0], [0]>} : vector<2x8x8xf32>, vector<2x8x8xf32>, vector<2x8x8xf32> -> vector<2x8x8xf32>
    %233 = vector.shape_cast %232 : vector<2x8x8xf32> to vector<16x8xf32>
    %234 = vector.extract_strided_slice %199 {offsets = [8, 0], sizes = [8, 32], strides = [1, 1]} : vector<32x32xf32> to vector<8x32xf32>
    %cst_80 = arith.constant dense<0.000000e+00> : vector<16x32xf32>
    %235 = tpu.matmul %233, %234, %cst_80 {dimension_numbers = #tpu.dot_dimension_numbers<[1], [0], [0], [1], [0, 0, 1, 1], [], []>} : vector<16x8xf32>, vector<8x32xf32>, vector<16x32xf32> -> vector<16x32xf32>
    %236 = arith.addf %217, %235 : vector<16x32xf32>
    %237 = vector.extract_strided_slice %194 {offsets = [0, 0, 16], sizes = [2, 8, 8], strides = [1, 1, 1]} : vector<2x8x32xf32> to vector<2x8x8xf32>
    %238 = vector.extract_strided_slice %196 {offsets = [0, 0, 16], sizes = [2, 8, 8], strides = [1, 1, 1]} : vector<2x8x32xf32> to vector<2x8x8xf32>
    %cst_81 = arith.constant dense<0.000000e+00> : vector<2x8x8xf32>
    %239 = tpu.matmul %237, %238, %cst_81 {dimension_numbers = #tpu.dot_dimension_numbers<[2], [2], [1], [1], [0, 0, 0, 1, 1, 1], [0], [0]>} : vector<2x8x8xf32>, vector<2x8x8xf32>, vector<2x8x8xf32> -> vector<2x8x8xf32>
    %240 = arith.addf %239, %6 : vector<2x8x8xf32>
    %cst_82 = arith.constant dense<0xFF800000> : vector<2x8xf32>
    %241 = vector.multi_reduction <maximumf>, %240, %cst_82 [2] : vector<2x8x8xf32> to vector<2x8xf32>
    %242 = vector.shape_cast %241 : vector<2x8xf32> to vector<2x8x1xf32>
    %243 = vector.broadcast %242 : vector<2x8x1xf32> to vector<2x8x8xf32>
    %244 = arith.subf %240, %243 : vector<2x8x8xf32>
    %245 = math.exp %244 : vector<2x8x8xf32>
    %cst_83 = arith.constant dense<0.000000e+00> : vector<2x8xf32>
    %246 = vector.multi_reduction <add>, %245, %cst_83 [2] : vector<2x8x8xf32> to vector<2x8xf32>
    %247 = vector.shape_cast %246 : vector<2x8xf32> to vector<2x8x1xf32>
    %248 = vector.broadcast %247 : vector<2x8x1xf32> to vector<2x8x8xf32>
    %249 = arith.divf %245, %248 : vector<2x8x8xf32>
    %250 = vector.extract_strided_slice %198 {offsets = [0, 0, 16], sizes = [2, 8, 8], strides = [1, 1, 1]} : vector<2x8x32xf32> to vector<2x8x8xf32>
    %cst_84 = arith.constant dense<0.000000e+00> : vector<2x8x8xf32>
    %251 = tpu.matmul %249, %250, %cst_84 {dimension_numbers = #tpu.dot_dimension_numbers<[2], [1], [1], [2], [0, 0, 0, 1, 1, 2], [0], [0]>} : vector<2x8x8xf32>, vector<2x8x8xf32>, vector<2x8x8xf32> -> vector<2x8x8xf32>
    %252 = vector.shape_cast %251 : vector<2x8x8xf32> to vector<16x8xf32>
    %253 = vector.extract_strided_slice %199 {offsets = [16, 0], sizes = [8, 32], strides = [1, 1]} : vector<32x32xf32> to vector<8x32xf32>
    %cst_85 = arith.constant dense<0.000000e+00> : vector<16x32xf32>
    %254 = tpu.matmul %252, %253, %cst_85 {dimension_numbers = #tpu.dot_dimension_numbers<[1], [0], [0], [1], [0, 0, 1, 1], [], []>} : vector<16x8xf32>, vector<8x32xf32>, vector<16x32xf32> -> vector<16x32xf32>
    %255 = arith.addf %236, %254 : vector<16x32xf32>
    %256 = vector.extract_strided_slice %194 {offsets = [0, 0, 24], sizes = [2, 8, 8], strides = [1, 1, 1]} : vector<2x8x32xf32> to vector<2x8x8xf32>
    %257 = vector.extract_strided_slice %196 {offsets = [0, 0, 24], sizes = [2, 8, 8], strides = [1, 1, 1]} : vector<2x8x32xf32> to vector<2x8x8xf32>
    %cst_86 = arith.constant dense<0.000000e+00> : vector<2x8x8xf32>
    %258 = tpu.matmul %256, %257, %cst_86 {dimension_numbers = #tpu.dot_dimension_numbers<[2], [2], [1], [1], [0, 0, 0, 1, 1, 1], [0], [0]>} : vector<2x8x8xf32>, vector<2x8x8xf32>, vector<2x8x8xf32> -> vector<2x8x8xf32>
    %259 = arith.addf %258, %6 : vector<2x8x8xf32>
    %cst_87 = arith.constant dense<0xFF800000> : vector<2x8xf32>
    %260 = vector.multi_reduction <maximumf>, %259, %cst_87 [2] : vector<2x8x8xf32> to vector<2x8xf32>
    %261 = vector.shape_cast %260 : vector<2x8xf32> to vector<2x8x1xf32>
    %262 = vector.broadcast %261 : vector<2x8x1xf32> to vector<2x8x8xf32>
    %263 = arith.subf %259, %262 : vector<2x8x8xf32>
    %264 = math.exp %263 : vector<2x8x8xf32>
    %cst_88 = arith.constant dense<0.000000e+00> : vector<2x8xf32>
    %265 = vector.multi_reduction <add>, %264, %cst_88 [2] : vector<2x8x8xf32> to vector<2x8xf32>
    %266 = vector.shape_cast %265 : vector<2x8xf32> to vector<2x8x1xf32>
    %267 = vector.broadcast %266 : vector<2x8x1xf32> to vector<2x8x8xf32>
    %268 = arith.divf %264, %267 : vector<2x8x8xf32>
    %269 = vector.extract_strided_slice %198 {offsets = [0, 0, 24], sizes = [2, 8, 8], strides = [1, 1, 1]} : vector<2x8x32xf32> to vector<2x8x8xf32>
    %cst_89 = arith.constant dense<0.000000e+00> : vector<2x8x8xf32>
    %270 = tpu.matmul %268, %269, %cst_89 {dimension_numbers = #tpu.dot_dimension_numbers<[2], [1], [1], [2], [0, 0, 0, 1, 1, 2], [0], [0]>} : vector<2x8x8xf32>, vector<2x8x8xf32>, vector<2x8x8xf32> -> vector<2x8x8xf32>
    %271 = vector.shape_cast %270 : vector<2x8x8xf32> to vector<16x8xf32>
    %272 = vector.extract_strided_slice %199 {offsets = [24, 0], sizes = [8, 32], strides = [1, 1]} : vector<32x32xf32> to vector<8x32xf32>
    %cst_90 = arith.constant dense<0.000000e+00> : vector<16x32xf32>
    %273 = tpu.matmul %271, %272, %cst_90 {dimension_numbers = #tpu.dot_dimension_numbers<[1], [0], [0], [1], [0, 0, 1, 1], [], []>} : vector<16x8xf32>, vector<8x32xf32>, vector<16x32xf32> -> vector<16x32xf32>
    %274 = arith.addf %255, %273 : vector<16x32xf32>
    %275 = arith.addf %158, %274 : vector<16x32xf32>
    %276 = vector.broadcast %160 : vector<1x32xf32> to vector<16x32xf32>
    %277 = arith.addf %275, %276 : vector<16x32xf32>
    %cst_91 = arith.constant dense<0.000000e+00> : vector<16xf32>
    %278 = vector.multi_reduction <add>, %277, %cst_91 [1] : vector<16x32xf32> to vector<16xf32>
    %279 = vector.shape_cast %278 : vector<16xf32> to vector<16x1xf32>
    %cst_92 = arith.constant 3.200000e+01 : f32
    %280 = vector.broadcast %cst_92 : f32 to vector<16x1xf32>
    %281 = arith.divf %279, %280 : vector<16x1xf32>
    %282 = vector.broadcast %281 : vector<16x1xf32> to vector<16x32xf32>
    %283 = arith.subf %277, %282 : vector<16x32xf32>
    %284 = arith.mulf %283, %283 : vector<16x32xf32>
    %cst_93 = arith.constant dense<0.000000e+00> : vector<16xf32>
    %285 = vector.multi_reduction <add>, %284, %cst_93 [1] : vector<16x32xf32> to vector<16xf32>
    %286 = vector.shape_cast %285 : vector<16xf32> to vector<16x1xf32>
    %cst_94 = arith.constant 3.100000e+01 : f32
    %287 = vector.broadcast %cst_94 : f32 to vector<16x1xf32>
    %288 = arith.divf %286, %287 : vector<16x1xf32>
    %289 = vector.broadcast %165 : vector<1x32xf32> to vector<16x32xf32>
    %290 = arith.mulf %289, %283 : vector<16x32xf32>
    %291 = math.sqrt %288 : vector<16x1xf32>
    %cst_95 = arith.constant 9.99999997E-7 : f32
    %292 = vector.broadcast %cst_95 : f32 to vector<16x1xf32>
    %293 = arith.addf %291, %292 : vector<16x1xf32>
    %294 = vector.broadcast %293 : vector<16x1xf32> to vector<16x32xf32>
    %295 = arith.divf %290, %294 : vector<16x32xf32>
    %296 = vector.broadcast %166 : vector<1x32xf32> to vector<16x32xf32>
    %297 = arith.addf %295, %296 : vector<16x32xf32>
    %c216 = arith.constant 216 : index
    %c0_96 = arith.constant 0 : index
    %298 = vector.load %arg2[%c216, %c0_96] : memref<352x128xf32, #tpu.memory_space<vmem>>, vector<32x48xf32>
    %cst_97 = arith.constant dense<0.000000e+00> : vector<16x48xf32>
    %299 = tpu.matmul %297, %298, %cst_97 {dimension_numbers = #tpu.dot_dimension_numbers<[1], [0], [0], [1], [0, 0, 1, 1], [], []>} : vector<16x32xf32>, vector<32x48xf32>, vector<16x48xf32> -> vector<16x48xf32>
    %300 = vector.broadcast %161 : vector<1x48xf32> to vector<16x48xf32>
    %301 = arith.addf %299, %300 : vector<16x48xf32>
    %cst_98 = arith.constant 0.000000e+00 : f32
    %302 = vector.broadcast %cst_98 : f32 to vector<16x48xf32>
    %303 = arith.maximumf %301, %302 : vector<16x48xf32>
    %c248 = arith.constant 248 : index
    %c0_99 = arith.constant 0 : index
    %304 = vector.load %arg2[%c248, %c0_99] : memref<352x128xf32, #tpu.memory_space<vmem>>, vector<48x32xf32>
    %cst_100 = arith.constant dense<0.000000e+00> : vector<16x32xf32>
    %305 = tpu.matmul %303, %304, %cst_100 {dimension_numbers = #tpu.dot_dimension_numbers<[1], [0], [0], [1], [0, 0, 1, 1], [], []>} : vector<16x48xf32>, vector<48x32xf32>, vector<16x32xf32> -> vector<16x32xf32>
    %306 = arith.addf %277, %305 : vector<16x32xf32>
    %307 = vector.broadcast %162 : vector<1x32xf32> to vector<16x32xf32>
    %308 = arith.addf %306, %307 : vector<16x32xf32>
    %c344 = arith.constant 344 : index
    %c0_101 = arith.constant 0 : index
    %309 = vector.load %arg2[%c344, %c0_101] : memref<352x128xf32, #tpu.memory_space<vmem>>, vector<1x32xf32>
    %c345 = arith.constant 345 : index
    %c0_102 = arith.constant 0 : index
    %310 = vector.load %arg2[%c345, %c0_102] : memref<352x128xf32, #tpu.memory_space<vmem>>, vector<1x32xf32>
    %cst_103 = arith.constant dense<0.000000e+00> : vector<16xf32>
    %311 = vector.multi_reduction <add>, %308, %cst_103 [1] : vector<16x32xf32> to vector<16xf32>
    %312 = vector.shape_cast %311 : vector<16xf32> to vector<16x1xf32>
    %cst_104 = arith.constant 3.200000e+01 : f32
    %313 = vector.broadcast %cst_104 : f32 to vector<16x1xf32>
    %314 = arith.divf %312, %313 : vector<16x1xf32>
    %315 = vector.broadcast %314 : vector<16x1xf32> to vector<16x32xf32>
    %316 = arith.subf %308, %315 : vector<16x32xf32>
    %317 = arith.mulf %316, %316 : vector<16x32xf32>
    %cst_105 = arith.constant dense<0.000000e+00> : vector<16xf32>
    %318 = vector.multi_reduction <add>, %317, %cst_105 [1] : vector<16x32xf32> to vector<16xf32>
    %319 = vector.shape_cast %318 : vector<16xf32> to vector<16x1xf32>
    %cst_106 = arith.constant 3.100000e+01 : f32
    %320 = vector.broadcast %cst_106 : f32 to vector<16x1xf32>
    %321 = arith.divf %319, %320 : vector<16x1xf32>
    %322 = vector.broadcast %309 : vector<1x32xf32> to vector<16x32xf32>
    %323 = arith.mulf %322, %316 : vector<16x32xf32>
    %324 = math.sqrt %321 : vector<16x1xf32>
    %cst_107 = arith.constant 9.99999997E-7 : f32
    %325 = vector.broadcast %cst_107 : f32 to vector<16x1xf32>
    %326 = arith.addf %324, %325 : vector<16x1xf32>
    %327 = vector.broadcast %326 : vector<16x1xf32> to vector<16x32xf32>
    %328 = arith.divf %323, %327 : vector<16x32xf32>
    %329 = vector.broadcast %310 : vector<1x32xf32> to vector<16x32xf32>
    %330 = arith.addf %328, %329 : vector<16x32xf32>
    %c304 = arith.constant 304 : index
    %c0_108 = arith.constant 0 : index
    %331 = vector.load %arg2[%c304, %c0_108] : memref<352x128xf32, #tpu.memory_space<vmem>>, vector<32x16xf32>
    %cst_109 = arith.constant dense<0.000000e+00> : vector<16x16xf32>
    %332 = tpu.matmul %330, %331, %cst_109 {dimension_numbers = #tpu.dot_dimension_numbers<[1], [0], [0], [1], [0, 0, 1, 1], [], []>} : vector<16x32xf32>, vector<32x16xf32>, vector<16x16xf32> -> vector<16x16xf32>
    %333 = math.tanh %332 : vector<16x16xf32>
    %334 = vector.shape_cast %333 : vector<16x16xf32> to vector<2x8x16xf32>
    %c336 = arith.constant 336 : index
    %c0_110 = arith.constant 0 : index
    %335 = vector.load %arg2[%c336, %c0_110] : memref<352x128xf32, #tpu.memory_space<vmem>>, vector<2x16xf32>
    %336 = vector.shape_cast %335 : vector<2x16xf32> to vector<1x2x16xf32>
    %337 = vector.broadcast %336 : vector<1x2x16xf32> to vector<2x2x16xf32>
    %cst_111 = arith.constant dense<0.000000e+00> : vector<2x2x8xf32>
    %338 = tpu.matmul %337, %334, %cst_111 {dimension_numbers = #tpu.dot_dimension_numbers<[2], [2], [1], [1], [0, 0, 0, 1, 1, 1], [0], [0]>} : vector<2x2x16xf32>, vector<2x8x16xf32>, vector<2x2x8xf32> -> vector<2x2x8xf32>
    %339 = vector.broadcast %8 : vector<2x1x8xf32> to vector<2x2x8xf32>
    %340 = arith.addf %338, %339 : vector<2x2x8xf32>
    %cst_112 = arith.constant dense<0xFF800000> : vector<2x2xf32>
    %341 = vector.multi_reduction <maximumf>, %340, %cst_112 [2] : vector<2x2x8xf32> to vector<2x2xf32>
    %342 = vector.shape_cast %341 : vector<2x2xf32> to vector<2x2x1xf32>
    %343 = vector.broadcast %342 : vector<2x2x1xf32> to vector<2x2x8xf32>
    %344 = arith.subf %340, %343 : vector<2x2x8xf32>
    %345 = math.exp %344 : vector<2x2x8xf32>
    %cst_113 = arith.constant dense<0.000000e+00> : vector<2x2xf32>
    %346 = vector.multi_reduction <add>, %345, %cst_113 [2] : vector<2x2x8xf32> to vector<2x2xf32>
    %347 = vector.shape_cast %346 : vector<2x2xf32> to vector<2x2x1xf32>
    %348 = vector.broadcast %347 : vector<2x2x1xf32> to vector<2x2x8xf32>
    %349 = arith.divf %345, %348 : vector<2x2x8xf32>
    %350 = vector.shape_cast %330 : vector<16x32xf32> to vector<2x8x32xf32>
    %cst_114 = arith.constant dense<0.000000e+00> : vector<2x2x32xf32>
    %351 = tpu.matmul %349, %350, %cst_114 {dimension_numbers = #tpu.dot_dimension_numbers<[2], [1], [1], [2], [0, 0, 0, 1, 1, 2], [0], [0]>} : vector<2x2x8xf32>, vector<2x8x32xf32>, vector<2x2x32xf32> -> vector<2x2x32xf32>
    %c0_115 = arith.constant 0 : index
    %c0_116 = arith.constant 0 : index
    %c0_117 = arith.constant 0 : index
    %352 = vector.load %arg3[%c0_115, %c0_116, %c0_117] : memref<2x2x32xf32, #tpu.memory_space<vmem>>, vector<2x2x32xf32>
    tpu.vector_store %arg3[%c0_115, %c0_116, %c0_117], %351 {strides = array<i32>} : memref<2x2x32xf32, #tpu.memory_space<vmem>>, vector<2x2x32xf32>,
    %c0_118 = arith.constant 0 : index
    %c0_119 = arith.constant 0 : index
    %c0_120 = arith.constant 0 : index
    %353 = vector.load %arg4[%c0_118, %c0_119, %c0_120] : memref<2x2x8xf32, #tpu.memory_space<vmem>>, vector<2x2x8xf32>
    tpu.vector_store %arg4[%c0_118, %c0_119, %c0_120], %349 {strides = array<i32>} : memref<2x2x8xf32, #tpu.memory_space<vmem>>, vector<2x2x8xf32>,
    return
  }
}

</mosaic_0001>

<llo_original>
// kernel: tpu_custom_call.1
$region0: #{tpu_custom_call.1}
  #allocation0 [shape = 'u32[]', space=smem, size = 0x4, offset = 0x4, fixed_abs, tag = 'smem constant byte address 0x4 - core index']
  #allocation1 [shape = 'u32[72,128]{1,0:T(1,128)}', space=vmem, size = 0x9000, scoped, tag = 'internal scratch']
  %s0 = inlined_call_operand.hbm [shape: f32[2,8,32], index: 0, kind: input, shape index: {}]
  %s1 = inlined_call_operand.hbm [shape: f32[2,1,8], index: 1, kind: input, shape index: {}]
  %s2 = inlined_call_operand.hbm [shape: f32[352,128], index: 2, kind: input, shape index: {}]
  %s3 = inlined_call_operand.hbm [shape: f32[2,2,32], index: 3, kind: output, shape index: {0}]
  %s4 = inlined_call_operand.hbm [shape: f32[2,2,8], index: 4, kind: output, shape index: {1}]
  %5 = xla_tuple %s3, %s4
  %s6 = sld [smem:[#allocation0]]
  $region42: #{tpu_custom_call.1} parent=0
    _
  %s8 = ssub.s32 1, %s6
  %s9 = scalar_select 0, %s8, %s6
  $region1: #{tpu_custom_call.1} parent=0
    #allocation2 [shape = 'u8[8192]{0}', space=vmem, size = 0x2000, scoped, tag = 'input window, operand 0, single buffered']
    #allocation3 [shape = 's32[1]{0}', space=sflag, size = 0x4, scoped, tag = 'scoped memory for tpu_custom_call.1']
    #allocation4 [shape = 's32[1]{0}', space=sflag, size = 0x4, scoped, tag = 'scoped memory for tpu_custom_call.1']
    #allocation5 [shape = 'u8[1024]{0}', space=vmem, size = 0x400, scoped, tag = 'input window, operand 1, single buffered']
    #allocation6 [shape = 's32[1]{0}', space=sflag, size = 0x4, scoped, tag = 'scoped memory for tpu_custom_call.1']
    #allocation7 [shape = 'u8[180224]{0}', space=vmem, size = 0x2c000, scoped, tag = 'input window, operand 2, single buffered']
    #allocation8 [shape = 'u8[2048]{0}', space=vmem, size = 0x800, scoped, tag = 'output window, operand 0, single buffered']
    #allocation9 [shape = 'u8[2048]{0}', space=vmem, size = 0x800, scoped, tag = 'output window, operand 1, single buffered']
    #allocation10 [shape = 's32[1]{0}', space=sflag, size = 0x4, scoped, tag = 'scoped memory for tpu_custom_call.1']
    %10 = vsyncpa [#allocation3], 0
    %11 = vsyncpa [#allocation6], 0
    %12 = vsyncpa [#allocation4], 0
    %13 = vsyncpa [#allocation10], 0
    // Predicated region
    $region2: #{tpu_custom_call.1} parent=1 // pred_check
      _
    $region3: #{tpu_custom_call.1} parent=1 // pred_check_branch
      %15 = sbr.rel (0) target = $region5
    $region4: #{tpu_custom_call.1} parent=1 // pred_region
      %17 = vsyncadd [#allocation3], 0
      %s18 = sshll.u32 %s0, 4
      %s19 = int_to_ptr.hbm [resolvable:$true] %s18
      %s20 = sshll.u32 [#allocation2], 4
      %s21 = int_to_ptr.vmem [resolvable:$true] %s20
      %26 = dma.hbm_to_vmem [thread:$0]  %s19, 256, %s21, [#allocation3], 128, 128, 8
    $region5: #{tpu_custom_call.1} parent=1 // pred_fallthru
      _
    // Predicated region
    $region6: #{tpu_custom_call.1} parent=1 // pred_check
      _
    $region7: #{tpu_custom_call.1} parent=1 // pred_check_branch
      %28 = sbr.rel (0) target = $region9
    $region8: #{tpu_custom_call.1} parent=1 // pred_region
      %30 = vsyncadd [#allocation6], 0
      %s31 = sshll.u32 %s1, 4
      %s32 = int_to_ptr.hbm [resolvable:$true] %s31
      %s33 = sshll.u32 [#allocation5], 4
      %s34 = int_to_ptr.vmem [resolvable:$true] %s33
      %39 = dma.hbm_to_vmem [thread:$0]  %s32, 32, %s34, [#allocation6], 16, 16, 1
    $region9: #{tpu_custom_call.1} parent=1 // pred_fallthru
      _
    // Predicated region
    $region10: #{tpu_custom_call.1} parent=1 // pred_check
      _
    $region11: #{tpu_custom_call.1} parent=1 // pred_check_branch
      %41 = sbr.rel (0) target = $region13
    $region12: #{tpu_custom_call.1} parent=1 // pred_region
      %43 = vsyncadd [#allocation6], 0
      %s44 = sshll.u32 %s2, 4
      %s45 = int_to_ptr.hbm [resolvable:$true] %s44
      %s46 = sshll.u32 [#allocation7], 4
      %s47 = int_to_ptr.vmem [resolvable:$true] %s46
      %52 = dma.hbm_to_vmem [thread:$0]  %s45, 5632, %s47, [#allocation6], 128, 128, 8
    $region13: #{tpu_custom_call.1} parent=1 // pred_fallthru
      _
    // Predicated region
    $region14: #{tpu_custom_call.1} parent=1 // pred_check
      _
    $region15: #{tpu_custom_call.1} parent=1 // pred_check_branch
      %54 = sbr.rel (0) target = $region17
    $region16: #{tpu_custom_call.1} parent=1 // pred_region
      %56 = dma.done [#allocation3], 256
    $region17: #{tpu_custom_call.1} parent=1 // pred_fallthru
      _
    // Predicated region
    $region18: #{tpu_custom_call.1} parent=1 // pred_check
      _
    $region19: #{tpu_custom_call.1} parent=1 // pred_check_branch
      %58 = sbr.rel (0) target = $region21
    $region20: #{tpu_custom_call.1} parent=1 // pred_region
      %60 = dma.done [#allocation6], 32
    $region21: #{tpu_custom_call.1} parent=1 // pred_fallthru
      _
    // Predicated region
    $region22: #{tpu_custom_call.1} parent=1 // pred_check
      _
    $region23: #{tpu_custom_call.1} parent=1 // pred_check_branch
      %62 = sbr.rel (0) target = $region25
    $region24: #{tpu_custom_call.1} parent=1 // pred_region
      %64 = dma.done [#allocation6], 5632
    $region25: #{tpu_custom_call.1} parent=1 // pred_fallthru
      _
    %v65 = vld [vmem:[#allocation2] sm:$0xff]
    %v66 = vld [vmem:[#allocation2 + $0x8] sm:$0xff]
    %v67 = vld [vmem:[#allocation5] sm:$0x1]
    %v68 = vld [vmem:[#allocation5 + $0x1] sm:$0x1]
    %v69 = vmul.f32 %v67, -1e+09
    %v70 = vmul.f32 %v68, -1e+09
    %v73 = vperm.slane %v69, 0
    %v74 = vperm.slane %v70, 0
    %v77 = vmul.f32 %v67, -10000.0
    %v78 = vmul.f32 %v68, -10000.0
    %v79 = vld [vmem:[#allocation7 + $0x90] sm:$0x1]
    %v80 = vld [vmem:[#allocation7 + $0x91] sm:$0x1]
    %v81 = vld [vmem:[#allocation7 + $0x92] sm:$0x1]
    %v82 = vld [vmem:[#allocation7 + $0x93] sm:$0x1]
    %v83 = vld [vmem:[#allocation7 + $0x94] sm:$0x1]
    %v84 = vld [vmem:[#allocation7 + $0x95] sm:$0x1]
    %v85 = vld [vmem:[#allocation7 + $0x96] sm:$0x1]
    %v86 = vld [vmem:[#allocation7 + $0x97] sm:$0x1]
    %vm87 = vcmask 261120
    %v88 = vsel %vm87, %v65, 0.0
    %89 = vadd.xlane.f32.xlu0 %v88
    %v90 = vpop.xlane.xlu0 %89
    %v91 = vsel %vm87, %v66, 0.0
    %92 = vadd.xlane.f32.xlu0 %v91
    %v93 = vpop.xlane.xlu0 %92
    %v94 = vrcp.pop 32.0
    %v95 = vmul.f32 32.0, %v94
    %v96 = vsub.f32 1.0, %v95
    %v97 = vmul.f32 %v94, %v96
    %v98 = vadd.f32 %v94, %v97
    %vm99 = vweird.f32 %v94
    %v100 = vsel %vm99, %v94, %v98
    %v101 = vmul.f32 %v90, %v100
    %v102 = vmul.f32 %v93, %v100
    %v103 = vsub.f32 %v65, %v101
    %v104 = vsub.f32 %v66, %v102
    %v105 = vmul.f32 %v103, %v103
    %v106 = vmul.f32 %v104, %v104
    %v107 = vsel %vm87, %v105, 0.0
    %108 = vadd.xlane.f32.xlu0 %v107
    %v109 = vpop.xlane.xlu0 %108
    %v110 = vsel %vm87, %v106, 0.0
    %111 = vadd.xlane.f32.xlu0 %v110
    %v112 = vpop.xlane.xlu0 %111
    %v113 = vrcp.pop 31.0
    %v114 = vmul.f32 31.0, %v113
    %v115 = vsub.f32 1.0, %v114
    %v116 = vmul.f32 %v113, %v115
    %v117 = vadd.f32 %v113, %v116
    %vm118 = vweird.f32 %v113
    %v119 = vsel %vm118, %v113, %v117
    %v120 = vmul.f32 %v109, %v119
    %v121 = vmul.f32 %v112, %v119
    %v122 = vperm.slane %v83, 0
    %v123 = vmul.f32 %v122, %v103
    %v124 = vmul.f32 %v122, %v104
    %v125 = vrsqrt.pop %v120
    %v126 = vmul.f32 %v125, %v120
    %v127 = vmul.f32 %v126, %v125
    %v128 = vmul.f32 0.5, %v127
    %v129 = vsub.f32 1.5, %v128
    %v130 = vmul.f32 %v125, %v129
    %v131 = vmul.f32 %v120, %v130
    %vm132 = vcmp.eq.f32.partialorder %v120, inf
    %v133 = vsel %vm132, %v120, %v131
    %vm134 = vcmp.eq.f32.partialorder %v120, 0.0
    %v135 = vand.u32 %v120, 2147483648
    %v136 = vsel %vm134, %v135, %v133
    %v137 = vrsqrt.pop %v121
    %v138 = vmul.f32 %v137, %v121
    %v139 = vmul.f32 %v138, %v137
    %v140 = vmul.f32 0.5, %v139
    %v141 = vsub.f32 1.5, %v140
    %v142 = vmul.f32 %v137, %v141
    %v143 = vmul.f32 %v121, %v142
    %vm144 = vcmp.eq.f32.partialorder %v121, inf
    %v145 = vsel %vm144, %v121, %v143
    %vm146 = vcmp.eq.f32.partialorder %v121, 0.0
    %v147 = vand.u32 %v121, 2147483648
    %v148 = vsel %vm146, %v147, %v145
    %v149 = vadd.f32 %v136, 1e-06
    %v150 = vadd.f32 %v148, 1e-06
    %v151 = vrcp.pop %v149
    %v152 = vmul.f32 %v149, %v151
    %v153 = vsub.f32 1.0, %v152
    %v154 = vmul.f32 %v151, %v153
    %v155 = vadd.f32 %v151, %v154
    %vm156 = vweird.f32 %v149
    %vm157 = vweird.f32 %v151
    %vm158 = vmor %vm156, %vm157
    %v159 = vsel %vm158, %v151, %v155
    %v160 = vand.u32 2147483647, %v149
    %vm161 = vcmp.eq.f32.partialorder %v160, 8.507059e+37
    %v162 = vand.u32 %v149, 2147483648
    %v163 = vor.u32 1.1754944e-38, %v162
    %v164 = vsel %vm161, %v163, %v159
    %v165 = vmul.f32 %v123, %v164
    %v166 = vrcp.pop %v150
    %v167 = vmul.f32 %v150, %v166
    %v168 = vsub.f32 1.0, %v167
    %v169 = vmul.f32 %v166, %v168
    %v170 = vadd.f32 %v166, %v169
    %vm171 = vweird.f32 %v150
    %vm172 = vweird.f32 %v166
    %vm173 = vmor %vm171, %vm172
    %v174 = vsel %vm173, %v166, %v170
    %v175 = vand.u32 2147483647, %v150
    %vm176 = vcmp.eq.f32.partialorder %v175, 8.507059e+37
    %v177 = vand.u32 %v150, 2147483648
    %v178 = vor.u32 1.1754944e-38, %v177
    %v179 = vsel %vm176, %v178, %v174
    %v180 = vmul.f32 %v124, %v179
    %v181 = vperm.slane %v84, 0
    %v182 = vadd.f32 %v165, %v181
    %v183 = vadd.f32 %v180, %v181
    %v184 = vld [vmem:[#allocation7] sm:$0xff]
    %v185 = vld [vmem:[#allocation7 + $0x8] sm:$0xff]
    %v186 = vld [vmem:[#allocation7 + $0x10] sm:$0xff]
    %v187 = vld [vmem:[#allocation7 + $0x18] sm:$0xff]
    %v188 = vperm.slane %v79, 0
    %v190 = vsel %vm87, %v182, 0
    %v193 = vsel %vm87, %v183, 0
    %195 = vmatpush.msra.mxu0 0.0
    %196 = vmatpush.msra.mxu0 0.0
    %197 = vmatpush.msra.mxu0 0.0
    %198 = vmatpush.msra.mxu0 0.0
    %199 = vmatpush.msra.mxu0 0.0
    %200 = vmatpush.msra.mxu0 0.0
    %201 = vmatpush.msra.mxu0 0.0
    %202 = vmatpush.msra.mxu0 0.0
    %203 = vmatpush.msra.mxu0 0.0
    %204 = vmatpush.msra.mxu0 0.0
    %205 = vmatpush.msra.mxu0 0.0
    %206 = vmatpush.msra.mxu0 0.0
    %207 = vmatpush.msra.mxu0 %v187
    %208 = vmatpush.msra.mxu0 %v186
    %209 = vmatpush.msra.mxu0 %v185
    %210 = vmatpush.msra.mxu0 %v184
    %211 = vmatmul.f32.gmra.mxu0 %v190
    %v212 = vpop.f32.mrf.mxu0
    %v213 = vadd.f32 %v188, %v212
    %214 = vmatmul.f32.gmra.mxu0 %v193
    %v215 = vpop.f32.mrf.mxu0
    %v216 = vadd.f32 %v188, %v215
    %217 = vdwg.mxu0
    %v218 = vmul.f32 %v213, 0.35355338
    %v219 = vmul.f32 %v216, 0.35355338
    %v220 = vld [vmem:[#allocation7 + $0x20] sm:$0xff]
    %v221 = vld [vmem:[#allocation7 + $0x28] sm:$0xff]
    %v222 = vld [vmem:[#allocation7 + $0x30] sm:$0xff]
    %v223 = vld [vmem:[#allocation7 + $0x38] sm:$0xff]
    %225 = vrot.lane.b32.xlu0 %v213, 96
    %v226 = vpop.permute.xlu0 %225
    %vm227 = vcmask 64512
    %v229 = vsel %vm227, %v218, 0
    %v231 = vsel %vm227, %v226, 0
    %233 = vmatpush.xpose.msra.mxu0 0.0
    %234 = vmatpush.xpose.msra.mxu0 0.0
    %235 = vmatpush.xpose.msra.mxu0 0.0
    %236 = vmatpush.xpose.msra.mxu0 0.0
    %237 = vmatpush.xpose.msra.mxu0 0.0
    %238 = vmatpush.xpose.msra.mxu0 0.0
    %239 = vmatpush.xpose.msra.mxu0 0.0
    %240 = vmatpush.xpose.msra.mxu0 0.0
    %241 = vmatpush.xpose.msra.mxu0 0.0
    %242 = vmatpush.xpose.msra.mxu0 0.0
    %243 = vmatpush.xpose.msra.mxu0 0.0
    %244 = vmatpush.xpose.msra.mxu0 0.0
    %245 = vmatpush.xpose.msra.mxu0 0.0
    %246 = vmatpush.xpose.msra.mxu0 0.0
    %247 = vmatpush.xpose.msra.mxu0 0.0
    %248 = vmatpush.xpose.msra.mxu0 %v231
    %249 = vmatmul.f32.gmra.mxu0 %v229
    %v250 = vpop.f32.mrf.mxu0
    %v251 = vadd.f32 %v73, %v250
    %252 = vdwg.mxu0
    %254 = vrot.lane.b32.xlu0 %v216, 96
    %v255 = vpop.permute.xlu0 %254
    %v257 = vsel %vm227, %v219, 0
    %v259 = vsel %vm227, %v255, 0
    %261 = vmatpush.xpose.msra.mxu0 0.0
    %262 = vmatpush.xpose.msra.mxu0 0.0
    %263 = vmatpush.xpose.msra.mxu0 0.0
    %264 = vmatpush.xpose.msra.mxu0 0.0
    %265 = vmatpush.xpose.msra.mxu0 0.0
    %266 = vmatpush.xpose.msra.mxu0 0.0
    %267 = vmatpush.xpose.msra.mxu0 0.0
    %268 = vmatpush.xpose.msra.mxu0 0.0
    %269 = vmatpush.xpose.msra.mxu0 0.0
    %270 = vmatpush.xpose.msra.mxu0 0.0
    %271 = vmatpush.xpose.msra.mxu0 0.0
    %272 = vmatpush.xpose.msra.mxu0 0.0
    %273 = vmatpush.xpose.msra.mxu0 0.0
    %274 = vmatpush.xpose.msra.mxu0 0.0
    %275 = vmatpush.xpose.msra.mxu0 0.0
    %276 = vmatpush.xpose.msra.mxu0 %v259
    %277 = vmatmul.f32.gmra.mxu0 %v257
    %v278 = vpop.f32.mrf.mxu0
    %v279 = vadd.f32 %v74, %v278
    %280 = vdwg.mxu0
    %v281 = vsel %vm227, %v251, -inf
    %282 = vmax.xlane.f32.xlu0 %v281
    %v283 = vpop.xlane.xlu0 %282
    %v284 = vsel %vm227, %v279, -inf
    %285 = vmax.xlane.f32.xlu0 %v284
    %v286 = vpop.xlane.xlu0 %285
    %v287 = vsub.f32 %v251, %v283
    %v288 = vsub.f32 %v279, %v286
    %v289 = vmul.f32 %v287, 1.442695
    %v290 = vpow.pop %v289
    %v291 = vmul.f32 %v288, 1.442695
    %v292 = vpow.pop %v291
    %v293 = vsel %vm227, %v290, 0.0
    %294 = vadd.xlane.f32.xlu0 %v293
    %v295 = vpop.xlane.xlu0 %294
    %v296 = vsel %vm227, %v292, 0.0
    %297 = vadd.xlane.f32.xlu0 %v296
    %v298 = vpop.xlane.xlu0 %297
    %v299 = vrcp.pop %v295
    %v300 = vmul.f32 %v295, %v299
    %v301 = vsub.f32 1.0, %v300
    %v302 = vmul.f32 %v299, %v301
    %v303 = vadd.f32 %v299, %v302
    %vm304 = vweird.f32 %v295
    %vm305 = vweird.f32 %v299
    %vm306 = vmor %vm304, %vm305
    %v307 = vsel %vm306, %v299, %v303
    %v308 = vand.u32 2147483647, %v295
    %vm309 = vcmp.eq.f32.partialorder %v308, 8.507059e+37
    %v310 = vand.u32 %v295, 2147483648
    %v311 = vor.u32 1.1754944e-38, %v310
    %v312 = vsel %vm309, %v311, %v307
    %v313 = vmul.f32 %v290, %v312
    %v314 = vrcp.pop %v298
    %v315 = vmul.f32 %v298, %v314
    %v316 = vsub.f32 1.0, %v315
    %v317 = vmul.f32 %v314, %v316
    %v318 = vadd.f32 %v314, %v317
    %vm319 = vweird.f32 %v298
    %vm320 = vweird.f32 %v314
    %vm321 = vmor %vm319, %vm320
    %v322 = vsel %vm321, %v314, %v318
    %v323 = vand.u32 2147483647, %v298
    %vm324 = vcmp.eq.f32.partialorder %v323, 8.507059e+37
    %v325 = vand.u32 %v298, 2147483648
    %v326 = vor.u32 1.1754944e-38, %v325
    %v327 = vsel %vm324, %v326, %v322
    %v328 = vmul.f32 %v292, %v327
    %329 = vrot.lane.b32.xlu0 %v213, 64
    %v330 = vpop.permute.xlu0 %329
    %v333 = vsel %vm227, %v313, 0
    %335 = vmatpush.msra.mxu0 0.0
    %336 = vmatpush.msra.mxu0 0.0
    %337 = vmatpush.msra.mxu0 0.0
    %338 = vmatpush.msra.mxu0 0.0
    %339 = vmatpush.msra.mxu0 0.0
    %340 = vmatpush.msra.mxu0 0.0
    %341 = vmatpush.msra.mxu0 0.0
    %342 = vmatpush.msra.mxu0 0.0
    %343 = vmatpush.msra.mxu0 0.0
    %344 = vmatpush.msra.mxu0 0.0
    %345 = vmatpush.msra.mxu0 0.0
    %346 = vmatpush.msra.mxu0 0.0
    %347 = vmatpush.msra.mxu0 0.0
    %348 = vmatpush.msra.mxu0 0.0
    %349 = vmatpush.msra.mxu0 0.0
    %350 = vmatpush.msra.mxu0 %v330
    %351 = vmatmul.f32.gmra.mxu0 %v333
    %v352 = vpop.f32.mrf.mxu0
    %v353 = vadd.f32 0.0, %v352
    %354 = vdwg.mxu0
    %355 = vrot.lane.b32.xlu0 %v216, 64
    %v356 = vpop.permute.xlu0 %355
    %v359 = vsel %vm227, %v328, 0
    %361 = vmatpush.msra.mxu0 0.0
    %362 = vmatpush.msra.mxu0 0.0
    %363 = vmatpush.msra.mxu0 0.0
    %364 = vmatpush.msra.mxu0 0.0
    %365 = vmatpush.msra.mxu0 0.0
    %366 = vmatpush.msra.mxu0 0.0
    %367 = vmatpush.msra.mxu0 0.0
    %368 = vmatpush.msra.mxu0 0.0
    %369 = vmatpush.msra.mxu0 0.0
    %370 = vmatpush.msra.mxu0 0.0
    %371 = vmatpush.msra.mxu0 0.0
    %372 = vmatpush.msra.mxu0 0.0
    %373 = vmatpush.msra.mxu0 0.0
    %374 = vmatpush.msra.mxu0 0.0
    %375 = vmatpush.msra.mxu0 0.0
    %376 = vmatpush.msra.mxu0 %v356
    %377 = vmatmul.f32.gmra.mxu0 %v359
    %v378 = vpop.f32.mrf.mxu0
    %v379 = vadd.f32 0.0, %v378
    %380 = vdwg.mxu0
    %381 = vrot.lane.b32.xlu0 %v218, 120
    %v382 = vpop.permute.xlu0 %381
    %383 = vrot.lane.b32.xlu0 %v213, 88
    %v384 = vpop.permute.xlu0 %383
    %v385 = vsel %vm227, %v382, 0
    %v387 = vsel %vm227, %v384, 0
    %389 = vmatpush.xpose.msra.mxu0 0.0
    %390 = vmatpush.xpose.msra.mxu0 0.0
    %391 = vmatpush.xpose.msra.mxu0 0.0
    %392 = vmatpush.xpose.msra.mxu0 0.0
    %393 = vmatpush.xpose.msra.mxu0 0.0
    %394 = vmatpush.xpose.msra.mxu0 0.0
    %395 = vmatpush.xpose.msra.mxu0 0.0
    %396 = vmatpush.xpose.msra.mxu0 0.0
    %397 = vmatpush.xpose.msra.mxu0 0.0
    %398 = vmatpush.xpose.msra.mxu0 0.0
    %399 = vmatpush.xpose.msra.mxu0 0.0
    %400 = vmatpush.xpose.msra.mxu0 0.0
    %401 = vmatpush.xpose.msra.mxu0 0.0
    %402 = vmatpush.xpose.msra.mxu0 0.0
    %403 = vmatpush.xpose.msra.mxu0 0.0
    %404 = vmatpush.xpose.msra.mxu0 %v387
    %405 = vmatmul.f32.gmra.mxu0 %v385
    %v406 = vpop.f32.mrf.mxu0
    %v407 = vadd.f32 %v73, %v406
    %408 = vdwg.mxu0
    %409 = vrot.lane.b32.xlu0 %v219, 120
    %v410 = vpop.permute.xlu0 %409
    %411 = vrot.lane.b32.xlu0 %v216, 88
    %v412 = vpop.permute.xlu0 %411
    %v413 = vsel %vm227, %v410, 0
    %v415 = vsel %vm227, %v412, 0
    %417 = vmatpush.xpose.msra.mxu0 0.0
    %418 = vmatpush.xpose.msra.mxu0 0.0
    %419 = vmatpush.xpose.msra.mxu0 0.0
    %420 = vmatpush.xpose.msra.mxu0 0.0
    %421 = vmatpush.xpose.msra.mxu0 0.0
    %422 = vmatpush.xpose.msra.mxu0 0.0
    %423 = vmatpush.xpose.msra.mxu0 0.0
    %424 = vmatpush.xpose.msra.mxu0 0.0
    %425 = vmatpush.xpose.msra.mxu0 0.0
    %426 = vmatpush.xpose.msra.mxu0 0.0
    %427 = vmatpush.xpose.msra.mxu0 0.0
    %428 = vmatpush.xpose.msra.mxu0 0.0
    %429 = vmatpush.xpose.msra.mxu0 0.0
    %430 = vmatpush.xpose.msra.mxu0 0.0
    %431 = vmatpush.xpose.msra.mxu0 0.0
    %432 = vmatpush.xpose.msra.mxu0 %v415
    %433 = vmatmul.f32.gmra.mxu0 %v413
    %v434 = vpop.f32.mrf.mxu0
    %v435 = vadd.f32 %v74, %v434
    %436 = vdwg.mxu0
    %v437 = vsel %vm227, %v407, -inf
    %438 = vmax.xlane.f32.xlu0 %v437
    %v439 = vpop.xlane.xlu0 %438
    %v440 = vsel %vm227, %v435, -inf
    %441 = vmax.xlane.f32.xlu0 %v440
    %v442 = vpop.xlane.xlu0 %441
    %v443 = vsub.f32 %v407, %v439
    %v444 = vsub.f32 %v435, %v442
    %v445 = vmul.f32 %v443, 1.442695
    %v446 = vpow.pop %v445
    %v447 = vmul.f32 %v444, 1.442695
    %v448 = vpow.pop %v447
    %v449 = vsel %vm227, %v446, 0.0
    %450 = vadd.xlane.f32.xlu0 %v449
    %v451 = vpop.xlane.xlu0 %450
    %v452 = vsel %vm227, %v448, 0.0
    %453 = vadd.xlane.f32.xlu0 %v452
    %v454 = vpop.xlane.xlu0 %453
    %v455 = vrcp.pop %v451
    %v456 = vmul.f32 %v451, %v455
    %v457 = vsub.f32 1.0, %v456
    %v458 = vmul.f32 %v455, %v457
    %v459 = vadd.f32 %v455, %v458
    %vm460 = vweird.f32 %v451
    %vm461 = vweird.f32 %v455
    %vm462 = vmor %vm460, %vm461
    %v463 = vsel %vm462, %v455, %v459
    %v464 = vand.u32 2147483647, %v451
    %vm465 = vcmp.eq.f32.partialorder %v464, 8.507059e+37
    %v466 = vand.u32 %v451, 2147483648
    %v467 = vor.u32 1.1754944e-38, %v466
    %v468 = vsel %vm465, %v467, %v463
    %v469 = vmul.f32 %v446, %v468
    %v470 = vrcp.pop %v454
    %v471 = vmul.f32 %v454, %v470
    %v472 = vsub.f32 1.0, %v471
    %v473 = vmul.f32 %v470, %v472
    %v474 = vadd.f32 %v470, %v473
    %vm475 = vweird.f32 %v454
    %vm476 = vweird.f32 %v470
    %vm477 = vmor %vm475, %vm476
    %v478 = vsel %vm477, %v470, %v474
    %v479 = vand.u32 2147483647, %v454
    %vm480 = vcmp.eq.f32.partialorder %v479, 8.507059e+37
    %v481 = vand.u32 %v454, 2147483648
    %v482 = vor.u32 1.1754944e-38, %v481
    %v483 = vsel %vm480, %v482, %v478
    %v484 = vmul.f32 %v448, %v483
    %485 = vrot.lane.b32.xlu0 %v213, 56
    %v486 = vpop.permute.xlu0 %485
    %v489 = vsel %vm227, %v469, 0
    %491 = vmatpush.msra.mxu0 0.0
    %492 = vmatpush.msra.mxu0 0.0
    %493 = vmatpush.msra.mxu0 0.0
    %494 = vmatpush.msra.mxu0 0.0
    %495 = vmatpush.msra.mxu0 0.0
    %496 = vmatpush.msra.mxu0 0.0
    %497 = vmatpush.msra.mxu0 0.0
    %498 = vmatpush.msra.mxu0 0.0
    %499 = vmatpush.msra.mxu0 0.0
    %500 = vmatpush.msra.mxu0 0.0
    %501 = vmatpush.msra.mxu0 0.0
    %502 = vmatpush.msra.mxu0 0.0
    %503 = vmatpush.msra.mxu0 0.0
    %504 = vmatpush.msra.mxu0 0.0
    %505 = vmatpush.msra.mxu0 0.0
    %506 = vmatpush.msra.mxu0 %v486
    %507 = vmatmul.f32.gmra.mxu0 %v489
    %v508 = vpop.f32.mrf.mxu0
    %v509 = vadd.f32 0.0, %v508
    %510 = vdwg.mxu0
    %511 = vrot.lane.b32.xlu0 %v216, 56
    %v512 = vpop.permute.xlu0 %511
    %v515 = vsel %vm227, %v484, 0
    %517 = vmatpush.msra.mxu0 0.0
    %518 = vmatpush.msra.mxu0 0.0
    %519 = vmatpush.msra.mxu0 0.0
    %520 = vmatpush.msra.mxu0 0.0
    %521 = vmatpush.msra.mxu0 0.0
    %522 = vmatpush.msra.mxu0 0.0
    %523 = vmatpush.msra.mxu0 0.0
    %524 = vmatpush.msra.mxu0 0.0
    %525 = vmatpush.msra.mxu0 0.0
    %526 = vmatpush.msra.mxu0 0.0
    %527 = vmatpush.msra.mxu0 0.0
    %528 = vmatpush.msra.mxu0 0.0
    %529 = vmatpush.msra.mxu0 0.0
    %530 = vmatpush.msra.mxu0 0.0
    %531 = vmatpush.msra.mxu0 0.0
    %532 = vmatpush.msra.mxu0 %v512
    %533 = vmatmul.f32.gmra.mxu0 %v515
    %v534 = vpop.f32.mrf.mxu0
    %v535 = vadd.f32 0.0, %v534
    %536 = vdwg.mxu0
    %v538 = vsel %vm227, %v509, 0
    %v541 = vsel %vm227, %v535, 0
    %543 = vmatpush.msra.mxu0 0.0
    %544 = vmatpush.msra.mxu0 0.0
    %545 = vmatpush.msra.mxu0 0.0
    %546 = vmatpush.msra.mxu0 0.0
    %547 = vmatpush.msra.mxu0 0.0
    %548 = vmatpush.msra.mxu0 0.0
    %549 = vmatpush.msra.mxu0 0.0
    %550 = vmatpush.msra.mxu0 0.0
    %551 = vmatpush.msra.mxu0 0.0
    %552 = vmatpush.msra.mxu0 0.0
    %553 = vmatpush.msra.mxu0 0.0
    %554 = vmatpush.msra.mxu0 0.0
    %555 = vmatpush.msra.mxu0 0.0
    %556 = vmatpush.msra.mxu0 0.0
    %557 = vmatpush.msra.mxu0 0.0
    %558 = vmatpush.msra.mxu0 %v221
    %559 = vmatmul.f32.gmra.mxu0 %v538
    %v560 = vpop.f32.mrf.mxu0
    %v561 = vadd.f32 0.0, %v560
    %562 = vmatmul.f32.gmra.mxu0 %v541
    %v563 = vpop.f32.mrf.mxu0
    %v564 = vadd.f32 0.0, %v563
    %565 = vdwg.mxu0
    %v567 = vsel %vm227, %v353, 0
    %v570 = vsel %vm227, %v379, 0
    %572 = vmatpush.msra.mxu0 0.0
    %573 = vmatpush.msra.mxu0 0.0
    %574 = vmatpush.msra.mxu0 0.0
    %575 = vmatpush.msra.mxu0 0.0
    %576 = vmatpush.msra.mxu0 0.0
    %577 = vmatpush.msra.mxu0 0.0
    %578 = vmatpush.msra.mxu0 0.0
    %579 = vmatpush.msra.mxu0 0.0
    %580 = vmatpush.msra.mxu0 0.0
    %581 = vmatpush.msra.mxu0 0.0
    %582 = vmatpush.msra.mxu0 0.0
    %583 = vmatpush.msra.mxu0 0.0
    %584 = vmatpush.msra.mxu0 0.0
    %585 = vmatpush.msra.mxu0 0.0
    %586 = vmatpush.msra.mxu0 0.0
    %587 = vmatpush.msra.mxu0 %v220
    %588 = vmatmul.f32.gmra.mxu0 %v567
    %v589 = vpop.f32.mrf.mxu0
    %v590 = vadd.f32 %v561, %v589
    %591 = vmatmul.f32.gmra.mxu0 %v570
    %v592 = vpop.f32.mrf.mxu0
    %v593 = vadd.f32 %v564, %v592
    %594 = vdwg.mxu0
    %595 = vrot.lane.b32.xlu0 %v218, 112
    %v596 = vpop.permute.xlu0 %595
    %597 = vrot.lane.b32.xlu0 %v213, 80
    %v598 = vpop.permute.xlu0 %597
    %v599 = vsel %vm227, %v596, 0
    %v601 = vsel %vm227, %v598, 0
    %603 = vmatpush.xpose.msra.mxu0 0.0
    %604 = vmatpush.xpose.msra.mxu0 0.0
    %605 = vmatpush.xpose.msra.mxu0 0.0
    %606 = vmatpush.xpose.msra.mxu0 0.0
    %607 = vmatpush.xpose.msra.mxu0 0.0
    %608 = vmatpush.xpose.msra.mxu0 0.0
    %609 = vmatpush.xpose.msra.mxu0 0.0
    %610 = vmatpush.xpose.msra.mxu0 0.0
    %611 = vmatpush.xpose.msra.mxu0 0.0
    %612 = vmatpush.xpose.msra.mxu0 0.0
    %613 = vmatpush.xpose.msra.mxu0 0.0
    %614 = vmatpush.xpose.msra.mxu0 0.0
    %615 = vmatpush.xpose.msra.mxu0 0.0
    %616 = vmatpush.xpose.msra.mxu0 0.0
    %617 = vmatpush.xpose.msra.mxu0 0.0
    %618 = vmatpush.xpose.msra.mxu0 %v601
    %619 = vmatmul.f32.gmra.mxu0 %v599
    %v620 = vpop.f32.mrf.mxu0
    %v621 = vadd.f32 %v73, %v620
    %622 = vdwg.mxu0
    %623 = vrot.lane.b32.xlu0 %v219, 112
    %v624 = vpop.permute.xlu0 %623
    %625 = vrot.lane.b32.xlu0 %v216, 80
    %v626 = vpop.permute.xlu0 %625
    %v627 = vsel %vm227, %v624, 0
    %v629 = vsel %vm227, %v626, 0
    %631 = vmatpush.xpose.msra.mxu0 0.0
    %632 = vmatpush.xpose.msra.mxu0 0.0
    %633 = vmatpush.xpose.msra.mxu0 0.0
    %634 = vmatpush.xpose.msra.mxu0 0.0
    %635 = vmatpush.xpose.msra.mxu0 0.0
    %636 = vmatpush.xpose.msra.mxu0 0.0
    %637 = vmatpush.xpose.msra.mxu0 0.0
    %638 = vmatpush.xpose.msra.mxu0 0.0
    %639 = vmatpush.xpose.msra.mxu0 0.0
    %640 = vmatpush.xpose.msra.mxu0 0.0
    %641 = vmatpush.xpose.msra.mxu0 0.0
    %642 = vmatpush.xpose.msra.mxu0 0.0
    %643 = vmatpush.xpose.msra.mxu0 0.0
    %644 = vmatpush.xpose.msra.mxu0 0.0
    %645 = vmatpush.xpose.msra.mxu0 0.0
    %646 = vmatpush.xpose.msra.mxu0 %v629
    %647 = vmatmul.f32.gmra.mxu0 %v627
    %v648 = vpop.f32.mrf.mxu0
    %v649 = vadd.f32 %v74, %v648
    %650 = vdwg.mxu0
    %v651 = vsel %vm227, %v621, -inf
    %652 = vmax.xlane.f32.xlu0 %v651
    %v653 = vpop.xlane.xlu0 %652
    %v654 = vsel %vm227, %v649, -inf
    %655 = vmax.xlane.f32.xlu0 %v654
    %v656 = vpop.xlane.xlu0 %655
    %v657 = vsub.f32 %v621, %v653
    %v658 = vsub.f32 %v649, %v656
    %v659 = vmul.f32 %v657, 1.442695
    %v660 = vpow.pop %v659
    %v661 = vmul.f32 %v658, 1.442695
    %v662 = vpow.pop %v661
    %v663 = vsel %vm227, %v660, 0.0
    %664 = vadd.xlane.f32.xlu0 %v663
    %v665 = vpop.xlane.xlu0 %664
    %v666 = vsel %vm227, %v662, 0.0
    %667 = vadd.xlane.f32.xlu0 %v666
    %v668 = vpop.xlane.xlu0 %667
    %v669 = vrcp.pop %v665
    %v670 = vmul.f32 %v665, %v669
    %v671 = vsub.f32 1.0, %v670
    %v672 = vmul.f32 %v669, %v671
    %v673 = vadd.f32 %v669, %v672
    %vm674 = vweird.f32 %v665
    %vm675 = vweird.f32 %v669
    %vm676 = vmor %vm674, %vm675
    %v677 = vsel %vm676, %v669, %v673
    %v678 = vand.u32 2147483647, %v665
    %vm679 = vcmp.eq.f32.partialorder %v678, 8.507059e+37
    %v680 = vand.u32 %v665, 2147483648
    %v681 = vor.u32 1.1754944e-38, %v680
    %v682 = vsel %vm679, %v681, %v677
    %v683 = vmul.f32 %v660, %v682
    %v684 = vrcp.pop %v668
    %v685 = vmul.f32 %v668, %v684
    %v686 = vsub.f32 1.0, %v685
    %v687 = vmul.f32 %v684, %v686
    %v688 = vadd.f32 %v684, %v687
    %vm689 = vweird.f32 %v668
    %vm690 = vweird.f32 %v684
    %vm691 = vmor %vm689, %vm690
    %v692 = vsel %vm691, %v684, %v688
    %v693 = vand.u32 2147483647, %v668
    %vm694 = vcmp.eq.f32.partialorder %v693, 8.507059e+37
    %v695 = vand.u32 %v668, 2147483648
    %v696 = vor.u32 1.1754944e-38, %v695
    %v697 = vsel %vm694, %v696, %v692
    %v698 = vmul.f32 %v662, %v697
    %699 = vrot.lane.b32.xlu0 %v213, 48
    %v700 = vpop.permute.xlu0 %699
    %v703 = vsel %vm227, %v683, 0
    %705 = vmatpush.msra.mxu0 0.0
    %706 = vmatpush.msra.mxu0 0.0
    %707 = vmatpush.msra.mxu0 0.0
    %708 = vmatpush.msra.mxu0 0.0
    %709 = vmatpush.msra.mxu0 0.0
    %710 = vmatpush.msra.mxu0 0.0
    %711 = vmatpush.msra.mxu0 0.0
    %712 = vmatpush.msra.mxu0 0.0
    %713 = vmatpush.msra.mxu0 0.0
    %714 = vmatpush.msra.mxu0 0.0
    %715 = vmatpush.msra.mxu0 0.0
    %716 = vmatpush.msra.mxu0 0.0
    %717 = vmatpush.msra.mxu0 0.0
    %718 = vmatpush.msra.mxu0 0.0
    %719 = vmatpush.msra.mxu0 0.0
    %720 = vmatpush.msra.mxu0 %v700
    %721 = vmatmul.f32.gmra.mxu0 %v703
    %v722 = vpop.f32.mrf.mxu0
    %v723 = vadd.f32 0.0, %v722
    %724 = vdwg.mxu0
    %725 = vrot.lane.b32.xlu0 %v216, 48
    %v726 = vpop.permute.xlu0 %725
    %v729 = vsel %vm227, %v698, 0
    %731 = vmatpush.msra.mxu0 0.0
    %732 = vmatpush.msra.mxu0 0.0
    %733 = vmatpush.msra.mxu0 0.0
    %734 = vmatpush.msra.mxu0 0.0
    %735 = vmatpush.msra.mxu0 0.0
    %736 = vmatpush.msra.mxu0 0.0
    %737 = vmatpush.msra.mxu0 0.0
    %738 = vmatpush.msra.mxu0 0.0
    %739 = vmatpush.msra.mxu0 0.0
    %740 = vmatpush.msra.mxu0 0.0
    %741 = vmatpush.msra.mxu0 0.0
    %742 = vmatpush.msra.mxu0 0.0
    %743 = vmatpush.msra.mxu0 0.0
    %744 = vmatpush.msra.mxu0 0.0
    %745 = vmatpush.msra.mxu0 0.0
    %746 = vmatpush.msra.mxu0 %v726
    %747 = vmatmul.f32.gmra.mxu0 %v729
    %v748 = vpop.f32.mrf.mxu0
    %v749 = vadd.f32 0.0, %v748
    %750 = vdwg.mxu0
    %v752 = vsel %vm227, %v723, 0
    %v755 = vsel %vm227, %v749, 0
    %757 = vmatpush.msra.mxu0 0.0
    %758 = vmatpush.msra.mxu0 0.0
    %759 = vmatpush.msra.mxu0 0.0
    %760 = vmatpush.msra.mxu0 0.0
    %761 = vmatpush.msra.mxu0 0.0
    %762 = vmatpush.msra.mxu0 0.0
    %763 = vmatpush.msra.mxu0 0.0
    %764 = vmatpush.msra.mxu0 0.0
    %765 = vmatpush.msra.mxu0 0.0
    %766 = vmatpush.msra.mxu0 0.0
    %767 = vmatpush.msra.mxu0 0.0
    %768 = vmatpush.msra.mxu0 0.0
    %769 = vmatpush.msra.mxu0 0.0
    %770 = vmatpush.msra.mxu0 0.0
    %771 = vmatpush.msra.mxu0 0.0
    %772 = vmatpush.msra.mxu0 %v222
    %773 = vmatmul.f32.gmra.mxu0 %v752
    %v774 = vpop.f32.mrf.mxu0
    %v775 = vadd.f32 0.0, %v774
    %776 = vmatmul.f32.gmra.mxu0 %v755
    %v777 = vpop.f32.mrf.mxu0
    %v778 = vadd.f32 0.0, %v777
    %779 = vdwg.mxu0
    %v780 = vadd.f32 %v590, %v775
    %v781 = vadd.f32 %v593, %v778
    %782 = vrot.lane.b32.xlu0 %v218, 104
    %v783 = vpop.permute.xlu0 %782
    %784 = vrot.lane.b32.xlu0 %v213, 72
    %v785 = vpop.permute.xlu0 %784
    %v786 = vsel %vm227, %v783, 0
    %v788 = vsel %vm227, %v785, 0
    %790 = vmatpush.xpose.msra.mxu0 0.0
    %791 = vmatpush.xpose.msra.mxu0 0.0
    %792 = vmatpush.xpose.msra.mxu0 0.0
    %793 = vmatpush.xpose.msra.mxu0 0.0
    %794 = vmatpush.xpose.msra.mxu0 0.0
    %795 = vmatpush.xpose.msra.mxu0 0.0
    %796 = vmatpush.xpose.msra.mxu0 0.0
    %797 = vmatpush.xpose.msra.mxu0 0.0
    %798 = vmatpush.xpose.msra.mxu0 0.0
    %799 = vmatpush.xpose.msra.mxu0 0.0
    %800 = vmatpush.xpose.msra.mxu0 0.0
    %801 = vmatpush.xpose.msra.mxu0 0.0
    %802 = vmatpush.xpose.msra.mxu0 0.0
    %803 = vmatpush.xpose.msra.mxu0 0.0
    %804 = vmatpush.xpose.msra.mxu0 0.0
    %805 = vmatpush.xpose.msra.mxu0 %v788
    %806 = vmatmul.f32.gmra.mxu0 %v786
    %v807 = vpop.f32.mrf.mxu0
    %v808 = vadd.f32 %v73, %v807
    %809 = vdwg.mxu0
    %810 = vrot.lane.b32.xlu0 %v219, 104
    %v811 = vpop.permute.xlu0 %810
    %812 = vrot.lane.b32.xlu0 %v216, 72
    %v813 = vpop.permute.xlu0 %812
    %v814 = vsel %vm227, %v811, 0
    %v816 = vsel %vm227, %v813, 0
    %818 = vmatpush.xpose.msra.mxu0 0.0
    %819 = vmatpush.xpose.msra.mxu0 0.0
    %820 = vmatpush.xpose.msra.mxu0 0.0
    %821 = vmatpush.xpose.msra.mxu0 0.0
    %822 = vmatpush.xpose.msra.mxu0 0.0
    %823 = vmatpush.xpose.msra.mxu0 0.0
    %824 = vmatpush.xpose.msra.mxu0 0.0
    %825 = vmatpush.xpose.msra.mxu0 0.0
    %826 = vmatpush.xpose.msra.mxu0 0.0
    %827 = vmatpush.xpose.msra.mxu0 0.0
    %828 = vmatpush.xpose.msra.mxu0 0.0
    %829 = vmatpush.xpose.msra.mxu0 0.0
    %830 = vmatpush.xpose.msra.mxu0 0.0
    %831 = vmatpush.xpose.msra.mxu0 0.0
    %832 = vmatpush.xpose.msra.mxu0 0.0
    %833 = vmatpush.xpose.msra.mxu0 %v816
    %834 = vmatmul.f32.gmra.mxu0 %v814
    %v835 = vpop.f32.mrf.mxu0
    %v836 = vadd.f32 %v74, %v835
    %837 = vdwg.mxu0
    %v838 = vsel %vm227, %v808, -inf
    %839 = vmax.xlane.f32.xlu0 %v838
    %v840 = vpop.xlane.xlu0 %839
    %v841 = vsel %vm227, %v836, -inf
    %842 = vmax.xlane.f32.xlu0 %v841
    %v843 = vpop.xlane.xlu0 %842
    %v844 = vsub.f32 %v808, %v840
    %v845 = vsub.f32 %v836, %v843
    %v846 = vmul.f32 %v844, 1.442695
    %v847 = vpow.pop %v846
    %v848 = vmul.f32 %v845, 1.442695
    %v849 = vpow.pop %v848
    %v850 = vsel %vm227, %v847, 0.0
    %851 = vadd.xlane.f32.xlu0 %v850
    %v852 = vpop.xlane.xlu0 %851
    %v853 = vsel %vm227, %v849, 0.0
    %854 = vadd.xlane.f32.xlu0 %v853
    %v855 = vpop.xlane.xlu0 %854
    %v856 = vrcp.pop %v852
    %v857 = vmul.f32 %v852, %v856
    %v858 = vsub.f32 1.0, %v857
    %v859 = vmul.f32 %v856, %v858
    %v860 = vadd.f32 %v856, %v859
    %vm861 = vweird.f32 %v852
    %vm862 = vweird.f32 %v856
    %vm863 = vmor %vm861, %vm862
    %v864 = vsel %vm863, %v856, %v860
    %v865 = vand.u32 2147483647, %v852
    %vm866 = vcmp.eq.f32.partialorder %v865, 8.507059e+37
    %v867 = vand.u32 %v852, 2147483648
    %v868 = vor.u32 1.1754944e-38, %v867
    %v869 = vsel %vm866, %v868, %v864
    %v870 = vmul.f32 %v847, %v869
    %v871 = vrcp.pop %v855
    %v872 = vmul.f32 %v855, %v871
    %v873 = vsub.f32 1.0, %v872
    %v874 = vmul.f32 %v871, %v873
    %v875 = vadd.f32 %v871, %v874
    %vm876 = vweird.f32 %v855
    %vm877 = vweird.f32 %v871
    %vm878 = vmor %vm876, %vm877
    %v879 = vsel %vm878, %v871, %v875
    %v880 = vand.u32 2147483647, %v855
    %vm881 = vcmp.eq.f32.partialorder %v880, 8.507059e+37
    %v882 = vand.u32 %v855, 2147483648
    %v883 = vor.u32 1.1754944e-38, %v882
    %v884 = vsel %vm881, %v883, %v879
    %v885 = vmul.f32 %v849, %v884
    %886 = vrot.lane.b32.xlu0 %v213, 40
    %v887 = vpop.permute.xlu0 %886
    %v890 = vsel %vm227, %v870, 0
    %892 = vmatpush.msra.mxu0 0.0
    %893 = vmatpush.msra.mxu0 0.0
    %894 = vmatpush.msra.mxu0 0.0
    %895 = vmatpush.msra.mxu0 0.0
    %896 = vmatpush.msra.mxu0 0.0
    %897 = vmatpush.msra.mxu0 0.0
    %898 = vmatpush.msra.mxu0 0.0
    %899 = vmatpush.msra.mxu0 0.0
    %900 = vmatpush.msra.mxu0 0.0
    %901 = vmatpush.msra.mxu0 0.0
    %902 = vmatpush.msra.mxu0 0.0
    %903 = vmatpush.msra.mxu0 0.0
    %904 = vmatpush.msra.mxu0 0.0
    %905 = vmatpush.msra.mxu0 0.0
    %906 = vmatpush.msra.mxu0 0.0
    %907 = vmatpush.msra.mxu0 %v887
    %908 = vmatmul.f32.gmra.mxu0 %v890
    %v909 = vpop.f32.mrf.mxu0
    %v910 = vadd.f32 0.0, %v909
    %911 = vdwg.mxu0
    %912 = vrot.lane.b32.xlu0 %v216, 40
    %v913 = vpop.permute.xlu0 %912
    %v916 = vsel %vm227, %v885, 0
    %918 = vmatpush.msra.mxu0 0.0
    %919 = vmatpush.msra.mxu0 0.0
    %920 = vmatpush.msra.mxu0 0.0
    %921 = vmatpush.msra.mxu0 0.0
    %922 = vmatpush.msra.mxu0 0.0
    %923 = vmatpush.msra.mxu0 0.0
    %924 = vmatpush.msra.mxu0 0.0
    %925 = vmatpush.msra.mxu0 0.0
    %926 = vmatpush.msra.mxu0 0.0
    %927 = vmatpush.msra.mxu0 0.0
    %928 = vmatpush.msra.mxu0 0.0
    %929 = vmatpush.msra.mxu0 0.0
    %930 = vmatpush.msra.mxu0 0.0
    %931 = vmatpush.msra.mxu0 0.0
    %932 = vmatpush.msra.mxu0 0.0
    %933 = vmatpush.msra.mxu0 %v913
    %934 = vmatmul.f32.gmra.mxu0 %v916
    %v935 = vpop.f32.mrf.mxu0
    %v936 = vadd.f32 0.0, %v935
    %937 = vdwg.mxu0
    %v939 = vsel %vm227, %v910, 0
    %v942 = vsel %vm227, %v936, 0
    %944 = vmatpush.msra.mxu0 0.0
    %945 = vmatpush.msra.mxu0 0.0
    %946 = vmatpush.msra.mxu0 0.0
    %947 = vmatpush.msra.mxu0 0.0
    %948 = vmatpush.msra.mxu0 0.0
    %949 = vmatpush.msra.mxu0 0.0
    %950 = vmatpush.msra.mxu0 0.0
    %951 = vmatpush.msra.mxu0 0.0
    %952 = vmatpush.msra.mxu0 0.0
    %953 = vmatpush.msra.mxu0 0.0
    %954 = vmatpush.msra.mxu0 0.0
    %955 = vmatpush.msra.mxu0 0.0
    %956 = vmatpush.msra.mxu0 0.0
    %957 = vmatpush.msra.mxu0 0.0
    %958 = vmatpush.msra.mxu0 0.0
    %959 = vmatpush.msra.mxu0 %v223
    %960 = vmatmul.f32.gmra.mxu0 %v939
    %v961 = vpop.f32.mrf.mxu0
    %v962 = vadd.f32 0.0, %v961
    %963 = vmatmul.f32.gmra.mxu0 %v942
    %v964 = vpop.f32.mrf.mxu0
    %v965 = vadd.f32 0.0, %v964
    %966 = vdwg.mxu0
    %v967 = vadd.f32 %v780, %v962
    %v968 = vadd.f32 %v781, %v965
    %v969 = vadd.f32 %v65, %v967
    %v970 = vadd.f32 %v66, %v968
    %v971 = vperm.slane %v80, 0
    %v972 = vadd.f32 %v969, %v971
    %v973 = vadd.f32 %v970, %v971
    %v974 = vsel %vm87, %v972, 0.0
    %975 = vadd.xlane.f32.xlu0 %v974
    %v976 = vpop.xlane.xlu0 %975
    %v977 = vsel %vm87, %v973, 0.0
    %978 = vadd.xlane.f32.xlu0 %v977
    %v979 = vpop.xlane.xlu0 %978
    %v980 = vmul.f32 %v976, %v100
    %v981 = vmul.f32 %v979, %v100
    %v982 = vsub.f32 %v972, %v980
    %v983 = vsub.f32 %v973, %v981
    %v984 = vmul.f32 %v982, %v982
    %v985 = vmul.f32 %v983, %v983
    %v986 = vsel %vm87, %v984, 0.0
    %987 = vadd.xlane.f32.xlu0 %v986
    %v988 = vpop.xlane.xlu0 %987
    %v989 = vsel %vm87, %v985, 0.0
    %990 = vadd.xlane.f32.xlu0 %v989
    %v991 = vpop.xlane.xlu0 %990
    %v992 = vmul.f32 %v988, %v119
    %v993 = vmul.f32 %v991, %v119
    %v994 = vperm.slane %v85, 0
    %v995 = vmul.f32 %v994, %v982
    %v996 = vmul.f32 %v994, %v983
    %v997 = vrsqrt.pop %v992
    %v998 = vmul.f32 %v997, %v992
    %v999 = vmul.f32 %v998, %v997
    %v1000 = vmul.f32 0.5, %v999
    %v1001 = vsub.f32 1.5, %v1000
    %v1002 = vmul.f32 %v997, %v1001
    %v1003 = vmul.f32 %v992, %v1002
    %vm1004 = vcmp.eq.f32.partialorder %v992, inf
    %v1005 = vsel %vm1004, %v992, %v1003
    %vm1006 = vcmp.eq.f32.partialorder %v992, 0.0
    %v1007 = vand.u32 %v992, 2147483648
    %v1008 = vsel %vm1006, %v1007, %v1005
    %v1009 = vrsqrt.pop %v993
    %v1010 = vmul.f32 %v1009, %v993
    %v1011 = vmul.f32 %v1010, %v1009
    %v1012 = vmul.f32 0.5, %v1011
    %v1013 = vsub.f32 1.5, %v1012
    %v1014 = vmul.f32 %v1009, %v1013
    %v1015 = vmul.f32 %v993, %v1014
    %vm1016 = vcmp.eq.f32.partialorder %v993, inf
    %v1017 = vsel %vm1016, %v993, %v1015
    %vm1018 = vcmp.eq.f32.partialorder %v993, 0.0
    %v1019 = vand.u32 %v993, 2147483648
    %v1020 = vsel %vm1018, %v1019, %v1017
    %v1021 = vadd.f32 %v1008, 1e-06
    %v1022 = vadd.f32 %v1020, 1e-06
    %v1023 = vrcp.pop %v1021
    %v1024 = vmul.f32 %v1021, %v1023
    %v1025 = vsub.f32 1.0, %v1024
    %v1026 = vmul.f32 %v1023, %v1025
    %v1027 = vadd.f32 %v1023, %v1026
    %vm1028 = vweird.f32 %v1021
    %vm1029 = vweird.f32 %v1023
    %vm1030 = vmor %vm1028, %vm1029
    %v1031 = vsel %vm1030, %v1023, %v1027
    %v1032 = vand.u32 2147483647, %v1021
    %vm1033 = vcmp.eq.f32.partialorder %v1032, 8.507059e+37
    %v1034 = vand.u32 %v1021, 2147483648
    %v1035 = vor.u32 1.1754944e-38, %v1034
    %v1036 = vsel %vm1033, %v1035, %v1031
    %v1037 = vmul.f32 %v995, %v1036
    %v1038 = vrcp.pop %v1022
    %v1039 = vmul.f32 %v1022, %v1038
    %v1040 = vsub.f32 1.0, %v1039
    %v1041 = vmul.f32 %v1038, %v1040
    %v1042 = vadd.f32 %v1038, %v1041
    %vm1043 = vweird.f32 %v1022
    %vm1044 = vweird.f32 %v1038
    %vm1045 = vmor %vm1043, %vm1044
    %v1046 = vsel %vm1045, %v1038, %v1042
    %v1047 = vand.u32 2147483647, %v1022
    %vm1048 = vcmp.eq.f32.partialorder %v1047, 8.507059e+37
    %v1049 = vand.u32 %v1022, 2147483648
    %v1050 = vor.u32 1.1754944e-38, %v1049
    %v1051 = vsel %vm1048, %v1050, %v1046
    %v1052 = vmul.f32 %v996, %v1051
    %v1053 = vperm.slane %v86, 0
    %v1054 = vadd.f32 %v1037, %v1053
    %v1055 = vadd.f32 %v1052, %v1053
    %v1056 = vld [vmem:[#allocation7 + $0x40] sm:$0xff]
    %v1057 = vld [vmem:[#allocation7 + $0x48] sm:$0xff]
    %v1058 = vld [vmem:[#allocation7 + $0x50] sm:$0xff]
    %v1059 = vld [vmem:[#allocation7 + $0x58] sm:$0xff]
    %v1060 = vperm.slane %v81, 0
    %v1062 = vsel %vm87, %v1054, 0
    %v1065 = vsel %vm87, %v1055, 0
    %1067 = vmatpush.msra.mxu0 0.0
    %1068 = vmatpush.msra.mxu0 0.0
    %1069 = vmatpush.msra.mxu0 0.0
    %1070 = vmatpush.msra.mxu0 0.0
    %1071 = vmatpush.msra.mxu0 0.0
    %1072 = vmatpush.msra.mxu0 0.0
    %1073 = vmatpush.msra.mxu0 0.0
    %1074 = vmatpush.msra.mxu0 0.0
    %1075 = vmatpush.msra.mxu0 0.0
    %1076 = vmatpush.msra.mxu0 0.0
    %1077 = vmatpush.msra.mxu0 0.0
    %1078 = vmatpush.msra.mxu0 0.0
    %1079 = vmatpush.msra.mxu0 %v1059
    %1080 = vmatpush.msra.mxu0 %v1058
    %1081 = vmatpush.msra.mxu0 %v1057
    %1082 = vmatpush.msra.mxu0 %v1056
    %1083 = vmatmul.f32.gmra.mxu0 %v1062
    %v1084 = vpop.f32.mrf.mxu0
    %v1085 = vadd.f32 %v1060, %v1084
    %1086 = vmatmul.f32.gmra.mxu0 %v1065
    %v1087 = vpop.f32.mrf.mxu0
    %v1088 = vadd.f32 %v1060, %v1087
    %1089 = vdwg.mxu0
    %v1090 = vmax.f32 %v1085, 0.0
    %v1091 = vmax.f32 %v1088, 0.0
    %v1092 = vld [vmem:[#allocation7 + $0x60] sm:$0xff]
    %v1093 = vld [vmem:[#allocation7 + $0x68] sm:$0xff]
    %v1094 = vld [vmem:[#allocation7 + $0x70] sm:$0xff]
    %v1095 = vld [vmem:[#allocation7 + $0x78] sm:$0xff]
    %v1096 = vld [vmem:[#allocation7 + $0x80] sm:$0xff]
    %v1097 = vld [vmem:[#allocation7 + $0x88] sm:$0xff]
    %vm1098 = vcmask 392192
    %v1100 = vsel %vm1098, %v1090, 0
    %v1103 = vsel %vm1098, %v1091, 0
    %1105 = vmatpush.msra.mxu0 0.0
    %1106 = vmatpush.msra.mxu0 0.0
    %1107 = vmatpush.msra.mxu0 0.0
    %1108 = vmatpush.msra.mxu0 0.0
    %1109 = vmatpush.msra.mxu0 0.0
    %1110 = vmatpush.msra.mxu0 0.0
    %1111 = vmatpush.msra.mxu0 0.0
    %1112 = vmatpush.msra.mxu0 0.0
    %1113 = vmatpush.msra.mxu0 0.0
    %1114 = vmatpush.msra.mxu0 0.0
    %1115 = vmatpush.msra.mxu0 %v1097
    %1116 = vmatpush.msra.mxu0 %v1096
    %1117 = vmatpush.msra.mxu0 %v1095
    %1118 = vmatpush.msra.mxu0 %v1094
    %1119 = vmatpush.msra.mxu0 %v1093
    %1120 = vmatpush.msra.mxu0 %v1092
    %1121 = vmatmul.f32.gmra.mxu0 %v1100
    %v1122 = vpop.f32.mrf.mxu0
    %v1123 = vadd.f32 0.0, %v1122
    %1124 = vmatmul.f32.gmra.mxu0 %v1103
    %v1125 = vpop.f32.mrf.mxu0
    %v1126 = vadd.f32 0.0, %v1125
    %1127 = vdwg.mxu0
    %v1128 = vadd.f32 %v972, %v1123
    %v1129 = vadd.f32 %v973, %v1126
    %v1130 = vperm.slane %v82, 0
    %v1131 = vadd.f32 %v1128, %v1130
    %v1132 = vadd.f32 %v1129, %v1130
    %v1133 = vld [vmem:[#allocation7 + $0x128] sm:$0x1]
    %v1134 = vld [vmem:[#allocation7 + $0x129] sm:$0x1]
    %v1135 = vld [vmem:[#allocation7 + $0x12a] sm:$0x1]
    %v1136 = vld [vmem:[#allocation7 + $0x12b] sm:$0x1]
    %v1137 = vld [vmem:[#allocation7 + $0x12c] sm:$0x1]
    %v1138 = vld [vmem:[#allocation7 + $0x12d] sm:$0x1]
    %v1139 = vld [vmem:[#allocation7 + $0x12e] sm:$0x1]
    %v1140 = vld [vmem:[#allocation7 + $0x12f] sm:$0x1]
    %v1141 = vsel %vm87, %v1131, 0.0
    %1142 = vadd.xlane.f32.xlu0 %v1141
    %v1143 = vpop.xlane.xlu0 %1142
    %v1144 = vsel %vm87, %v1132, 0.0
    %1145 = vadd.xlane.f32.xlu0 %v1144
    %v1146 = vpop.xlane.xlu0 %1145
    %v1147 = vmul.f32 %v1143, %v100
    %v1148 = vmul.f32 %v1146, %v100
    %v1149 = vsub.f32 %v1131, %v1147
    %v1150 = vsub.f32 %v1132, %v1148
    %v1151 = vmul.f32 %v1149, %v1149
    %v1152 = vmul.f32 %v1150, %v1150
    %v1153 = vsel %vm87, %v1151, 0.0
    %1154 = vadd.xlane.f32.xlu0 %v1153
    %v1155 = vpop.xlane.xlu0 %1154
    %v1156 = vsel %vm87, %v1152, 0.0
    %1157 = vadd.xlane.f32.xlu0 %v1156
    %v1158 = vpop.xlane.xlu0 %1157
    %v1159 = vmul.f32 %v1155, %v119
    %v1160 = vmul.f32 %v1158, %v119
    %v1161 = vperm.slane %v1137, 0
    %v1162 = vmul.f32 %v1161, %v1149
    %v1163 = vmul.f32 %v1161, %v1150
    %v1164 = vrsqrt.pop %v1159
    %v1165 = vmul.f32 %v1164, %v1159
    %v1166 = vmul.f32 %v1165, %v1164
    %v1167 = vmul.f32 0.5, %v1166
    %v1168 = vsub.f32 1.5, %v1167
    %v1169 = vmul.f32 %v1164, %v1168
    %v1170 = vmul.f32 %v1159, %v1169
    %vm1171 = vcmp.eq.f32.partialorder %v1159, inf
    %v1172 = vsel %vm1171, %v1159, %v1170
    %vm1173 = vcmp.eq.f32.partialorder %v1159, 0.0
    %v1174 = vand.u32 %v1159, 2147483648
    %v1175 = vsel %vm1173, %v1174, %v1172
    %v1176 = vrsqrt.pop %v1160
    %v1177 = vmul.f32 %v1176, %v1160
    %v1178 = vmul.f32 %v1177, %v1176
    %v1179 = vmul.f32 0.5, %v1178
    %v1180 = vsub.f32 1.5, %v1179
    %v1181 = vmul.f32 %v1176, %v1180
    %v1182 = vmul.f32 %v1160, %v1181
    %vm1183 = vcmp.eq.f32.partialorder %v1160, inf
    %v1184 = vsel %vm1183, %v1160, %v1182
    %vm1185 = vcmp.eq.f32.partialorder %v1160, 0.0
    %v1186 = vand.u32 %v1160, 2147483648
    %v1187 = vsel %vm1185, %v1186, %v1184
    %v1188 = vadd.f32 %v1175, 1e-06
    %v1189 = vadd.f32 %v1187, 1e-06
    %v1190 = vrcp.pop %v1188
    %v1191 = vmul.f32 %v1188, %v1190
    %v1192 = vsub.f32 1.0, %v1191
    %v1193 = vmul.f32 %v1190, %v1192
    %v1194 = vadd.f32 %v1190, %v1193
    %vm1195 = vweird.f32 %v1188
    %vm1196 = vweird.f32 %v1190
    %vm1197 = vmor %vm1195, %vm1196
    %v1198 = vsel %vm1197, %v1190, %v1194
    %v1199 = vand.u32 2147483647, %v1188
    %vm1200 = vcmp.eq.f32.partialorder %v1199, 8.507059e+37
    %v1201 = vand.u32 %v1188, 2147483648
    %v1202 = vor.u32 1.1754944e-38, %v1201
    %v1203 = vsel %vm1200, %v1202, %v1198
    %v1204 = vmul.f32 %v1162, %v1203
    %v1205 = vrcp.pop %v1189
    %v1206 = vmul.f32 %v1189, %v1205
    %v1207 = vsub.f32 1.0, %v1206
    %v1208 = vmul.f32 %v1205, %v1207
    %v1209 = vadd.f32 %v1205, %v1208
    %vm1210 = vweird.f32 %v1189
    %vm1211 = vweird.f32 %v1205
    %vm1212 = vmor %vm1210, %vm1211
    %v1213 = vsel %vm1212, %v1205, %v1209
    %v1214 = vand.u32 2147483647, %v1189
    %vm1215 = vcmp.eq.f32.partialorder %v1214, 8.507059e+37
    %v1216 = vand.u32 %v1189, 2147483648
    %v1217 = vor.u32 1.1754944e-38, %v1216
    %v1218 = vsel %vm1215, %v1217, %v1213
    %v1219 = vmul.f32 %v1163, %v1218
    %v1220 = vperm.slane %v1138, 0
    %v1221 = vadd.f32 %v1204, %v1220
    %v1222 = vadd.f32 %v1219, %v1220
    %v1223 = vld [vmem:[#allocation7 + $0x98] sm:$0xff]
    %v1224 = vld [vmem:[#allocation7 + $0xa0] sm:$0xff]
    %v1225 = vld [vmem:[#allocation7 + $0xa8] sm:$0xff]
    %v1226 = vld [vmem:[#allocation7 + $0xb0] sm:$0xff]
    %v1227 = vperm.slane %v1133, 0
    %v1229 = vsel %vm87, %v1221, 0
    %v1232 = vsel %vm87, %v1222, 0
    %1234 = vmatpush.msra.mxu0 0.0
    %1235 = vmatpush.msra.mxu0 0.0
    %1236 = vmatpush.msra.mxu0 0.0
    %1237 = vmatpush.msra.mxu0 0.0
    %1238 = vmatpush.msra.mxu0 0.0
    %1239 = vmatpush.msra.mxu0 0.0
    %1240 = vmatpush.msra.mxu0 0.0
    %1241 = vmatpush.msra.mxu0 0.0
    %1242 = vmatpush.msra.mxu0 0.0
    %1243 = vmatpush.msra.mxu0 0.0
    %1244 = vmatpush.msra.mxu0 0.0
    %1245 = vmatpush.msra.mxu0 0.0
    %1246 = vmatpush.msra.mxu0 %v1226
    %1247 = vmatpush.msra.mxu0 %v1225
    %1248 = vmatpush.msra.mxu0 %v1224
    %1249 = vmatpush.msra.mxu0 %v1223
    %1250 = vmatmul.f32.gmra.mxu0 %v1229
    %v1251 = vpop.f32.mrf.mxu0
    %v1252 = vadd.f32 %v1227, %v1251
    %1253 = vmatmul.f32.gmra.mxu0 %v1232
    %v1254 = vpop.f32.mrf.mxu0
    %v1255 = vadd.f32 %v1227, %v1254
    %1256 = vdwg.mxu0
    %v1257 = vmul.f32 %v1252, 0.35355338
    %v1258 = vmul.f32 %v1255, 0.35355338
    %v1259 = vld [vmem:[#allocation7 + $0xb8] sm:$0xff]
    %v1260 = vld [vmem:[#allocation7 + $0xc0] sm:$0xff]
    %v1261 = vld [vmem:[#allocation7 + $0xc8] sm:$0xff]
    %v1262 = vld [vmem:[#allocation7 + $0xd0] sm:$0xff]
    %1264 = vrot.lane.b32.xlu0 %v1252, 96
    %v1265 = vpop.permute.xlu0 %1264
    %v1267 = vsel %vm227, %v1257, 0
    %v1269 = vsel %vm227, %v1265, 0
    %1271 = vmatpush.xpose.msra.mxu0 0.0
    %1272 = vmatpush.xpose.msra.mxu0 0.0
    %1273 = vmatpush.xpose.msra.mxu0 0.0
    %1274 = vmatpush.xpose.msra.mxu0 0.0
    %1275 = vmatpush.xpose.msra.mxu0 0.0
    %1276 = vmatpush.xpose.msra.mxu0 0.0
    %1277 = vmatpush.xpose.msra.mxu0 0.0
    %1278 = vmatpush.xpose.msra.mxu0 0.0
    %1279 = vmatpush.xpose.msra.mxu0 0.0
    %1280 = vmatpush.xpose.msra.mxu0 0.0
    %1281 = vmatpush.xpose.msra.mxu0 0.0
    %1282 = vmatpush.xpose.msra.mxu0 0.0
    %1283 = vmatpush.xpose.msra.mxu0 0.0
    %1284 = vmatpush.xpose.msra.mxu0 0.0
    %1285 = vmatpush.xpose.msra.mxu0 0.0
    %1286 = vmatpush.xpose.msra.mxu0 %v1269
    %1287 = vmatmul.f32.gmra.mxu0 %v1267
    %v1288 = vpop.f32.mrf.mxu0
    %v1289 = vadd.f32 %v73, %v1288
    %1290 = vdwg.mxu0
    %1292 = vrot.lane.b32.xlu0 %v1255, 96
    %v1293 = vpop.permute.xlu0 %1292
    %v1295 = vsel %vm227, %v1258, 0
    %v1297 = vsel %vm227, %v1293, 0
    %1299 = vmatpush.xpose.msra.mxu0 0.0
    %1300 = vmatpush.xpose.msra.mxu0 0.0
    %1301 = vmatpush.xpose.msra.mxu0 0.0
    %1302 = vmatpush.xpose.msra.mxu0 0.0
    %1303 = vmatpush.xpose.msra.mxu0 0.0
    %1304 = vmatpush.xpose.msra.mxu0 0.0
    %1305 = vmatpush.xpose.msra.mxu0 0.0
    %1306 = vmatpush.xpose.msra.mxu0 0.0
    %1307 = vmatpush.xpose.msra.mxu0 0.0
    %1308 = vmatpush.xpose.msra.mxu0 0.0
    %1309 = vmatpush.xpose.msra.mxu0 0.0
    %1310 = vmatpush.xpose.msra.mxu0 0.0
    %1311 = vmatpush.xpose.msra.mxu0 0.0
    %1312 = vmatpush.xpose.msra.mxu0 0.0
    %1313 = vmatpush.xpose.msra.mxu0 0.0
    %1314 = vmatpush.xpose.msra.mxu0 %v1297
    %1315 = vmatmul.f32.gmra.mxu0 %v1295
    %v1316 = vpop.f32.mrf.mxu0
    %v1317 = vadd.f32 %v74, %v1316
    %1318 = vdwg.mxu0
    %v1319 = vsel %vm227, %v1289, -inf
    %1320 = vmax.xlane.f32.xlu0 %v1319
    %v1321 = vpop.xlane.xlu0 %1320
    %v1322 = vsel %vm227, %v1317, -inf
    %1323 = vmax.xlane.f32.xlu0 %v1322
    %v1324 = vpop.xlane.xlu0 %1323
    %v1325 = vsub.f32 %v1289, %v1321
    %v1326 = vsub.f32 %v1317, %v1324
    %v1327 = vmul.f32 %v1325, 1.442695
    %v1328 = vpow.pop %v1327
    %v1329 = vmul.f32 %v1326, 1.442695
    %v1330 = vpow.pop %v1329
    %v1331 = vsel %vm227, %v1328, 0.0
    %1332 = vadd.xlane.f32.xlu0 %v1331
    %v1333 = vpop.xlane.xlu0 %1332
    %v1334 = vsel %vm227, %v1330, 0.0
    %1335 = vadd.xlane.f32.xlu0 %v1334
    %v1336 = vpop.xlane.xlu0 %1335
    %v1337 = vrcp.pop %v1333
    %v1338 = vmul.f32 %v1333, %v1337
    %v1339 = vsub.f32 1.0, %v1338
    %v1340 = vmul.f32 %v1337, %v1339
    %v1341 = vadd.f32 %v1337, %v1340
    %vm1342 = vweird.f32 %v1333
    %vm1343 = vweird.f32 %v1337
    %vm1344 = vmor %vm1342, %vm1343
    %v1345 = vsel %vm1344, %v1337, %v1341
    %v1346 = vand.u32 2147483647, %v1333
    %vm1347 = vcmp.eq.f32.partialorder %v1346, 8.507059e+37
    %v1348 = vand.u32 %v1333, 2147483648
    %v1349 = vor.u32 1.1754944e-38, %v1348
    %v1350 = vsel %vm1347, %v1349, %v1345
    %v1351 = vmul.f32 %v1328, %v1350
    %v1352 = vrcp.pop %v1336
    %v1353 = vmul.f32 %v1336, %v1352
    %v1354 = vsub.f32 1.0, %v1353
    %v1355 = vmul.f32 %v1352, %v1354
    %v1356 = vadd.f32 %v1352, %v1355
    %vm1357 = vweird.f32 %v1336
    %vm1358 = vweird.f32 %v1352
    %vm1359 = vmor %vm1357, %vm1358
    %v1360 = vsel %vm1359, %v1352, %v1356
    %v1361 = vand.u32 2147483647, %v1336
    %vm1362 = vcmp.eq.f32.partialorder %v1361, 8.507059e+37
    %v1363 = vand.u32 %v1336, 2147483648
    %v1364 = vor.u32 1.1754944e-38, %v1363
    %v1365 = vsel %vm1362, %v1364, %v1360
    %v1366 = vmul.f32 %v1330, %v1365
    %1367 = vrot.lane.b32.xlu0 %v1252, 64
    %v1368 = vpop.permute.xlu0 %1367
    %v1371 = vsel %vm227, %v1351, 0
    %1373 = vmatpush.msra.mxu0 0.0
    %1374 = vmatpush.msra.mxu0 0.0
    %1375 = vmatpush.msra.mxu0 0.0
    %1376 = vmatpush.msra.mxu0 0.0
    %1377 = vmatpush.msra.mxu0 0.0
    %1378 = vmatpush.msra.mxu0 0.0
    %1379 = vmatpush.msra.mxu0 0.0
    %1380 = vmatpush.msra.mxu0 0.0
    %1381 = vmatpush.msra.mxu0 0.0
    %1382 = vmatpush.msra.mxu0 0.0
    %1383 = vmatpush.msra.mxu0 0.0
    %1384 = vmatpush.msra.mxu0 0.0
    %1385 = vmatpush.msra.mxu0 0.0
    %1386 = vmatpush.msra.mxu0 0.0
    %1387 = vmatpush.msra.mxu0 0.0
    %1388 = vmatpush.msra.mxu0 %v1368
    %1389 = vmatmul.f32.gmra.mxu0 %v1371
    %v1390 = vpop.f32.mrf.mxu0
    %v1391 = vadd.f32 0.0, %v1390
    %1392 = vdwg.mxu0
    %1393 = vrot.lane.b32.xlu0 %v1255, 64
    %v1394 = vpop.permute.xlu0 %1393
    %v1397 = vsel %vm227, %v1366, 0
    %1399 = vmatpush.msra.mxu0 0.0
    %1400 = vmatpush.msra.mxu0 0.0
    %1401 = vmatpush.msra.mxu0 0.0
    %1402 = vmatpush.msra.mxu0 0.0
    %1403 = vmatpush.msra.mxu0 0.0
    %1404 = vmatpush.msra.mxu0 0.0
    %1405 = vmatpush.msra.mxu0 0.0
    %1406 = vmatpush.msra.mxu0 0.0
    %1407 = vmatpush.msra.mxu0 0.0
    %1408 = vmatpush.msra.mxu0 0.0
    %1409 = vmatpush.msra.mxu0 0.0
    %1410 = vmatpush.msra.mxu0 0.0
    %1411 = vmatpush.msra.mxu0 0.0
    %1412 = vmatpush.msra.mxu0 0.0
    %1413 = vmatpush.msra.mxu0 0.0
    %1414 = vmatpush.msra.mxu0 %v1394
    %1415 = vmatmul.f32.gmra.mxu0 %v1397
    %v1416 = vpop.f32.mrf.mxu0
    %v1417 = vadd.f32 0.0, %v1416
    %1418 = vdwg.mxu0
    %1419 = vrot.lane.b32.xlu0 %v1257, 120
    %v1420 = vpop.permute.xlu0 %1419
    %1421 = vrot.lane.b32.xlu0 %v1252, 88
    %v1422 = vpop.permute.xlu0 %1421
    %v1423 = vsel %vm227, %v1420, 0
    %v1425 = vsel %vm227, %v1422, 0
    %1427 = vmatpush.xpose.msra.mxu0 0.0
    %1428 = vmatpush.xpose.msra.mxu0 0.0
    %1429 = vmatpush.xpose.msra.mxu0 0.0
    %1430 = vmatpush.xpose.msra.mxu0 0.0
    %1431 = vmatpush.xpose.msra.mxu0 0.0
    %1432 = vmatpush.xpose.msra.mxu0 0.0
    %1433 = vmatpush.xpose.msra.mxu0 0.0
    %1434 = vmatpush.xpose.msra.mxu0 0.0
    %1435 = vmatpush.xpose.msra.mxu0 0.0
    %1436 = vmatpush.xpose.msra.mxu0 0.0
    %1437 = vmatpush.xpose.msra.mxu0 0.0
    %1438 = vmatpush.xpose.msra.mxu0 0.0
    %1439 = vmatpush.xpose.msra.mxu0 0.0
    %1440 = vmatpush.xpose.msra.mxu0 0.0
    %1441 = vmatpush.xpose.msra.mxu0 0.0
    %1442 = vmatpush.xpose.msra.mxu0 %v1425
    %1443 = vmatmul.f32.gmra.mxu0 %v1423
    %v1444 = vpop.f32.mrf.mxu0
    %v1445 = vadd.f32 %v73, %v1444
    %1446 = vdwg.mxu0
    %1447 = vrot.lane.b32.xlu0 %v1258, 120
    %v1448 = vpop.permute.xlu0 %1447
    %1449 = vrot.lane.b32.xlu0 %v1255, 88
    %v1450 = vpop.permute.xlu0 %1449
    %v1451 = vsel %vm227, %v1448, 0
    %v1453 = vsel %vm227, %v1450, 0
    %1455 = vmatpush.xpose.msra.mxu0 0.0
    %1456 = vmatpush.xpose.msra.mxu0 0.0
    %1457 = vmatpush.xpose.msra.mxu0 0.0
    %1458 = vmatpush.xpose.msra.mxu0 0.0
    %1459 = vmatpush.xpose.msra.mxu0 0.0
    %1460 = vmatpush.xpose.msra.mxu0 0.0
    %1461 = vmatpush.xpose.msra.mxu0 0.0
    %1462 = vmatpush.xpose.msra.mxu0 0.0
    %1463 = vmatpush.xpose.msra.mxu0 0.0
    %1464 = vmatpush.xpose.msra.mxu0 0.0
    %1465 = vmatpush.xpose.msra.mxu0 0.0
    %1466 = vmatpush.xpose.msra.mxu0 0.0
    %1467 = vmatpush.xpose.msra.mxu0 0.0
    %1468 = vmatpush.xpose.msra.mxu0 0.0
    %1469 = vmatpush.xpose.msra.mxu0 0.0
    %1470 = vmatpush.xpose.msra.mxu0 %v1453
    %1471 = vmatmul.f32.gmra.mxu0 %v1451
    %v1472 = vpop.f32.mrf.mxu0
    %v1473 = vadd.f32 %v74, %v1472
    %1474 = vdwg.mxu0
    %v1475 = vsel %vm227, %v1445, -inf
    %1476 = vmax.xlane.f32.xlu0 %v1475
    %v1477 = vpop.xlane.xlu0 %1476
    %v1478 = vsel %vm227, %v1473, -inf
    %1479 = vmax.xlane.f32.xlu0 %v1478
    %v1480 = vpop.xlane.xlu0 %1479
    %v1481 = vsub.f32 %v1445, %v1477
    %v1482 = vsub.f32 %v1473, %v1480
    %v1483 = vmul.f32 %v1481, 1.442695
    %v1484 = vpow.pop %v1483
    %v1485 = vmul.f32 %v1482, 1.442695
    %v1486 = vpow.pop %v1485
    %v1487 = vsel %vm227, %v1484, 0.0
    %1488 = vadd.xlane.f32.xlu0 %v1487
    %v1489 = vpop.xlane.xlu0 %1488
    %v1490 = vsel %vm227, %v1486, 0.0
    %1491 = vadd.xlane.f32.xlu0 %v1490
    %v1492 = vpop.xlane.xlu0 %1491
    %v1493 = vrcp.pop %v1489
    %v1494 = vmul.f32 %v1489, %v1493
    %v1495 = vsub.f32 1.0, %v1494
    %v1496 = vmul.f32 %v1493, %v1495
    %v1497 = vadd.f32 %v1493, %v1496
    %vm1498 = vweird.f32 %v1489
    %vm1499 = vweird.f32 %v1493
    %vm1500 = vmor %vm1498, %vm1499
    %v1501 = vsel %vm1500, %v1493, %v1497
    %v1502 = vand.u32 2147483647, %v1489
    %vm1503 = vcmp.eq.f32.partialorder %v1502, 8.507059e+37
    %v1504 = vand.u32 %v1489, 2147483648
    %v1505 = vor.u32 1.1754944e-38, %v1504
    %v1506 = vsel %vm1503, %v1505, %v1501
    %v1507 = vmul.f32 %v1484, %v1506
    %v1508 = vrcp.pop %v1492
    %v1509 = vmul.f32 %v1492, %v1508
    %v1510 = vsub.f32 1.0, %v1509
    %v1511 = vmul.f32 %v1508, %v1510
    %v1512 = vadd.f32 %v1508, %v1511
    %vm1513 = vweird.f32 %v1492
    %vm1514 = vweird.f32 %v1508
    %vm1515 = vmor %vm1513, %vm1514
    %v1516 = vsel %vm1515, %v1508, %v1512
    %v1517 = vand.u32 2147483647, %v1492
    %vm1518 = vcmp.eq.f32.partialorder %v1517, 8.507059e+37
    %v1519 = vand.u32 %v1492, 2147483648
    %v1520 = vor.u32 1.1754944e-38, %v1519
    %v1521 = vsel %vm1518, %v1520, %v1516
    %v1522 = vmul.f32 %v1486, %v1521
    %1523 = vrot.lane.b32.xlu0 %v1252, 56
    %v1524 = vpop.permute.xlu0 %1523
    %v1527 = vsel %vm227, %v1507, 0
    %1529 = vmatpush.msra.mxu0 0.0
    %1530 = vmatpush.msra.mxu0 0.0
    %1531 = vmatpush.msra.mxu0 0.0
    %1532 = vmatpush.msra.mxu0 0.0
    %1533 = vmatpush.msra.mxu0 0.0
    %1534 = vmatpush.msra.mxu0 0.0
    %1535 = vmatpush.msra.mxu0 0.0
    %1536 = vmatpush.msra.mxu0 0.0
    %1537 = vmatpush.msra.mxu0 0.0
    %1538 = vmatpush.msra.mxu0 0.0
    %1539 = vmatpush.msra.mxu0 0.0
    %1540 = vmatpush.msra.mxu0 0.0
    %1541 = vmatpush.msra.mxu0 0.0
    %1542 = vmatpush.msra.mxu0 0.0
    %1543 = vmatpush.msra.mxu0 0.0
    %1544 = vmatpush.msra.mxu0 %v1524
    %1545 = vmatmul.f32.gmra.mxu0 %v1527
    %v1546 = vpop.f32.mrf.mxu0
    %v1547 = vadd.f32 0.0, %v1546
    %1548 = vdwg.mxu0
    %1549 = vrot.lane.b32.xlu0 %v1255, 56
    %v1550 = vpop.permute.xlu0 %1549
    %v1553 = vsel %vm227, %v1522, 0
    %1555 = vmatpush.msra.mxu0 0.0
    %1556 = vmatpush.msra.mxu0 0.0
    %1557 = vmatpush.msra.mxu0 0.0
    %1558 = vmatpush.msra.mxu0 0.0
    %1559 = vmatpush.msra.mxu0 0.0
    %1560 = vmatpush.msra.mxu0 0.0
    %1561 = vmatpush.msra.mxu0 0.0
    %1562 = vmatpush.msra.mxu0 0.0
    %1563 = vmatpush.msra.mxu0 0.0
    %1564 = vmatpush.msra.mxu0 0.0
    %1565 = vmatpush.msra.mxu0 0.0
    %1566 = vmatpush.msra.mxu0 0.0
    %1567 = vmatpush.msra.mxu0 0.0
    %1568 = vmatpush.msra.mxu0 0.0
    %1569 = vmatpush.msra.mxu0 0.0
    %1570 = vmatpush.msra.mxu0 %v1550
    %1571 = vmatmul.f32.gmra.mxu0 %v1553
    %v1572 = vpop.f32.mrf.mxu0
    %v1573 = vadd.f32 0.0, %v1572
    %1574 = vdwg.mxu0
    %v1576 = vsel %vm227, %v1547, 0
    %v1579 = vsel %vm227, %v1573, 0
    %1581 = vmatpush.msra.mxu0 0.0
    %1582 = vmatpush.msra.mxu0 0.0
    %1583 = vmatpush.msra.mxu0 0.0
    %1584 = vmatpush.msra.mxu0 0.0
    %1585 = vmatpush.msra.mxu0 0.0
    %1586 = vmatpush.msra.mxu0 0.0
    %1587 = vmatpush.msra.mxu0 0.0
    %1588 = vmatpush.msra.mxu0 0.0
    %1589 = vmatpush.msra.mxu0 0.0
    %1590 = vmatpush.msra.mxu0 0.0
    %1591 = vmatpush.msra.mxu0 0.0
    %1592 = vmatpush.msra.mxu0 0.0
    %1593 = vmatpush.msra.mxu0 0.0
    %1594 = vmatpush.msra.mxu0 0.0
    %1595 = vmatpush.msra.mxu0 0.0
    %1596 = vmatpush.msra.mxu0 %v1260
    %1597 = vmatmul.f32.gmra.mxu0 %v1576
    %v1598 = vpop.f32.mrf.mxu0
    %v1599 = vadd.f32 0.0, %v1598
    %1600 = vmatmul.f32.gmra.mxu0 %v1579
    %v1601 = vpop.f32.mrf.mxu0
    %v1602 = vadd.f32 0.0, %v1601
    %1603 = vdwg.mxu0
    %v1605 = vsel %vm227, %v1391, 0
    %v1608 = vsel %vm227, %v1417, 0
    %1610 = vmatpush.msra.mxu0 0.0
    %1611 = vmatpush.msra.mxu0 0.0
    %1612 = vmatpush.msra.mxu0 0.0
    %1613 = vmatpush.msra.mxu0 0.0
    %1614 = vmatpush.msra.mxu0 0.0
    %1615 = vmatpush.msra.mxu0 0.0
    %1616 = vmatpush.msra.mxu0 0.0
    %1617 = vmatpush.msra.mxu0 0.0
    %1618 = vmatpush.msra.mxu0 0.0
    %1619 = vmatpush.msra.mxu0 0.0
    %1620 = vmatpush.msra.mxu0 0.0
    %1621 = vmatpush.msra.mxu0 0.0
    %1622 = vmatpush.msra.mxu0 0.0
    %1623 = vmatpush.msra.mxu0 0.0
    %1624 = vmatpush.msra.mxu0 0.0
    %1625 = vmatpush.msra.mxu0 %v1259
    %1626 = vmatmul.f32.gmra.mxu0 %v1605
    %v1627 = vpop.f32.mrf.mxu0
    %v1628 = vadd.f32 %v1599, %v1627
    %1629 = vmatmul.f32.gmra.mxu0 %v1608
    %v1630 = vpop.f32.mrf.mxu0
    %v1631 = vadd.f32 %v1602, %v1630
    %1632 = vdwg.mxu0
    %1633 = vrot.lane.b32.xlu0 %v1257, 112
    %v1634 = vpop.permute.xlu0 %1633
    %1635 = vrot.lane.b32.xlu0 %v1252, 80
    %v1636 = vpop.permute.xlu0 %1635
    %v1637 = vsel %vm227, %v1634, 0
    %v1639 = vsel %vm227, %v1636, 0
    %1641 = vmatpush.xpose.msra.mxu0 0.0
    %1642 = vmatpush.xpose.msra.mxu0 0.0
    %1643 = vmatpush.xpose.msra.mxu0 0.0
    %1644 = vmatpush.xpose.msra.mxu0 0.0
    %1645 = vmatpush.xpose.msra.mxu0 0.0
    %1646 = vmatpush.xpose.msra.mxu0 0.0
    %1647 = vmatpush.xpose.msra.mxu0 0.0
    %1648 = vmatpush.xpose.msra.mxu0 0.0
    %1649 = vmatpush.xpose.msra.mxu0 0.0
    %1650 = vmatpush.xpose.msra.mxu0 0.0
    %1651 = vmatpush.xpose.msra.mxu0 0.0
    %1652 = vmatpush.xpose.msra.mxu0 0.0
    %1653 = vmatpush.xpose.msra.mxu0 0.0
    %1654 = vmatpush.xpose.msra.mxu0 0.0
    %1655 = vmatpush.xpose.msra.mxu0 0.0
    %1656 = vmatpush.xpose.msra.mxu0 %v1639
    %1657 = vmatmul.f32.gmra.mxu0 %v1637
    %v1658 = vpop.f32.mrf.mxu0
    %v1659 = vadd.f32 %v73, %v1658
    %1660 = vdwg.mxu0
    %1661 = vrot.lane.b32.xlu0 %v1258, 112
    %v1662 = vpop.permute.xlu0 %1661
    %1663 = vrot.lane.b32.xlu0 %v1255, 80
    %v1664 = vpop.permute.xlu0 %1663
    %v1665 = vsel %vm227, %v1662, 0
    %v1667 = vsel %vm227, %v1664, 0
    %1669 = vmatpush.xpose.msra.mxu0 0.0
    %1670 = vmatpush.xpose.msra.mxu0 0.0
    %1671 = vmatpush.xpose.msra.mxu0 0.0
    %1672 = vmatpush.xpose.msra.mxu0 0.0
    %1673 = vmatpush.xpose.msra.mxu0 0.0
    %1674 = vmatpush.xpose.msra.mxu0 0.0
    %1675 = vmatpush.xpose.msra.mxu0 0.0
    %1676 = vmatpush.xpose.msra.mxu0 0.0
    %1677 = vmatpush.xpose.msra.mxu0 0.0
    %1678 = vmatpush.xpose.msra.mxu0 0.0
    %1679 = vmatpush.xpose.msra.mxu0 0.0
    %1680 = vmatpush.xpose.msra.mxu0 0.0
    %1681 = vmatpush.xpose.msra.mxu0 0.0
    %1682 = vmatpush.xpose.msra.mxu0 0.0
    %1683 = vmatpush.xpose.msra.mxu0 0.0
    %1684 = vmatpush.xpose.msra.mxu0 %v1667
    %1685 = vmatmul.f32.gmra.mxu0 %v1665
    %v1686 = vpop.f32.mrf.mxu0
    %v1687 = vadd.f32 %v74, %v1686
    %1688 = vdwg.mxu0
    %v1689 = vsel %vm227, %v1659, -inf
    %1690 = vmax.xlane.f32.xlu0 %v1689
    %v1691 = vpop.xlane.xlu0 %1690
    %v1692 = vsel %vm227, %v1687, -inf
    %1693 = vmax.xlane.f32.xlu0 %v1692
    %v1694 = vpop.xlane.xlu0 %1693
    %v1695 = vsub.f32 %v1659, %v1691
    %v1696 = vsub.f32 %v1687, %v1694
    %v1697 = vmul.f32 %v1695, 1.442695
    %v1698 = vpow.pop %v1697
    %v1699 = vmul.f32 %v1696, 1.442695
    %v1700 = vpow.pop %v1699
    %v1701 = vsel %vm227, %v1698, 0.0
    %1702 = vadd.xlane.f32.xlu0 %v1701
    %v1703 = vpop.xlane.xlu0 %1702
    %v1704 = vsel %vm227, %v1700, 0.0
    %1705 = vadd.xlane.f32.xlu0 %v1704
    %v1706 = vpop.xlane.xlu0 %1705
    %v1707 = vrcp.pop %v1703
    %v1708 = vmul.f32 %v1703, %v1707
    %v1709 = vsub.f32 1.0, %v1708
    %v1710 = vmul.f32 %v1707, %v1709
    %v1711 = vadd.f32 %v1707, %v1710
    %vm1712 = vweird.f32 %v1703
    %vm1713 = vweird.f32 %v1707
    %vm1714 = vmor %vm1712, %vm1713
    %v1715 = vsel %vm1714, %v1707, %v1711
    %v1716 = vand.u32 2147483647, %v1703
    %vm1717 = vcmp.eq.f32.partialorder %v1716, 8.507059e+37
    %v1718 = vand.u32 %v1703, 2147483648
    %v1719 = vor.u32 1.1754944e-38, %v1718
    %v1720 = vsel %vm1717, %v1719, %v1715
    %v1721 = vmul.f32 %v1698, %v1720
    %v1722 = vrcp.pop %v1706
    %v1723 = vmul.f32 %v1706, %v1722
    %v1724 = vsub.f32 1.0, %v1723
    %v1725 = vmul.f32 %v1722, %v1724
    %v1726 = vadd.f32 %v1722, %v1725
    %vm1727 = vweird.f32 %v1706
    %vm1728 = vweird.f32 %v1722
    %vm1729 = vmor %vm1727, %vm1728
    %v1730 = vsel %vm1729, %v1722, %v1726
    %v1731 = vand.u32 2147483647, %v1706
    %vm1732 = vcmp.eq.f32.partialorder %v1731, 8.507059e+37
    %v1733 = vand.u32 %v1706, 2147483648
    %v1734 = vor.u32 1.1754944e-38, %v1733
    %v1735 = vsel %vm1732, %v1734, %v1730
    %v1736 = vmul.f32 %v1700, %v1735
    %1737 = vrot.lane.b32.xlu0 %v1252, 48
    %v1738 = vpop.permute.xlu0 %1737
    %v1741 = vsel %vm227, %v1721, 0
    %1743 = vmatpush.msra.mxu0 0.0
    %1744 = vmatpush.msra.mxu0 0.0
    %1745 = vmatpush.msra.mxu0 0.0
    %1746 = vmatpush.msra.mxu0 0.0
    %1747 = vmatpush.msra.mxu0 0.0
    %1748 = vmatpush.msra.mxu0 0.0
    %1749 = vmatpush.msra.mxu0 0.0
    %1750 = vmatpush.msra.mxu0 0.0
    %1751 = vmatpush.msra.mxu0 0.0
    %1752 = vmatpush.msra.mxu0 0.0
    %1753 = vmatpush.msra.mxu0 0.0
    %1754 = vmatpush.msra.mxu0 0.0
    %1755 = vmatpush.msra.mxu0 0.0
    %1756 = vmatpush.msra.mxu0 0.0
    %1757 = vmatpush.msra.mxu0 0.0
    %1758 = vmatpush.msra.mxu0 %v1738
    %1759 = vmatmul.f32.gmra.mxu0 %v1741
    %v1760 = vpop.f32.mrf.mxu0
    %v1761 = vadd.f32 0.0, %v1760
    %1762 = vdwg.mxu0
    %1763 = vrot.lane.b32.xlu0 %v1255, 48
    %v1764 = vpop.permute.xlu0 %1763
    %v1767 = vsel %vm227, %v1736, 0
    %1769 = vmatpush.msra.mxu0 0.0
    %1770 = vmatpush.msra.mxu0 0.0
    %1771 = vmatpush.msra.mxu0 0.0
    %1772 = vmatpush.msra.mxu0 0.0
    %1773 = vmatpush.msra.mxu0 0.0
    %1774 = vmatpush.msra.mxu0 0.0
    %1775 = vmatpush.msra.mxu0 0.0
    %1776 = vmatpush.msra.mxu0 0.0
    %1777 = vmatpush.msra.mxu0 0.0
    %1778 = vmatpush.msra.mxu0 0.0
    %1779 = vmatpush.msra.mxu0 0.0
    %1780 = vmatpush.msra.mxu0 0.0
    %1781 = vmatpush.msra.mxu0 0.0
    %1782 = vmatpush.msra.mxu0 0.0
    %1783 = vmatpush.msra.mxu0 0.0
    %1784 = vmatpush.msra.mxu0 %v1764
    %1785 = vmatmul.f32.gmra.mxu0 %v1767
    %v1786 = vpop.f32.mrf.mxu0
    %v1787 = vadd.f32 0.0, %v1786
    %1788 = vdwg.mxu0
    %v1790 = vsel %vm227, %v1761, 0
    %v1793 = vsel %vm227, %v1787, 0
    %1795 = vmatpush.msra.mxu0 0.0
    %1796 = vmatpush.msra.mxu0 0.0
    %1797 = vmatpush.msra.mxu0 0.0
    %1798 = vmatpush.msra.mxu0 0.0
    %1799 = vmatpush.msra.mxu0 0.0
    %1800 = vmatpush.msra.mxu0 0.0
    %1801 = vmatpush.msra.mxu0 0.0
    %1802 = vmatpush.msra.mxu0 0.0
    %1803 = vmatpush.msra.mxu0 0.0
    %1804 = vmatpush.msra.mxu0 0.0
    %1805 = vmatpush.msra.mxu0 0.0
    %1806 = vmatpush.msra.mxu0 0.0
    %1807 = vmatpush.msra.mxu0 0.0
    %1808 = vmatpush.msra.mxu0 0.0
    %1809 = vmatpush.msra.mxu0 0.0
    %1810 = vmatpush.msra.mxu0 %v1261
    %1811 = vmatmul.f32.gmra.mxu0 %v1790
    %v1812 = vpop.f32.mrf.mxu0
    %v1813 = vadd.f32 0.0, %v1812
    %1814 = vmatmul.f32.gmra.mxu0 %v1793
    %v1815 = vpop.f32.mrf.mxu0
    %v1816 = vadd.f32 0.0, %v1815
    %1817 = vdwg.mxu0
    %v1818 = vadd.f32 %v1628, %v1813
    %v1819 = vadd.f32 %v1631, %v1816
    %1820 = vrot.lane.b32.xlu0 %v1257, 104
    %v1821 = vpop.permute.xlu0 %1820
    %1822 = vrot.lane.b32.xlu0 %v1252, 72
    %v1823 = vpop.permute.xlu0 %1822
    %v1824 = vsel %vm227, %v1821, 0
    %v1826 = vsel %vm227, %v1823, 0
    %1828 = vmatpush.xpose.msra.mxu0 0.0
    %1829 = vmatpush.xpose.msra.mxu0 0.0
    %1830 = vmatpush.xpose.msra.mxu0 0.0
    %1831 = vmatpush.xpose.msra.mxu0 0.0
    %1832 = vmatpush.xpose.msra.mxu0 0.0
    %1833 = vmatpush.xpose.msra.mxu0 0.0
    %1834 = vmatpush.xpose.msra.mxu0 0.0
    %1835 = vmatpush.xpose.msra.mxu0 0.0
    %1836 = vmatpush.xpose.msra.mxu0 0.0
    %1837 = vmatpush.xpose.msra.mxu0 0.0
    %1838 = vmatpush.xpose.msra.mxu0 0.0
    %1839 = vmatpush.xpose.msra.mxu0 0.0
    %1840 = vmatpush.xpose.msra.mxu0 0.0
    %1841 = vmatpush.xpose.msra.mxu0 0.0
    %1842 = vmatpush.xpose.msra.mxu0 0.0
    %1843 = vmatpush.xpose.msra.mxu0 %v1826
    %1844 = vmatmul.f32.gmra.mxu0 %v1824
    %v1845 = vpop.f32.mrf.mxu0
    %v1846 = vadd.f32 %v73, %v1845
    %1847 = vdwg.mxu0
    %1848 = vrot.lane.b32.xlu0 %v1258, 104
    %v1849 = vpop.permute.xlu0 %1848
    %1850 = vrot.lane.b32.xlu0 %v1255, 72
    %v1851 = vpop.permute.xlu0 %1850
    %v1852 = vsel %vm227, %v1849, 0
    %v1854 = vsel %vm227, %v1851, 0
    %1856 = vmatpush.xpose.msra.mxu0 0.0
    %1857 = vmatpush.xpose.msra.mxu0 0.0
    %1858 = vmatpush.xpose.msra.mxu0 0.0
    %1859 = vmatpush.xpose.msra.mxu0 0.0
    %1860 = vmatpush.xpose.msra.mxu0 0.0
    %1861 = vmatpush.xpose.msra.mxu0 0.0
    %1862 = vmatpush.xpose.msra.mxu0 0.0
    %1863 = vmatpush.xpose.msra.mxu0 0.0
    %1864 = vmatpush.xpose.msra.mxu0 0.0
    %1865 = vmatpush.xpose.msra.mxu0 0.0
    %1866 = vmatpush.xpose.msra.mxu0 0.0
    %1867 = vmatpush.xpose.msra.mxu0 0.0
    %1868 = vmatpush.xpose.msra.mxu0 0.0
    %1869 = vmatpush.xpose.msra.mxu0 0.0
    %1870 = vmatpush.xpose.msra.mxu0 0.0
    %1871 = vmatpush.xpose.msra.mxu0 %v1854
    %1872 = vmatmul.f32.gmra.mxu0 %v1852
    %v1873 = vpop.f32.mrf.mxu0
    %v1874 = vadd.f32 %v74, %v1873
    %1875 = vdwg.mxu0
    %v1876 = vsel %vm227, %v1846, -inf
    %1877 = vmax.xlane.f32.xlu0 %v1876
    %v1878 = vpop.xlane.xlu0 %1877
    %v1879 = vsel %vm227, %v1874, -inf
    %1880 = vmax.xlane.f32.xlu0 %v1879
    %v1881 = vpop.xlane.xlu0 %1880
    %v1882 = vsub.f32 %v1846, %v1878
    %v1883 = vsub.f32 %v1874, %v1881
    %v1884 = vmul.f32 %v1882, 1.442695
    %v1885 = vpow.pop %v1884
    %v1886 = vmul.f32 %v1883, 1.442695
    %v1887 = vpow.pop %v1886
    %v1888 = vsel %vm227, %v1885, 0.0
    %1889 = vadd.xlane.f32.xlu0 %v1888
    %v1890 = vpop.xlane.xlu0 %1889
    %v1891 = vsel %vm227, %v1887, 0.0
    %1892 = vadd.xlane.f32.xlu0 %v1891
    %v1893 = vpop.xlane.xlu0 %1892
    %v1894 = vrcp.pop %v1890
    %v1895 = vmul.f32 %v1890, %v1894
    %v1896 = vsub.f32 1.0, %v1895
    %v1897 = vmul.f32 %v1894, %v1896
    %v1898 = vadd.f32 %v1894, %v1897
    %vm1899 = vweird.f32 %v1890
    %vm1900 = vweird.f32 %v1894
    %vm1901 = vmor %vm1899, %vm1900
    %v1902 = vsel %vm1901, %v1894, %v1898
    %v1903 = vand.u32 2147483647, %v1890
    %vm1904 = vcmp.eq.f32.partialorder %v1903, 8.507059e+37
    %v1905 = vand.u32 %v1890, 2147483648
    %v1906 = vor.u32 1.1754944e-38, %v1905
    %v1907 = vsel %vm1904, %v1906, %v1902
    %v1908 = vmul.f32 %v1885, %v1907
    %v1909 = vrcp.pop %v1893
    %v1910 = vmul.f32 %v1893, %v1909
    %v1911 = vsub.f32 1.0, %v1910
    %v1912 = vmul.f32 %v1909, %v1911
    %v1913 = vadd.f32 %v1909, %v1912
    %vm1914 = vweird.f32 %v1893
    %vm1915 = vweird.f32 %v1909
    %vm1916 = vmor %vm1914, %vm1915
    %v1917 = vsel %vm1916, %v1909, %v1913
    %v1918 = vand.u32 2147483647, %v1893
    %vm1919 = vcmp.eq.f32.partialorder %v1918, 8.507059e+37
    %v1920 = vand.u32 %v1893, 2147483648
    %v1921 = vor.u32 1.1754944e-38, %v1920
    %v1922 = vsel %vm1919, %v1921, %v1917
    %v1923 = vmul.f32 %v1887, %v1922
    %1924 = vrot.lane.b32.xlu0 %v1252, 40
    %v1925 = vpop.permute.xlu0 %1924
    %v1928 = vsel %vm227, %v1908, 0
    %1930 = vmatpush.msra.mxu0 0.0
    %1931 = vmatpush.msra.mxu0 0.0
    %1932 = vmatpush.msra.mxu0 0.0
    %1933 = vmatpush.msra.mxu0 0.0
    %1934 = vmatpush.msra.mxu0 0.0
    %1935 = vmatpush.msra.mxu0 0.0
    %1936 = vmatpush.msra.mxu0 0.0
    %1937 = vmatpush.msra.mxu0 0.0
    %1938 = vmatpush.msra.mxu0 0.0
    %1939 = vmatpush.msra.mxu0 0.0
    %1940 = vmatpush.msra.mxu0 0.0
    %1941 = vmatpush.msra.mxu0 0.0
    %1942 = vmatpush.msra.mxu0 0.0
    %1943 = vmatpush.msra.mxu0 0.0
    %1944 = vmatpush.msra.mxu0 0.0
    %1945 = vmatpush.msra.mxu0 %v1925
    %1946 = vmatmul.f32.gmra.mxu0 %v1928
    %v1947 = vpop.f32.mrf.mxu0
    %v1948 = vadd.f32 0.0, %v1947
    %1949 = vdwg.mxu0
    %1950 = vrot.lane.b32.xlu0 %v1255, 40
    %v1951 = vpop.permute.xlu0 %1950
    %v1954 = vsel %vm227, %v1923, 0
    %1956 = vmatpush.msra.mxu0 0.0
    %1957 = vmatpush.msra.mxu0 0.0
    %1958 = vmatpush.msra.mxu0 0.0
    %1959 = vmatpush.msra.mxu0 0.0
    %1960 = vmatpush.msra.mxu0 0.0
    %1961 = vmatpush.msra.mxu0 0.0
    %1962 = vmatpush.msra.mxu0 0.0
    %1963 = vmatpush.msra.mxu0 0.0
    %1964 = vmatpush.msra.mxu0 0.0
    %1965 = vmatpush.msra.mxu0 0.0
    %1966 = vmatpush.msra.mxu0 0.0
    %1967 = vmatpush.msra.mxu0 0.0
    %1968 = vmatpush.msra.mxu0 0.0
    %1969 = vmatpush.msra.mxu0 0.0
    %1970 = vmatpush.msra.mxu0 0.0
    %1971 = vmatpush.msra.mxu0 %v1951
    %1972 = vmatmul.f32.gmra.mxu0 %v1954
    %v1973 = vpop.f32.mrf.mxu0
    %v1974 = vadd.f32 0.0, %v1973
    %1975 = vdwg.mxu0
    %v1977 = vsel %vm227, %v1948, 0
    %v1980 = vsel %vm227, %v1974, 0
    %1982 = vmatpush.msra.mxu0 0.0
    %1983 = vmatpush.msra.mxu0 0.0
    %1984 = vmatpush.msra.mxu0 0.0
    %1985 = vmatpush.msra.mxu0 0.0
    %1986 = vmatpush.msra.mxu0 0.0
    %1987 = vmatpush.msra.mxu0 0.0
    %1988 = vmatpush.msra.mxu0 0.0
    %1989 = vmatpush.msra.mxu0 0.0
    %1990 = vmatpush.msra.mxu0 0.0
    %1991 = vmatpush.msra.mxu0 0.0
    %1992 = vmatpush.msra.mxu0 0.0
    %1993 = vmatpush.msra.mxu0 0.0
    %1994 = vmatpush.msra.mxu0 0.0
    %1995 = vmatpush.msra.mxu0 0.0
    %1996 = vmatpush.msra.mxu0 0.0
    %1997 = vmatpush.msra.mxu0 %v1262
    %1998 = vmatmul.f32.gmra.mxu0 %v1977
    %v1999 = vpop.f32.mrf.mxu0
    %v2000 = vadd.f32 0.0, %v1999
    %2001 = vmatmul.f32.gmra.mxu0 %v1980
    %v2002 = vpop.f32.mrf.mxu0
    %v2003 = vadd.f32 0.0, %v2002
    %2004 = vdwg.mxu0
    %v2005 = vadd.f32 %v1818, %v2000
    %v2006 = vadd.f32 %v1819, %v2003
    %v2007 = vadd.f32 %v1131, %v2005
    %v2008 = vadd.f32 %v1132, %v2006
    %v2009 = vperm.slane %v1134, 0
    %v2010 = vadd.f32 %v2007, %v2009
    %v2011 = vadd.f32 %v2008, %v2009
    %v2012 = vsel %vm87, %v2010, 0.0
    %2013 = vadd.xlane.f32.xlu0 %v2012
    %v2014 = vpop.xlane.xlu0 %2013
    %v2015 = vsel %vm87, %v2011, 0.0
    %2016 = vadd.xlane.f32.xlu0 %v2015
    %v2017 = vpop.xlane.xlu0 %2016
    %v2018 = vmul.f32 %v2014, %v100
    %v2019 = vmul.f32 %v2017, %v100
    %v2020 = vsub.f32 %v2010, %v2018
    %v2021 = vsub.f32 %v2011, %v2019
    %v2022 = vmul.f32 %v2020, %v2020
    %v2023 = vmul.f32 %v2021, %v2021
    %v2024 = vsel %vm87, %v2022, 0.0
    %2025 = vadd.xlane.f32.xlu0 %v2024
    %v2026 = vpop.xlane.xlu0 %2025
    %v2027 = vsel %vm87, %v2023, 0.0
    %2028 = vadd.xlane.f32.xlu0 %v2027
    %v2029 = vpop.xlane.xlu0 %2028
    %v2030 = vmul.f32 %v2026, %v119
    %v2031 = vmul.f32 %v2029, %v119
    %v2032 = vperm.slane %v1139, 0
    %v2033 = vmul.f32 %v2032, %v2020
    %v2034 = vmul.f32 %v2032, %v2021
    %v2035 = vrsqrt.pop %v2030
    %v2036 = vmul.f32 %v2035, %v2030
    %v2037 = vmul.f32 %v2036, %v2035
    %v2038 = vmul.f32 0.5, %v2037
    %v2039 = vsub.f32 1.5, %v2038
    %v2040 = vmul.f32 %v2035, %v2039
    %v2041 = vmul.f32 %v2030, %v2040
    %vm2042 = vcmp.eq.f32.partialorder %v2030, inf
    %v2043 = vsel %vm2042, %v2030, %v2041
    %vm2044 = vcmp.eq.f32.partialorder %v2030, 0.0
    %v2045 = vand.u32 %v2030, 2147483648
    %v2046 = vsel %vm2044, %v2045, %v2043
    %v2047 = vrsqrt.pop %v2031
    %v2048 = vmul.f32 %v2047, %v2031
    %v2049 = vmul.f32 %v2048, %v2047
    %v2050 = vmul.f32 0.5, %v2049
    %v2051 = vsub.f32 1.5, %v2050
    %v2052 = vmul.f32 %v2047, %v2051
    %v2053 = vmul.f32 %v2031, %v2052
    %vm2054 = vcmp.eq.f32.partialorder %v2031, inf
    %v2055 = vsel %vm2054, %v2031, %v2053
    %vm2056 = vcmp.eq.f32.partialorder %v2031, 0.0
    %v2057 = vand.u32 %v2031, 2147483648
    %v2058 = vsel %vm2056, %v2057, %v2055
    %v2059 = vadd.f32 %v2046, 1e-06
    %v2060 = vadd.f32 %v2058, 1e-06
    %v2061 = vrcp.pop %v2059
    %v2062 = vmul.f32 %v2059, %v2061
    %v2063 = vsub.f32 1.0, %v2062
    %v2064 = vmul.f32 %v2061, %v2063
    %v2065 = vadd.f32 %v2061, %v2064
    %vm2066 = vweird.f32 %v2059
    %vm2067 = vweird.f32 %v2061
    %vm2068 = vmor %vm2066, %vm2067
    %v2069 = vsel %vm2068, %v2061, %v2065
    %v2070 = vand.u32 2147483647, %v2059
    %vm2071 = vcmp.eq.f32.partialorder %v2070, 8.507059e+37
    %v2072 = vand.u32 %v2059, 2147483648
    %v2073 = vor.u32 1.1754944e-38, %v2072
    %v2074 = vsel %vm2071, %v2073, %v2069
    %v2075 = vmul.f32 %v2033, %v2074
    %v2076 = vrcp.pop %v2060
    %v2077 = vmul.f32 %v2060, %v2076
    %v2078 = vsub.f32 1.0, %v2077
    %v2079 = vmul.f32 %v2076, %v2078
    %v2080 = vadd.f32 %v2076, %v2079
    %vm2081 = vweird.f32 %v2060
    %vm2082 = vweird.f32 %v2076
    %vm2083 = vmor %vm2081, %vm2082
    %v2084 = vsel %vm2083, %v2076, %v2080
    %v2085 = vand.u32 2147483647, %v2060
    %vm2086 = vcmp.eq.f32.partialorder %v2085, 8.507059e+37
    %v2087 = vand.u32 %v2060, 2147483648
    %v2088 = vor.u32 1.1754944e-38, %v2087
    %v2089 = vsel %vm2086, %v2088, %v2084
    %v2090 = vmul.f32 %v2034, %v2089
    %v2091 = vperm.slane %v1140, 0
    %v2092 = vadd.f32 %v2075, %v2091
    %v2093 = vadd.f32 %v2090, %v2091
    %v2094 = vld [vmem:[#allocation7 + $0xd8] sm:$0xff]
    %v2095 = vld [vmem:[#allocation7 + $0xe0] sm:$0xff]
    %v2096 = vld [vmem:[#allocation7 + $0xe8] sm:$0xff]
    %v2097 = vld [vmem:[#allocation7 + $0xf0] sm:$0xff]
    %v2098 = vperm.slane %v1135, 0
    %v2100 = vsel %vm87, %v2092, 0
    %v2103 = vsel %vm87, %v2093, 0
    %2105 = vmatpush.msra.mxu0 0.0
    %2106 = vmatpush.msra.mxu0 0.0
    %2107 = vmatpush.msra.mxu0 0.0
    %2108 = vmatpush.msra.mxu0 0.0
    %2109 = vmatpush.msra.mxu0 0.0
    %2110 = vmatpush.msra.mxu0 0.0
    %2111 = vmatpush.msra.mxu0 0.0
    %2112 = vmatpush.msra.mxu0 0.0
    %2113 = vmatpush.msra.mxu0 0.0
    %2114 = vmatpush.msra.mxu0 0.0
    %2115 = vmatpush.msra.mxu0 0.0
    %2116 = vmatpush.msra.mxu0 0.0
    %2117 = vmatpush.msra.mxu0 %v2097
    %2118 = vmatpush.msra.mxu0 %v2096
    %2119 = vmatpush.msra.mxu0 %v2095
    %2120 = vmatpush.msra.mxu0 %v2094
    %2121 = vmatmul.f32.gmra.mxu0 %v2100
    %v2122 = vpop.f32.mrf.mxu0
    %v2123 = vadd.f32 %v2098, %v2122
    %2124 = vmatmul.f32.gmra.mxu0 %v2103
    %v2125 = vpop.f32.mrf.mxu0
    %v2126 = vadd.f32 %v2098, %v2125
    %2127 = vdwg.mxu0
    %v2128 = vmax.f32 %v2123, 0.0
    %v2129 = vmax.f32 %v2126, 0.0
    %v2130 = vld [vmem:[#allocation7 + $0xf8] sm:$0xff]
    %v2131 = vld [vmem:[#allocation7 + $0x100] sm:$0xff]
    %v2132 = vld [vmem:[#allocation7 + $0x108] sm:$0xff]
    %v2133 = vld [vmem:[#allocation7 + $0x110] sm:$0xff]
    %v2134 = vld [vmem:[#allocation7 + $0x118] sm:$0xff]
    %v2135 = vld [vmem:[#allocation7 + $0x120] sm:$0xff]
    %v2137 = vsel %vm1098, %v2128, 0
    %v2140 = vsel %vm1098, %v2129, 0
    %2142 = vmatpush.msra.mxu0 0.0
    %2143 = vmatpush.msra.mxu0 0.0
    %2144 = vmatpush.msra.mxu0 0.0
    %2145 = vmatpush.msra.mxu0 0.0
    %2146 = vmatpush.msra.mxu0 0.0
    %2147 = vmatpush.msra.mxu0 0.0
    %2148 = vmatpush.msra.mxu0 0.0
    %2149 = vmatpush.msra.mxu0 0.0
    %2150 = vmatpush.msra.mxu0 0.0
    %2151 = vmatpush.msra.mxu0 0.0
    %2152 = vmatpush.msra.mxu0 %v2135
    %2153 = vmatpush.msra.mxu0 %v2134
    %2154 = vmatpush.msra.mxu0 %v2133
    %2155 = vmatpush.msra.mxu0 %v2132
    %2156 = vmatpush.msra.mxu0 %v2131
    %2157 = vmatpush.msra.mxu0 %v2130
    %2158 = vmatmul.f32.gmra.mxu0 %v2137
    %v2159 = vpop.f32.mrf.mxu0
    %v2160 = vadd.f32 0.0, %v2159
    %2161 = vmatmul.f32.gmra.mxu0 %v2140
    %v2162 = vpop.f32.mrf.mxu0
    %v2163 = vadd.f32 0.0, %v2162
    %2164 = vdwg.mxu0
    %v2165 = vadd.f32 %v2010, %v2160
    %v2166 = vadd.f32 %v2011, %v2163
    %v2167 = vperm.slane %v1136, 0
    %v2168 = vadd.f32 %v2165, %v2167
    %v2169 = vadd.f32 %v2166, %v2167
    %v2170 = vld [vmem:[#allocation7 + $0x158] sm:$0x1]
    %v2171 = vld [vmem:[#allocation7 + $0x159] sm:$0x1]
    %v2172 = vsel %vm87, %v2168, 0.0
    %2173 = vadd.xlane.f32.xlu0 %v2172
    %v2174 = vpop.xlane.xlu0 %2173
    %v2175 = vsel %vm87, %v2169, 0.0
    %2176 = vadd.xlane.f32.xlu0 %v2175
    %v2177 = vpop.xlane.xlu0 %2176
    %v2178 = vmul.f32 %v2174, %v100
    %v2179 = vmul.f32 %v2177, %v100
    %v2180 = vsub.f32 %v2168, %v2178
    %v2181 = vsub.f32 %v2169, %v2179
    %v2182 = vmul.f32 %v2180, %v2180
    %v2183 = vmul.f32 %v2181, %v2181
    %v2184 = vsel %vm87, %v2182, 0.0
    %2185 = vadd.xlane.f32.xlu0 %v2184
    %v2186 = vpop.xlane.xlu0 %2185
    %v2187 = vsel %vm87, %v2183, 0.0
    %2188 = vadd.xlane.f32.xlu0 %v2187
    %v2189 = vpop.xlane.xlu0 %2188
    %v2190 = vmul.f32 %v2186, %v119
    %v2191 = vmul.f32 %v2189, %v119
    %v2192 = vperm.slane %v2170, 0
    %v2193 = vmul.f32 %v2192, %v2180
    %v2194 = vmul.f32 %v2192, %v2181
    %v2195 = vrsqrt.pop %v2190
    %v2196 = vmul.f32 %v2195, %v2190
    %v2197 = vmul.f32 %v2196, %v2195
    %v2198 = vmul.f32 0.5, %v2197
    %v2199 = vsub.f32 1.5, %v2198
    %v2200 = vmul.f32 %v2195, %v2199
    %v2201 = vmul.f32 %v2190, %v2200
    %vm2202 = vcmp.eq.f32.partialorder %v2190, inf
    %v2203 = vsel %vm2202, %v2190, %v2201
    %vm2204 = vcmp.eq.f32.partialorder %v2190, 0.0
    %v2205 = vand.u32 %v2190, 2147483648
    %v2206 = vsel %vm2204, %v2205, %v2203
    %v2207 = vrsqrt.pop %v2191
    %v2208 = vmul.f32 %v2207, %v2191
    %v2209 = vmul.f32 %v2208, %v2207
    %v2210 = vmul.f32 0.5, %v2209
    %v2211 = vsub.f32 1.5, %v2210
    %v2212 = vmul.f32 %v2207, %v2211
    %v2213 = vmul.f32 %v2191, %v2212
    %vm2214 = vcmp.eq.f32.partialorder %v2191, inf
    %v2215 = vsel %vm2214, %v2191, %v2213
    %vm2216 = vcmp.eq.f32.partialorder %v2191, 0.0
    %v2217 = vand.u32 %v2191, 2147483648
    %v2218 = vsel %vm2216, %v2217, %v2215
    %v2219 = vadd.f32 %v2206, 1e-06
    %v2220 = vadd.f32 %v2218, 1e-06
    %v2221 = vrcp.pop %v2219
    %v2222 = vmul.f32 %v2219, %v2221
    %v2223 = vsub.f32 1.0, %v2222
    %v2224 = vmul.f32 %v2221, %v2223
    %v2225 = vadd.f32 %v2221, %v2224
    %vm2226 = vweird.f32 %v2219
    %vm2227 = vweird.f32 %v2221
    %vm2228 = vmor %vm2226, %vm2227
    %v2229 = vsel %vm2228, %v2221, %v2225
    %v2230 = vand.u32 2147483647, %v2219
    %vm2231 = vcmp.eq.f32.partialorder %v2230, 8.507059e+37
    %v2232 = vand.u32 %v2219, 2147483648
    %v2233 = vor.u32 1.1754944e-38, %v2232
    %v2234 = vsel %vm2231, %v2233, %v2229
    %v2235 = vmul.f32 %v2193, %v2234
    %v2236 = vrcp.pop %v2220
    %v2237 = vmul.f32 %v2220, %v2236
    %v2238 = vsub.f32 1.0, %v2237
    %v2239 = vmul.f32 %v2236, %v2238
    %v2240 = vadd.f32 %v2236, %v2239
    %vm2241 = vweird.f32 %v2220
    %vm2242 = vweird.f32 %v2236
    %vm2243 = vmor %vm2241, %vm2242
    %v2244 = vsel %vm2243, %v2236, %v2240
    %v2245 = vand.u32 2147483647, %v2220
    %vm2246 = vcmp.eq.f32.partialorder %v2245, 8.507059e+37
    %v2247 = vand.u32 %v2220, 2147483648
    %v2248 = vor.u32 1.1754944e-38, %v2247
    %v2249 = vsel %vm2246, %v2248, %v2244
    %v2250 = vmul.f32 %v2194, %v2249
    %v2251 = vperm.slane %v2171, 0
    %v2252 = vadd.f32 %v2235, %v2251
    %v2253 = vadd.f32 %v2250, %v2251
    %v2254 = vld [vmem:[#allocation7 + $0x130] sm:$0xff]
    %v2255 = vld [vmem:[#allocation7 + $0x138] sm:$0xff]
    %v2256 = vld [vmem:[#allocation7 + $0x140] sm:$0xff]
    %v2257 = vld [vmem:[#allocation7 + $0x148] sm:$0xff]
    %v2259 = vsel %vm87, %v2252, 0
    %v2262 = vsel %vm87, %v2253, 0
    %2264 = vmatpush.msra.mxu0 0.0
    %2265 = vmatpush.msra.mxu0 0.0
    %2266 = vmatpush.msra.mxu0 0.0
    %2267 = vmatpush.msra.mxu0 0.0
    %2268 = vmatpush.msra.mxu0 0.0
    %2269 = vmatpush.msra.mxu0 0.0
    %2270 = vmatpush.msra.mxu0 0.0
    %2271 = vmatpush.msra.mxu0 0.0
    %2272 = vmatpush.msra.mxu0 0.0
    %2273 = vmatpush.msra.mxu0 0.0
    %2274 = vmatpush.msra.mxu0 0.0
    %2275 = vmatpush.msra.mxu0 0.0
    %2276 = vmatpush.msra.mxu0 %v2257
    %2277 = vmatpush.msra.mxu0 %v2256
    %2278 = vmatpush.msra.mxu0 %v2255
    %2279 = vmatpush.msra.mxu0 %v2254
    %2280 = vmatmul.f32.gmra.mxu0 %v2259
    %v2281 = vpop.f32.mrf.mxu0
    %v2282 = vadd.f32 0.0, %v2281
    %2283 = vmatmul.f32.gmra.mxu0 %v2262
    %v2284 = vpop.f32.mrf.mxu0
    %v2285 = vadd.f32 0.0, %v2284
    %2286 = vdwg.mxu0
    %v2287 = vtanh.pop %v2282
    %v2288 = vtanh.pop %v2285
    %v2289 = vld [vmem:[#allocation7 + $0x150] sm:$0x3]
    %v2292 = vperm.slane %v77, 0
    %v2293 = vperm.slane %v78, 0
    %vm2296 = vcmask 130048
    %v2298 = vsel %vm2296, %v2289, 0
    %v2301 = vsel %vm2296, %v2287, 0
    %2303 = vmatpush.xpose.msra.mxu0 0.0
    %2304 = vmatpush.xpose.msra.mxu0 0.0
    %2305 = vmatpush.xpose.msra.mxu0 0.0
    %2306 = vmatpush.xpose.msra.mxu0 0.0
    %2307 = vmatpush.xpose.msra.mxu0 0.0
    %2308 = vmatpush.xpose.msra.mxu0 0.0
    %2309 = vmatpush.xpose.msra.mxu0 0.0
    %2310 = vmatpush.xpose.msra.mxu0 0.0
    %2311 = vmatpush.xpose.msra.mxu0 0.0
    %2312 = vmatpush.xpose.msra.mxu0 0.0
    %2313 = vmatpush.xpose.msra.mxu0 0.0
    %2314 = vmatpush.xpose.msra.mxu0 0.0
    %2315 = vmatpush.xpose.msra.mxu0 0.0
    %2316 = vmatpush.xpose.msra.mxu0 0.0
    %2317 = vmatpush.xpose.msra.mxu0 0.0
    %2318 = vmatpush.xpose.msra.mxu0 %v2301
    %2319 = vmatmul.f32.gmra.mxu0 %v2298
    %v2320 = vpop.f32.mrf.mxu0
    %v2321 = vadd.f32 %v2292, %v2320
    %2322 = vdwg.mxu0
    %v2324 = vsel %vm2296, %v2288, 0
    %2326 = vmatpush.xpose.msra.mxu0 0.0
    %2327 = vmatpush.xpose.msra.mxu0 0.0
    %2328 = vmatpush.xpose.msra.mxu0 0.0
    %2329 = vmatpush.xpose.msra.mxu0 0.0
    %2330 = vmatpush.xpose.msra.mxu0 0.0
    %2331 = vmatpush.xpose.msra.mxu0 0.0
    %2332 = vmatpush.xpose.msra.mxu0 0.0
    %2333 = vmatpush.xpose.msra.mxu0 0.0
    %2334 = vmatpush.xpose.msra.mxu0 0.0
    %2335 = vmatpush.xpose.msra.mxu0 0.0
    %2336 = vmatpush.xpose.msra.mxu0 0.0
    %2337 = vmatpush.xpose.msra.mxu0 0.0
    %2338 = vmatpush.xpose.msra.mxu0 0.0
    %2339 = vmatpush.xpose.msra.mxu0 0.0
    %2340 = vmatpush.xpose.msra.mxu0 0.0
    %2341 = vmatpush.xpose.msra.mxu0 %v2324
    %2342 = vmatmul.f32.gmra.mxu0 %v2298
    %v2343 = vpop.f32.mrf.mxu0
    %v2344 = vadd.f32 %v2293, %v2343
    %2345 = vdwg.mxu0
    %vm2346 = vcmask 58368
    %v2347 = vsel %vm2346, %v2321, -inf
    %2348 = vmax.xlane.f32.xlu0 %v2347
    %v2349 = vpop.xlane.xlu0 %2348
    %v2350 = vsel %vm2346, %v2344, -inf
    %2351 = vmax.xlane.f32.xlu0 %v2350
    %v2352 = vpop.xlane.xlu0 %2351
    %v2353 = vsub.f32 %v2321, %v2349
    %v2354 = vsub.f32 %v2344, %v2352
    %v2355 = vmul.f32 %v2353, 1.442695
    %v2356 = vpow.pop %v2355
    %v2357 = vmul.f32 %v2354, 1.442695
    %v2358 = vpow.pop %v2357
    %v2359 = vsel %vm2346, %v2356, 0.0
    %2360 = vadd.xlane.f32.xlu0 %v2359
    %v2361 = vpop.xlane.xlu0 %2360
    %v2362 = vsel %vm2346, %v2358, 0.0
    %2363 = vadd.xlane.f32.xlu0 %v2362
    %v2364 = vpop.xlane.xlu0 %2363
    %v2365 = vrcp.pop %v2361
    %v2366 = vmul.f32 %v2361, %v2365
    %v2367 = vsub.f32 1.0, %v2366
    %v2368 = vmul.f32 %v2365, %v2367
    %v2369 = vadd.f32 %v2365, %v2368
    %vm2370 = vweird.f32 %v2361
    %vm2371 = vweird.f32 %v2365
    %vm2372 = vmor %vm2370, %vm2371
    %v2373 = vsel %vm2372, %v2365, %v2369
    %v2374 = vand.u32 2147483647, %v2361
    %vm2375 = vcmp.eq.f32.partialorder %v2374, 8.507059e+37
    %v2376 = vand.u32 %v2361, 2147483648
    %v2377 = vor.u32 1.1754944e-38, %v2376
    %v2378 = vsel %vm2375, %v2377, %v2373
    %v2379 = vmul.f32 %v2356, %v2378
    %v2380 = vrcp.pop %v2364
    %v2381 = vmul.f32 %v2364, %v2380
    %v2382 = vsub.f32 1.0, %v2381
    %v2383 = vmul.f32 %v2380, %v2382
    %v2384 = vadd.f32 %v2380, %v2383
    %vm2385 = vweird.f32 %v2364
    %vm2386 = vweird.f32 %v2380
    %vm2387 = vmor %vm2385, %vm2386
    %v2388 = vsel %vm2387, %v2380, %v2384
    %v2389 = vand.u32 2147483647, %v2364
    %vm2390 = vcmp.eq.f32.partialorder %v2389, 8.507059e+37
    %v2391 = vand.u32 %v2364, 2147483648
    %v2392 = vor.u32 1.1754944e-38, %v2391
    %v2393 = vsel %vm2390, %v2392, %v2388
    %v2394 = vmul.f32 %v2358, %v2393
    %v2396 = vsel %vm227, %v2379, 0
    %2398 = vmatpush.msra.mxu0 0.0
    %2399 = vmatpush.msra.mxu0 0.0
    %2400 = vmatpush.msra.mxu0 0.0
    %2401 = vmatpush.msra.mxu0 0.0
    %2402 = vmatpush.msra.mxu0 0.0
    %2403 = vmatpush.msra.mxu0 0.0
    %2404 = vmatpush.msra.mxu0 0.0
    %2405 = vmatpush.msra.mxu0 0.0
    %2406 = vmatpush.msra.mxu0 0.0
    %2407 = vmatpush.msra.mxu0 0.0
    %2408 = vmatpush.msra.mxu0 0.0
    %2409 = vmatpush.msra.mxu0 0.0
    %2410 = vmatpush.msra.mxu0 0.0
    %2411 = vmatpush.msra.mxu0 0.0
    %2412 = vmatpush.msra.mxu0 0.0
    %2413 = vmatpush.msra.mxu0 %v2252
    %2414 = vmatmul.f32.gmra.mxu0 %v2396
    %v2415 = vpop.f32.mrf.mxu0
    %v2416 = vadd.f32 0.0, %v2415
    %2417 = vdwg.mxu0
    %v2419 = vsel %vm227, %v2394, 0
    %2421 = vmatpush.msra.mxu0 0.0
    %2422 = vmatpush.msra.mxu0 0.0
    %2423 = vmatpush.msra.mxu0 0.0
    %2424 = vmatpush.msra.mxu0 0.0
    %2425 = vmatpush.msra.mxu0 0.0
    %2426 = vmatpush.msra.mxu0 0.0
    %2427 = vmatpush.msra.mxu0 0.0
    %2428 = vmatpush.msra.mxu0 0.0
    %2429 = vmatpush.msra.mxu0 0.0
    %2430 = vmatpush.msra.mxu0 0.0
    %2431 = vmatpush.msra.mxu0 0.0
    %2432 = vmatpush.msra.mxu0 0.0
    %2433 = vmatpush.msra.mxu0 0.0
    %2434 = vmatpush.msra.mxu0 0.0
    %2435 = vmatpush.msra.mxu0 0.0
    %2436 = vmatpush.msra.mxu0 %v2253
    %2437 = vmatmul.f32.gmra.mxu0 %v2419
    %v2438 = vpop.f32.mrf.mxu0
    %v2439 = vadd.f32 0.0, %v2438
    %2440 = vdwg.mxu0
    %vm2441 = vcmask 254976
    %2442 = vst.msk [vmem:[#allocation8] sm:$0x3] %vm2441, %v2416
    %2443 = vst.msk [vmem:[#allocation8 + $0x2] sm:$0x3] %vm2441, %v2439
    %2444 = vst.msk [vmem:[#allocation9] sm:$0x3] %vm2346, %v2379
    %2445 = vst.msk [vmem:[#allocation9 + $0x2] sm:$0x3] %vm2346, %v2394
    // Predicated region
    $region26: #{tpu_custom_call.1} parent=1 // pred_check
      _
    $region27: #{tpu_custom_call.1} parent=1 // pred_check_branch
      %2447 = sbr.rel (0) target = $region29
    $region28: #{tpu_custom_call.1} parent=1 // pred_region
      %2449 = vsyncadd [#allocation4], 0
      %s2450 = sshll.u32 [#allocation8], 4
      %s2451 = int_to_ptr.vmem [resolvable:$true] %s2450
      %s2452 = sshll.u32 %s3, 4
      %s2453 = int_to_ptr.hbm [resolvable:$true] %s2452
      %2458 = dma.vmem_to_hbm [thread:$0]  %s2451, 64, %s2453, [#allocation4], 32, 32, 2
    $region29: #{tpu_custom_call.1} parent=1 // pred_fallthru
      _
    // Predicated region
    $region30: #{tpu_custom_call.1} parent=1 // pred_check
      _
    $region31: #{tpu_custom_call.1} parent=1 // pred_check_branch
      %2460 = sbr.rel (0) target = $region33
    $region32: #{tpu_custom_call.1} parent=1 // pred_region
      %2462 = vsyncadd [#allocation10], 0
      %s2463 = sshll.u32 [#allocation9], 4
      %s2464 = int_to_ptr.vmem [resolvable:$true] %s2463
      %s2465 = sshll.u32 %s4, 4
      %s2466 = int_to_ptr.hbm [resolvable:$true] %s2465
      %2471 = dma.vmem_to_hbm [thread:$0]  %s2464, 64, %s2466, [#allocation10], 32, 32, 2
    $region33: #{tpu_custom_call.1} parent=1 // pred_fallthru
      _
    // Predicated region
    $region34: #{tpu_custom_call.1} parent=1 // pred_check
      _
    $region35: #{tpu_custom_call.1} parent=1 // pred_check_branch
      %2473 = sbr.rel (0) target = $region37
    $region36: #{tpu_custom_call.1} parent=1 // pred_region
      %2475 = dma.done [#allocation4], 64
    $region37: #{tpu_custom_call.1} parent=1 // pred_fallthru
      _
    // Predicated region
    $region38: #{tpu_custom_call.1} parent=1 // pred_check
      _
    $region39: #{tpu_custom_call.1} parent=1 // pred_check_branch
      %2477 = sbr.rel (0) target = $region41
    $region40: #{tpu_custom_call.1} parent=1 // pred_region
      %2479 = dma.done [#allocation10], 64
    $region41: #{tpu_custom_call.1} parent=1 // pred_fallthru
      _
    %2480 = vsyncpa [#allocation3], 1
    %2481 = vsyncpa [#allocation6], 1
    %2482 = vsyncpa [#allocation4], 1
    %2483 = vsyncpa [#allocation10], 1

</llo_original>
